<compile_context>
chip_gen: v7x
topology: tpu7x:2x2x1
jax: 0.10.0
libtpu: 0.0.40
codegen_flags: <defaults>
</compile_context>

<pallas_src>
import jax
import jax.numpy as jnp
from jax.experimental import pallas as pl
from jax.experimental.pallas import tpu as pltpu

# ----------------------------- configuration --------------------------------
B, T, D, DFF, H, K = 2, 8, 64, 128, 4, 7      # batch, seq, d_model, d_ff, heads, conv kernel
DK = D // H                                    # per-head dim
P = 2 * T - 1                                  # relative-position length (NeMo convention)
PAD = (K - 1) // 2
BH = B * H
LN_EPS = 1e-5
BN_EPS = 1e-5
INV_SQRT_DK = 1.0 / (DK ** 0.5)
FC_FACTOR = 0.5

# ---- packed weight slab with D rows: column offsets (bf16, shape (D, WD_COLS))
OFF_FF1_W1 = 0                    # (D, DFF)
OFF_QKV = OFF_FF1_W1 + DFF        # (D, 3D)  fused Wq|Wk|Wv
OFF_POS = OFF_QKV + 3 * D         # (D, D)   linear_pos (no bias)
OFF_WO = OFF_POS + D              # (D, D)   linear_out
OFF_GLU = OFF_WO + D              # (D, 2D)  fused pointwise_conv1 (value|gate)
OFF_W2 = OFF_GLU + 2 * D          # (D, D)   pointwise_conv2
OFF_FF2_W1 = OFF_W2 + D           # (D, DFF)
WD_COLS = OFF_FF2_W1 + DFF        # = 768

# ---- packed weight slab with DFF rows (bf16, shape (DFF, 2D))
OFF_FF1_W2 = 0
OFF_FF2_W2 = D
WFF_COLS = 2 * D

# ---- fp32 vector pack: one row per bias / LN / folded-BN vector  (NV, VW)
VW = max(D, DFF)
(R_LN_FF1_G, R_LN_FF1_B, R_FF1_B1, R_FF1_B2,
 R_LN_ATT_G, R_LN_ATT_B, R_ATT_BQ, R_ATT_BK, R_ATT_BV, R_ATT_BO,
 R_POS_U, R_POS_V,
 R_LN_CONV_G, R_LN_CONV_B, R_CONV_B1A, R_CONV_B1B, R_DW_BIAS, R_CONV_B2,
 R_LN_FF2_G, R_LN_FF2_B, R_FF2_B1, R_FF2_B2,
 R_LN_OUT_G, R_LN_OUT_B, R_DW_W0) = range(25)
NV = 32                           # rows R_DW_W0 .. R_DW_W0+K-1 hold folded depthwise taps

# name -> shape for the synthetic (PyTorch-equivalent) parameter dictionary
PARAM_SHAPES = [
    ("ln_ff1_g", (1, D)), ("ln_ff1_b", (1, D)),
    ("ff1_w1", (D, DFF)), ("ff1_b1", (1, DFF)),
    ("ff1_w2", (DFF, D)), ("ff1_b2", (1, D)),
    ("ln_att_g", (1, D)), ("ln_att_b", (1, D)),
    ("att_wq", (D, D)), ("att_bq", (1, D)),
    ("att_wk", (D, D)), ("att_bk", (1, D)),
    ("att_wv", (D, D)), ("att_bv", (1, D)),
    ("att_wo", (D, D)), ("att_bo", (1, D)),
    ("att_wpos", (D, D)),                       # linear_pos has no bias in NeMo
    ("pos_bias_u", (H, DK)), ("pos_bias_v", (H, DK)),
    ("ln_conv_g", (1, D)), ("ln_conv_b", (1, D)),
    ("conv_w1a", (D, D)), ("conv_b1a", (1, D)),  # pointwise_conv1 (GLU value half)
    ("conv_w1b", (D, D)), ("conv_b1b", (1, D)),  # pointwise_conv1 (GLU gate half)
    ("conv_wdw", (K, D)), ("conv_bdw", (1, D)),  # depthwise conv, weight[k, c]
    ("bn_g", (1, D)), ("bn_b", (1, D)), ("bn_mean", (1, D)), ("bn_var", (1, D)),
    ("conv_w2", (D, D)), ("conv_b2", (1, D)),    # pointwise_conv2
    ("ln_ff2_g", (1, D)), ("ln_ff2_b", (1, D)),
    ("ff2_w1", (D, DFF)), ("ff2_b1", (1, DFF)),
    ("ff2_w2", (DFF, D)), ("ff2_b2", (1, D)),
    ("ln_out_g", (1, D)), ("ln_out_b", (1, D)),
]

_ONES = {"ln_ff1_g", "ln_att_g", "ln_conv_g", "ln_ff2_g", "ln_out_g", "bn_g", "bn_var"}
_ZEROS = {"ln_ff1_b", "ln_att_b", "ln_conv_b", "ln_ff2_b", "ln_out_b", "bn_b", "bn_mean",
          "ff1_b1", "ff1_b2", "ff2_b1", "ff2_b2",
          "att_bq", "att_bk", "att_bv", "att_bo",
          "conv_b1a", "conv_b1b", "conv_bdw", "conv_b2"}


# ------------------------------- kernel --------------------------------------
def conformer_kernel(x_ref, pos_ref, wd_ref, wff_ref, vecs_ref, o_ref, pad_ref):
    BT = B * T

    def vec(row, width=D):                      # (1, width) fp32 parameter row
        return vecs_ref[row:row + 1, :width]

    def wslab(ref, col, width):                 # (rows, width) bf16 weight slab
        return ref[:, col:col + width]

    def mm(a, w):                               # bf16 matmul, fp32 accumulation
        return jnp.dot(a.astype(jnp.bfloat16), w, preferred_element_type=jnp.float32)

    def bdot(a, b, dims):                       # batched bf16 dot, fp32 accumulation
        return jax.lax.dot_general(a.astype(jnp.bfloat16), b.astype(jnp.bfloat16),
                                   dims, preferred_element_type=jnp.float32)

    def layernorm(v, g_row, b_row):
        mu = jnp.mean(v, axis=-1, keepdims=True)
        var = jnp.mean(jnp.square(v - mu), axis=-1, keepdims=True)
        return (v - mu) * jax.lax.rsqrt(var + LN_EPS) * vec(g_row) + vec(b_row)

    def swish(v):
        return v * jax.nn.sigmoid(v)

    def feed_forward(v, w1_col, b1_row, w2_col, b2_row):
        h = swish(mm(v, wslab(wd_ref, w1_col, DFF)) + vec(b1_row, DFF))
        return mm(h, wslab(wff_ref, w2_col, D)) + vec(b2_row)

    x = x_ref[...].reshape(BT, D)               # both batch rows at once: M = B*T
    pos = pos_ref[...]                          # (P, D) relative positional embeddings

    # -------- FF1 half-step: residual = x + 0.5 * FF(LN(x)) ------------------
    residual = x + FC_FACTOR * feed_forward(
        layernorm(x, R_LN_FF1_G, R_LN_FF1_B),
        OFF_FF1_W1, R_FF1_B1, OFF_FF1_W2, R_FF1_B2)

    # -------- relative-position multi-head self-attention --------------------
    xa = layernorm(residual, R_LN_ATT_G, R_LN_ATT_B)
    qkv = mm(xa, wslab(wd_ref, OFF_QKV, 3 * D))            # fused Q|K|V projection
    q = qkv[:, 0 * D:1 * D] + vec(R_ATT_BQ)
    k = qkv[:, 1 * D:2 * D] + vec(R_ATT_BK)
    v = qkv[:, 2 * D:3 * D] + vec(R_ATT_BV)
    p = mm(pos, wslab(wd_ref, OFF_POS, D))                 # (P, D), linear_pos (no bias)

    qu = q + vec(R_POS_U)                                  # q + pos_bias_u (flattened H*DK)
    qv = q + vec(R_POS_V)                                  # q + pos_bias_v

    def head_batch(t2):        # (BT, D) -> (H*B, T, DK); batch index = h*B + b
        t3 = t2.reshape(B, T, D)
        return jnp.concatenate(
            [t3[:, :, h * DK:(h + 1) * DK] for h in range(H)], axis=0)

    qu_bh, qv_bh = head_batch(qu), head_batch(qv)
    k_bh, v_bh = head_batch(k), head_batch(v)
    p_bh = jnp.concatenate(
        [jnp.broadcast_to(p[:, h * DK:(h + 1) * DK], (B, P, DK)) for h in range(H)],
        axis=0)                                            # (H*B, P, DK)

    ac = bdot(qu_bh, k_bh, (((2,), (2,)), ((0,), (0,))))   # (BH, T, T) = (q+u) k^T
    bd = bdot(qv_bh, p_bh, (((2,), (2,)), ((0,), (0,))))   # (BH, T, P) = (q+v) p^T

    # Transformer-XL rel_shift: shifted[:, i, j] = bd[:, i, (T-1) - i + j]
    # (static lane slices instead of a masked (T,T,P) reduction)
    bd_shift = jnp.concatenate(
        [bd[:, i:i + 1, T - 1 - i:2 * T - 1 - i] for i in range(T)], axis=1)

    scores = (ac + bd_shift) * INV_SQRT_DK                 # no att_mask (None path)
    m = jnp.max(scores, axis=-1, keepdims=True)
    e = jnp.exp(scores - m)
    probs = e * pl.reciprocal(jnp.sum(e, axis=-1, keepdims=True), approx=True)

    ctx_bh = bdot(probs, v_bh, (((2,), (1,)), ((0,), (0,))))       # (BH, T, DK)
    ctx = jnp.concatenate([ctx_bh[h * B:(h + 1) * B] for h in range(H)], axis=-1)
    att = mm(ctx.reshape(BT, D), wslab(wd_ref, OFF_WO, D)) + vec(R_ATT_BO)
    residual = residual + att

    # -------- convolution module ---------------------------------------------
    xc = layernorm(residual, R_LN_CONV_G, R_LN_CONV_B)
    ab = mm(xc, wslab(wd_ref, OFF_GLU, 2 * D))             # fused pointwise_conv1
    glu = (ab[:, :D] + vec(R_CONV_B1A)) * jax.nn.sigmoid(ab[:, D:] + vec(R_CONV_B1B))

    # depthwise conv over time ('same' pad) via a zero-padded VMEM scratch;
    # eval-mode BatchNorm is pre-folded into the depthwise weights/bias on host.
    pad_ref[...] = jnp.zeros_like(pad_ref)
    pad_ref[:, PAD:PAD + T, :] = glu.reshape(B, T, D)
    dw = jnp.broadcast_to(vec(R_DW_BIAS).reshape(1, 1, D), (B, T, D))
    for kk in range(K):
        dw = dw + pad_ref[:, kk:kk + T, :] * vec(R_DW_W0 + kk).reshape(1, 1, D)
    conv_out = mm(swish(dw.reshape(BT, D)), wslab(wd_ref, OFF_W2, D)) + vec(R_CONV_B2)
    residual = residual + conv_out

    # -------- FF2 half-step ---------------------------------------------------
    residual = residual + FC_FACTOR * feed_forward(
        layernorm(residual, R_LN_FF2_G, R_LN_FF2_B),
        OFF_FF2_W1, R_FF2_B1, OFF_FF2_W2, R_FF2_B2)

    # -------- final LayerNorm --------------------------------------------------
    out = layernorm(residual, R_LN_OUT_G, R_LN_OUT_B)
    o_ref[...] = out.reshape(B, T, D).astype(o_ref.dtype)
    # TODO(synk): att_mask / pad_mask, decoder_mode cross-attention and the
    # adapter / access-mixin hooks are host-side / unused-branch features and
    # are not represented in-kernel.


# --------------------------- host-side parameter packing -----------------------
def pack_params(params):
    f32 = jnp.float32
    # fold eval-mode BatchNorm into the depthwise conv weights / bias
    scale = params["bn_g"] / jnp.sqrt(params["bn_var"] + BN_EPS)             # (1, D)
    wdw_folded = params["conv_wdw"] * scale                                  # (K, D)
    dw_bias = params["conv_bdw"] * scale + params["bn_b"] - params["bn_mean"] * scale

    wd = jnp.concatenate([
        params["ff1_w1"],
        params["att_wq"], params["att_wk"], params["att_wv"],
        params["att_wpos"],
        params["att_wo"],
        params["conv_w1a"], params["conv_w1b"],
        params["conv_w2"],
        params["ff2_w1"],
    ], axis=1).astype(jnp.bfloat16)                                          # (D, 768)

    wff = jnp.concatenate([params["ff1_w2"], params["ff2_w2"]],
                          axis=1).astype(jnp.bfloat16)                       # (DFF, 128)

    def row(v, width):
        return jnp.pad(v.reshape(1, -1).astype(f32), ((0, 0), (0, VW - width)))

    rows = {
        R_LN_FF1_G: row(params["ln_ff1_g"], D), R_LN_FF1_B: row(params["ln_ff1_b"], D),
        R_FF1_B1: row(params["ff1_b1"], DFF), R_FF1_B2: row(params["ff1_b2"], D),
        R_LN_ATT_G: row(params["ln_att_g"], D), R_LN_ATT_B: row(params["ln_att_b"], D),
        R_ATT_BQ: row(params["att_bq"], D), R_ATT_BK: row(params["att_bk"], D),
        R_ATT_BV: row(params["att_bv"], D), R_ATT_BO: row(params["att_bo"], D),
        R_POS_U: row(params["pos_bias_u"], D), R_POS_V: row(params["pos_bias_v"], D),
        R_LN_CONV_G: row(params["ln_conv_g"], D), R_LN_CONV_B: row(params["ln_conv_b"], D),
        R_CONV_B1A: row(params["conv_b1a"], D), R_CONV_B1B: row(params["conv_b1b"], D),
        R_DW_BIAS: row(dw_bias, D), R_CONV_B2: row(params["conv_b2"], D),
        R_LN_FF2_G: row(params["ln_ff2_g"], D), R_LN_FF2_B: row(params["ln_ff2_b"], D),
        R_FF2_B1: row(params["ff2_b1"], DFF), R_FF2_B2: row(params["ff2_b2"], D),
        R_LN_OUT_G: row(params["ln_out_g"], D), R_LN_OUT_B: row(params["ln_out_b"], D),
    }
    for kk in range(K):
        rows[R_DW_W0 + kk] = row(wdw_folded[kk], D)
    zero_row = jnp.zeros((1, VW), f32)
    vecs = jnp.concatenate([rows.get(i, zero_row) for i in range(NV)], axis=0)  # (NV, VW)
    return wd, wff, vecs


# ------------------------------- wrapper --------------------------------------
@jax.jit
def conformer_layer(x, pos_emb, params):
    wd, wff, vecs = pack_params(params)
    vmem = lambda: pl.BlockSpec(memory_space=pltpu.MemorySpace.VMEM)
    # Single kernel invocation (no grid): total work is tiny, so per-step
    # overhead dominates; everything fits comfortably in VMEM on v5e/v6e/v7x.
    return pl.pallas_call(
        conformer_kernel,
        out_shape=jax.ShapeDtypeStruct(x.shape, x.dtype),
        in_specs=[vmem() for _ in range(5)],
        out_specs=vmem(),
        scratch_shapes=[pltpu.VMEM((B, T + K - 1, D), jnp.float32)],
    )(x, pos_emb, wd, wff, vecs)


# --------------------------- deterministic init --------------------------------
def init_params(key):
    params = {}
    for name, shape in PARAM_SHAPES:
        key, sub = jax.random.split(key)
        if name in _ONES:
            params[name] = jnp.ones(shape, jnp.float32)
        elif name in _ZEROS:
            params[name] = jnp.zeros(shape, jnp.float32)
        else:
            params[name] = 0.05 * jax.random.normal(sub, shape, jnp.float32)
    return params


if __name__ == "__main__":
    key = jax.random.PRNGKey(0)
    kx, kp, kw = jax.random.split(key, 3)
    x = jax.random.normal(kx, (B, T, D), jnp.float32)          # (B, T, d_model)
    pos_emb = jax.random.normal(kp, (P, D), jnp.float32)       # (2T-1, d_model) rel-pos table
    params = init_params(kw)

    out = conformer_layer(x, pos_emb, params)
    out = jax.block_until_ready(out)

    assert out.shape == (B, T, D), out.shape
    assert bool(jnp.all(jnp.isfinite(out)))
    print("KERNEL_OK")
</pallas_src>

<mosaic_0001>
module attributes {stable_mosaic.version = 11 : i64} {
  func.func @conformer_kernel(%arg0: memref<2x8x64xf32, #tpu.memory_space<vmem>>, %arg1: memref<15x64xf32, #tpu.memory_space<vmem>>, %arg2: memref<64x768xbf16, #tpu.memory_space<vmem>>, %arg3: memref<128x128xbf16, #tpu.memory_space<vmem>>, %arg4: memref<32x128xf32, #tpu.memory_space<vmem>>, %arg5: memref<2x8x64xf32, #tpu.memory_space<vmem>>, %arg6: memref<2x14x64xf32, #tpu.memory_space<vmem>>) attributes {dimension_semantics = [], scalar_prefetch = 0 : i64, scratch_operands = 1 : i64, tpu.core_type = #tpu.core_type<tc>} {
    %c0 = arith.constant 0 : index
    %c0_0 = arith.constant 0 : index
    %c0_1 = arith.constant 0 : index
    %0 = vector.load %arg0[%c0, %c0_0, %c0_1] : memref<2x8x64xf32, #tpu.memory_space<vmem>>, vector<2x8x64xf32>
    %1 = vector.shape_cast %0 : vector<2x8x64xf32> to vector<16x64xf32>
    %c0_2 = arith.constant 0 : index
    %c0_3 = arith.constant 0 : index
    %2 = vector.load %arg1[%c0_2, %c0_3] : memref<15x64xf32, #tpu.memory_space<vmem>>, vector<15x64xf32>
    %cst = arith.constant dense<0.000000e+00> : vector<16xf32>
    %3 = vector.multi_reduction <add>, %1, %cst [1] : vector<16x64xf32> to vector<16xf32>
    %4 = vector.shape_cast %3 : vector<16xf32> to vector<16x1xf32>
    %cst_4 = arith.constant 6.400000e+01 : f32
    %5 = vector.broadcast %cst_4 : f32 to vector<16x1xf32>
    %6 = arith.divf %4, %5 : vector<16x1xf32>
    %7 = vector.broadcast %6 : vector<16x1xf32> to vector<16x64xf32>
    %8 = arith.subf %1, %7 : vector<16x64xf32>
    %9 = arith.mulf %8, %8 : vector<16x64xf32>
    %cst_5 = arith.constant dense<0.000000e+00> : vector<16xf32>
    %10 = vector.multi_reduction <add>, %9, %cst_5 [1] : vector<16x64xf32> to vector<16xf32>
    %11 = vector.shape_cast %10 : vector<16xf32> to vector<16x1xf32>
    %cst_6 = arith.constant 6.400000e+01 : f32
    %12 = vector.broadcast %cst_6 : f32 to vector<16x1xf32>
    %13 = arith.divf %11, %12 : vector<16x1xf32>
    %14 = vector.broadcast %6 : vector<16x1xf32> to vector<16x64xf32>
    %15 = arith.subf %1, %14 : vector<16x64xf32>
    %cst_7 = arith.constant 9.99999974E-6 : f32
    %16 = vector.broadcast %cst_7 : f32 to vector<16x1xf32>
    %17 = arith.addf %13, %16 : vector<16x1xf32>
    %18 = math.rsqrt %17 : vector<16x1xf32>
    %19 = vector.broadcast %18 : vector<16x1xf32> to vector<16x64xf32>
    %20 = arith.mulf %15, %19 : vector<16x64xf32>
    %c0_8 = arith.constant 0 : index
    %c0_9 = arith.constant 0 : index
    %21 = vector.load %arg4[%c0_8, %c0_9] : memref<32x128xf32, #tpu.memory_space<vmem>>, vector<1x64xf32>
    %22 = vector.broadcast %21 : vector<1x64xf32> to vector<16x64xf32>
    %23 = arith.mulf %20, %22 : vector<16x64xf32>
    %c1 = arith.constant 1 : index
    %c0_10 = arith.constant 0 : index
    %24 = vector.load %arg4[%c1, %c0_10] : memref<32x128xf32, #tpu.memory_space<vmem>>, vector<1x64xf32>
    %25 = vector.broadcast %24 : vector<1x64xf32> to vector<16x64xf32>
    %26 = arith.addf %23, %25 : vector<16x64xf32>
    %c0_11 = arith.constant 0 : index
    %c0_12 = arith.constant 0 : index
    %27 = vector.load %arg2[%c0_11, %c0_12] : memref<64x768xbf16, #tpu.memory_space<vmem>>, vector<64x128xbf16>
    %28 = arith.truncf %26 : vector<16x64xf32> to vector<16x64xbf16>
    %cst_13 = arith.constant dense<0.000000e+00> : vector<16x128xf32>
    %29 = tpu.matmul %28, %27, %cst_13 {dimension_numbers = #tpu.dot_dimension_numbers<[1], [0], [0], [1], [0, 0, 1, 1], [], []>} : vector<16x64xbf16>, vector<64x128xbf16>, vector<16x128xf32> -> vector<16x128xf32>
    %c2 = arith.constant 2 : index
    %c0_14 = arith.constant 0 : index
    %30 = vector.load %arg4[%c2, %c0_14] : memref<32x128xf32, #tpu.memory_space<vmem>>, vector<1x128xf32>
    %31 = vector.broadcast %30 : vector<1x128xf32> to vector<16x128xf32>
    %32 = arith.addf %29, %31 : vector<16x128xf32>
    %33 = arith.negf %32 : vector<16x128xf32>
    %34 = math.exp %33 : vector<16x128xf32>
    %cst_15 = arith.constant 1.000000e+00 : f32
    %35 = vector.broadcast %cst_15 : f32 to vector<16x128xf32>
    %36 = arith.addf %35, %34 : vector<16x128xf32>
    %37 = arith.divf %35, %36 : vector<16x128xf32>
    %38 = arith.mulf %32, %37 : vector<16x128xf32>
    %c0_16 = arith.constant 0 : index
    %c0_17 = arith.constant 0 : index
    %39 = vector.load %arg3[%c0_16, %c0_17] : memref<128x128xbf16, #tpu.memory_space<vmem>>, vector<128x64xbf16>
    %40 = arith.truncf %38 : vector<16x128xf32> to vector<16x128xbf16>
    %cst_18 = arith.constant dense<0.000000e+00> : vector<16x64xf32>
    %41 = tpu.matmul %40, %39, %cst_18 {dimension_numbers = #tpu.dot_dimension_numbers<[1], [0], [0], [1], [0, 0, 1, 1], [], []>} : vector<16x128xbf16>, vector<128x64xbf16>, vector<16x64xf32> -> vector<16x64xf32>
    %c3 = arith.constant 3 : index
    %c0_19 = arith.constant 0 : index
    %42 = vector.load %arg4[%c3, %c0_19] : memref<32x128xf32, #tpu.memory_space<vmem>>, vector<1x64xf32>
    %43 = vector.broadcast %42 : vector<1x64xf32> to vector<16x64xf32>
    %44 = arith.addf %41, %43 : vector<16x64xf32>
    %cst_20 = arith.constant 5.000000e-01 : f32
    %45 = vector.broadcast %cst_20 : f32 to vector<16x64xf32>
    %46 = arith.mulf %45, %44 : vector<16x64xf32>
    %47 = arith.addf %1, %46 : vector<16x64xf32>
    %cst_21 = arith.constant dense<0.000000e+00> : vector<16xf32>
    %48 = vector.multi_reduction <add>, %47, %cst_21 [1] : vector<16x64xf32> to vector<16xf32>
    %49 = vector.shape_cast %48 : vector<16xf32> to vector<16x1xf32>
    %cst_22 = arith.constant 6.400000e+01 : f32
    %50 = vector.broadcast %cst_22 : f32 to vector<16x1xf32>
    %51 = arith.divf %49, %50 : vector<16x1xf32>
    %52 = vector.broadcast %51 : vector<16x1xf32> to vector<16x64xf32>
    %53 = arith.subf %47, %52 : vector<16x64xf32>
    %54 = arith.mulf %53, %53 : vector<16x64xf32>
    %cst_23 = arith.constant dense<0.000000e+00> : vector<16xf32>
    %55 = vector.multi_reduction <add>, %54, %cst_23 [1] : vector<16x64xf32> to vector<16xf32>
    %56 = vector.shape_cast %55 : vector<16xf32> to vector<16x1xf32>
    %cst_24 = arith.constant 6.400000e+01 : f32
    %57 = vector.broadcast %cst_24 : f32 to vector<16x1xf32>
    %58 = arith.divf %56, %57 : vector<16x1xf32>
    %59 = vector.broadcast %51 : vector<16x1xf32> to vector<16x64xf32>
    %60 = arith.subf %47, %59 : vector<16x64xf32>
    %cst_25 = arith.constant 9.99999974E-6 : f32
    %61 = vector.broadcast %cst_25 : f32 to vector<16x1xf32>
    %62 = arith.addf %58, %61 : vector<16x1xf32>
    %63 = math.rsqrt %62 : vector<16x1xf32>
    %64 = vector.broadcast %63 : vector<16x1xf32> to vector<16x64xf32>
    %65 = arith.mulf %60, %64 : vector<16x64xf32>
    %c4 = arith.constant 4 : index
    %c0_26 = arith.constant 0 : index
    %66 = vector.load %arg4[%c4, %c0_26] : memref<32x128xf32, #tpu.memory_space<vmem>>, vector<1x64xf32>
    %67 = vector.broadcast %66 : vector<1x64xf32> to vector<16x64xf32>
    %68 = arith.mulf %65, %67 : vector<16x64xf32>
    %c5 = arith.constant 5 : index
    %c0_27 = arith.constant 0 : index
    %69 = vector.load %arg4[%c5, %c0_27] : memref<32x128xf32, #tpu.memory_space<vmem>>, vector<1x64xf32>
    %70 = vector.broadcast %69 : vector<1x64xf32> to vector<16x64xf32>
    %71 = arith.addf %68, %70 : vector<16x64xf32>
    %c0_28 = arith.constant 0 : index
    %c128 = arith.constant 128 : index
    %72 = vector.load %arg2[%c0_28, %c128] : memref<64x768xbf16, #tpu.memory_space<vmem>>, vector<64x192xbf16>
    %73 = arith.truncf %71 : vector<16x64xf32> to vector<16x64xbf16>
    %cst_29 = arith.constant dense<0.000000e+00> : vector<16x192xf32>
    %74 = tpu.matmul %73, %72, %cst_29 {dimension_numbers = #tpu.dot_dimension_numbers<[1], [0], [0], [1], [0, 0, 1, 1], [], []>} : vector<16x64xbf16>, vector<64x192xbf16>, vector<16x192xf32> -> vector<16x192xf32>
    %75 = vector.extract_strided_slice %74 {offsets = [0, 0], sizes = [16, 64], strides = [1, 1]} : vector<16x192xf32> to vector<16x64xf32>
    %c6 = arith.constant 6 : index
    %c0_30 = arith.constant 0 : index
    %76 = vector.load %arg4[%c6, %c0_30] : memref<32x128xf32, #tpu.memory_space<vmem>>, vector<1x64xf32>
    %77 = vector.broadcast %76 : vector<1x64xf32> to vector<16x64xf32>
    %78 = arith.addf %75, %77 : vector<16x64xf32>
    %79 = vector.extract_strided_slice %74 {offsets = [0, 64], sizes = [16, 64], strides = [1, 1]} : vector<16x192xf32> to vector<16x64xf32>
    %c7 = arith.constant 7 : index
    %c0_31 = arith.constant 0 : index
    %80 = vector.load %arg4[%c7, %c0_31] : memref<32x128xf32, #tpu.memory_space<vmem>>, vector<1x64xf32>
    %81 = vector.broadcast %80 : vector<1x64xf32> to vector<16x64xf32>
    %82 = arith.addf %79, %81 : vector<16x64xf32>
    %83 = vector.extract_strided_slice %74 {offsets = [0, 128], sizes = [16, 64], strides = [1, 1]} : vector<16x192xf32> to vector<16x64xf32>
    %c8 = arith.constant 8 : index
    %c0_32 = arith.constant 0 : index
    %84 = vector.load %arg4[%c8, %c0_32] : memref<32x128xf32, #tpu.memory_space<vmem>>, vector<1x64xf32>
    %85 = vector.broadcast %84 : vector<1x64xf32> to vector<16x64xf32>
    %86 = arith.addf %83, %85 : vector<16x64xf32>
    %c0_33 = arith.constant 0 : index
    %c320 = arith.constant 320 : index
    %87 = vector.load %arg2[%c0_33, %c320] : memref<64x768xbf16, #tpu.memory_space<vmem>>, vector<64x64xbf16>
    %88 = arith.truncf %2 : vector<15x64xf32> to vector<15x64xbf16>
    %cst_34 = arith.constant dense<0.000000e+00> : vector<15x64xf32>
    %89 = tpu.matmul %88, %87, %cst_34 {dimension_numbers = #tpu.dot_dimension_numbers<[1], [0], [0], [1], [0, 0, 1, 1], [], []>} : vector<15x64xbf16>, vector<64x64xbf16>, vector<15x64xf32> -> vector<15x64xf32>
    %c10 = arith.constant 10 : index
    %c0_35 = arith.constant 0 : index
    %90 = vector.load %arg4[%c10, %c0_35] : memref<32x128xf32, #tpu.memory_space<vmem>>, vector<1x64xf32>
    %91 = vector.broadcast %90 : vector<1x64xf32> to vector<16x64xf32>
    %92 = arith.addf %78, %91 : vector<16x64xf32>
    %c11 = arith.constant 11 : index
    %c0_36 = arith.constant 0 : index
    %93 = vector.load %arg4[%c11, %c0_36] : memref<32x128xf32, #tpu.memory_space<vmem>>, vector<1x64xf32>
    %94 = vector.broadcast %93 : vector<1x64xf32> to vector<16x64xf32>
    %95 = arith.addf %78, %94 : vector<16x64xf32>
    %96 = vector.shape_cast %92 : vector<16x64xf32> to vector<2x8x64xf32>
    %97 = vector.extract_strided_slice %96 {offsets = [0, 0, 0], sizes = [2, 8, 16], strides = [1, 1, 1]} : vector<2x8x64xf32> to vector<2x8x16xf32>
    %98 = vector.extract_strided_slice %96 {offsets = [0, 0, 16], sizes = [2, 8, 16], strides = [1, 1, 1]} : vector<2x8x64xf32> to vector<2x8x16xf32>
    %99 = vector.extract_strided_slice %96 {offsets = [0, 0, 32], sizes = [2, 8, 16], strides = [1, 1, 1]} : vector<2x8x64xf32> to vector<2x8x16xf32>
    %100 = vector.extract_strided_slice %96 {offsets = [0, 0, 48], sizes = [2, 8, 16], strides = [1, 1, 1]} : vector<2x8x64xf32> to vector<2x8x16xf32>
    %101 = tpu.concatenate %97, %98, %99, %100 in 0 : vector<2x8x16xf32>, vector<2x8x16xf32>, vector<2x8x16xf32>, vector<2x8x16xf32> -> vector<8x8x16xf32>
    %102 = vector.shape_cast %95 : vector<16x64xf32> to vector<2x8x64xf32>
    %103 = vector.extract_strided_slice %102 {offsets = [0, 0, 0], sizes = [2, 8, 16], strides = [1, 1, 1]} : vector<2x8x64xf32> to vector<2x8x16xf32>
    %104 = vector.extract_strided_slice %102 {offsets = [0, 0, 16], sizes = [2, 8, 16], strides = [1, 1, 1]} : vector<2x8x64xf32> to vector<2x8x16xf32>
    %105 = vector.extract_strided_slice %102 {offsets = [0, 0, 32], sizes = [2, 8, 16], strides = [1, 1, 1]} : vector<2x8x64xf32> to vector<2x8x16xf32>
    %106 = vector.extract_strided_slice %102 {offsets = [0, 0, 48], sizes = [2, 8, 16], strides = [1, 1, 1]} : vector<2x8x64xf32> to vector<2x8x16xf32>
    %107 = tpu.concatenate %103, %104, %105, %106 in 0 : vector<2x8x16xf32>, vector<2x8x16xf32>, vector<2x8x16xf32>, vector<2x8x16xf32> -> vector<8x8x16xf32>
    %108 = vector.shape_cast %82 : vector<16x64xf32> to vector<2x8x64xf32>
    %109 = vector.extract_strided_slice %108 {offsets = [0, 0, 0], sizes = [2, 8, 16], strides = [1, 1, 1]} : vector<2x8x64xf32> to vector<2x8x16xf32>
    %110 = vector.extract_strided_slice %108 {offsets = [0, 0, 16], sizes = [2, 8, 16], strides = [1, 1, 1]} : vector<2x8x64xf32> to vector<2x8x16xf32>
    %111 = vector.extract_strided_slice %108 {offsets = [0, 0, 32], sizes = [2, 8, 16], strides = [1, 1, 1]} : vector<2x8x64xf32> to vector<2x8x16xf32>
    %112 = vector.extract_strided_slice %108 {offsets = [0, 0, 48], sizes = [2, 8, 16], strides = [1, 1, 1]} : vector<2x8x64xf32> to vector<2x8x16xf32>
    %113 = tpu.concatenate %109, %110, %111, %112 in 0 : vector<2x8x16xf32>, vector<2x8x16xf32>, vector<2x8x16xf32>, vector<2x8x16xf32> -> vector<8x8x16xf32>
    %114 = vector.shape_cast %86 : vector<16x64xf32> to vector<2x8x64xf32>
    %115 = vector.extract_strided_slice %114 {offsets = [0, 0, 0], sizes = [2, 8, 16], strides = [1, 1, 1]} : vector<2x8x64xf32> to vector<2x8x16xf32>
    %116 = vector.extract_strided_slice %114 {offsets = [0, 0, 16], sizes = [2, 8, 16], strides = [1, 1, 1]} : vector<2x8x64xf32> to vector<2x8x16xf32>
    %117 = vector.extract_strided_slice %114 {offsets = [0, 0, 32], sizes = [2, 8, 16], strides = [1, 1, 1]} : vector<2x8x64xf32> to vector<2x8x16xf32>
    %118 = vector.extract_strided_slice %114 {offsets = [0, 0, 48], sizes = [2, 8, 16], strides = [1, 1, 1]} : vector<2x8x64xf32> to vector<2x8x16xf32>
    %119 = tpu.concatenate %115, %116, %117, %118 in 0 : vector<2x8x16xf32>, vector<2x8x16xf32>, vector<2x8x16xf32>, vector<2x8x16xf32> -> vector<8x8x16xf32>
    %120 = vector.extract_strided_slice %89 {offsets = [0, 0], sizes = [15, 16], strides = [1, 1]} : vector<15x64xf32> to vector<15x16xf32>
    %121 = vector.shape_cast %120 : vector<15x16xf32> to vector<1x15x16xf32>
    %122 = vector.broadcast %121 : vector<1x15x16xf32> to vector<2x15x16xf32>
    %123 = vector.extract_strided_slice %89 {offsets = [0, 16], sizes = [15, 16], strides = [1, 1]} : vector<15x64xf32> to vector<15x16xf32>
    %124 = vector.shape_cast %123 : vector<15x16xf32> to vector<1x15x16xf32>
    %125 = vector.broadcast %124 : vector<1x15x16xf32> to vector<2x15x16xf32>
    %126 = vector.extract_strided_slice %89 {offsets = [0, 32], sizes = [15, 16], strides = [1, 1]} : vector<15x64xf32> to vector<15x16xf32>
    %127 = vector.shape_cast %126 : vector<15x16xf32> to vector<1x15x16xf32>
    %128 = vector.broadcast %127 : vector<1x15x16xf32> to vector<2x15x16xf32>
    %129 = vector.extract_strided_slice %89 {offsets = [0, 48], sizes = [15, 16], strides = [1, 1]} : vector<15x64xf32> to vector<15x16xf32>
    %130 = vector.shape_cast %129 : vector<15x16xf32> to vector<1x15x16xf32>
    %131 = vector.broadcast %130 : vector<1x15x16xf32> to vector<2x15x16xf32>
    %132 = tpu.concatenate %122, %125, %128, %131 in 0 : vector<2x15x16xf32>, vector<2x15x16xf32>, vector<2x15x16xf32>, vector<2x15x16xf32> -> vector<8x15x16xf32>
    %133 = arith.truncf %101 : vector<8x8x16xf32> to vector<8x8x16xbf16>
    %134 = arith.truncf %113 : vector<8x8x16xf32> to vector<8x8x16xbf16>
    %cst_37 = arith.constant dense<0.000000e+00> : vector<8x8x8xf32>
    %135 = tpu.matmul %133, %134, %cst_37 {dimension_numbers = #tpu.dot_dimension_numbers<[2], [2], [1], [1], [0, 0, 0, 1, 1, 1], [0], [0]>} : vector<8x8x16xbf16>, vector<8x8x16xbf16>, vector<8x8x8xf32> -> vector<8x8x8xf32>
    %136 = arith.truncf %107 : vector<8x8x16xf32> to vector<8x8x16xbf16>
    %137 = arith.truncf %132 : vector<8x15x16xf32> to vector<8x15x16xbf16>
    %cst_38 = arith.constant dense<0.000000e+00> : vector<8x8x15xf32>
    %138 = tpu.matmul %136, %137, %cst_38 {dimension_numbers = #tpu.dot_dimension_numbers<[2], [2], [1], [1], [0, 0, 0, 1, 1, 1], [0], [0]>} : vector<8x8x16xbf16>, vector<8x15x16xbf16>, vector<8x8x15xf32> -> vector<8x8x15xf32>
    %139 = vector.extract_strided_slice %138 {offsets = [0, 0, 7], sizes = [8, 1, 8], strides = [1, 1, 1]} : vector<8x8x15xf32> to vector<8x1x8xf32>
    %140 = vector.extract_strided_slice %138 {offsets = [0, 1, 6], sizes = [8, 1, 8], strides = [1, 1, 1]} : vector<8x8x15xf32> to vector<8x1x8xf32>
    %141 = vector.extract_strided_slice %138 {offsets = [0, 2, 5], sizes = [8, 1, 8], strides = [1, 1, 1]} : vector<8x8x15xf32> to vector<8x1x8xf32>
    %142 = vector.extract_strided_slice %138 {offsets = [0, 3, 4], sizes = [8, 1, 8], strides = [1, 1, 1]} : vector<8x8x15xf32> to vector<8x1x8xf32>
    %143 = vector.extract_strided_slice %138 {offsets = [0, 4, 3], sizes = [8, 1, 8], strides = [1, 1, 1]} : vector<8x8x15xf32> to vector<8x1x8xf32>
    %144 = vector.extract_strided_slice %138 {offsets = [0, 5, 2], sizes = [8, 1, 8], strides = [1, 1, 1]} : vector<8x8x15xf32> to vector<8x1x8xf32>
    %145 = vector.extract_strided_slice %138 {offsets = [0, 6, 1], sizes = [8, 1, 8], strides = [1, 1, 1]} : vector<8x8x15xf32> to vector<8x1x8xf32>
    %146 = vector.extract_strided_slice %138 {offsets = [0, 7, 0], sizes = [8, 1, 8], strides = [1, 1, 1]} : vector<8x8x15xf32> to vector<8x1x8xf32>
    %147 = tpu.concatenate %139, %140, %141, %142, %143, %144, %145, %146 in 1 : vector<8x1x8xf32>, vector<8x1x8xf32>, vector<8x1x8xf32>, vector<8x1x8xf32>, vector<8x1x8xf32>, vector<8x1x8xf32>, vector<8x1x8xf32>, vector<8x1x8xf32> -> vector<8x8x8xf32>
    %148 = arith.addf %135, %147 : vector<8x8x8xf32>
    %cst_39 = arith.constant 2.500000e-01 : f32
    %149 = vector.broadcast %cst_39 : f32 to vector<8x8x8xf32>
    %150 = arith.mulf %148, %149 : vector<8x8x8xf32>
    %cst_40 = arith.constant dense<0xFF800000> : vector<8x8xf32>
    %151 = vector.multi_reduction <maximumf>, %150, %cst_40 [2] : vector<8x8x8xf32> to vector<8x8xf32>
    %152 = vector.shape_cast %151 : vector<8x8xf32> to vector<8x8x1xf32>
    %153 = vector.broadcast %152 : vector<8x8x1xf32> to vector<8x8x8xf32>
    %154 = arith.subf %150, %153 : vector<8x8x8xf32>
    %155 = math.exp %154 : vector<8x8x8xf32>
    %cst_41 = arith.constant dense<0.000000e+00> : vector<8x8xf32>
    %156 = vector.multi_reduction <add>, %155, %cst_41 [2] : vector<8x8x8xf32> to vector<8x8xf32>
    %157 = vector.shape_cast %156 : vector<8x8xf32> to vector<8x8x1xf32>
    %158 = tpu.reciprocal %157 {approx = true} : vector<8x8x1xf32> -> vector<8x8x1xf32>
    %159 = vector.broadcast %158 : vector<8x8x1xf32> to vector<8x8x8xf32>
    %160 = arith.mulf %155, %159 : vector<8x8x8xf32>
    %161 = arith.truncf %160 : vector<8x8x8xf32> to vector<8x8x8xbf16>
    %162 = arith.truncf %119 : vector<8x8x16xf32> to vector<8x8x16xbf16>
    %cst_42 = arith.constant dense<0.000000e+00> : vector<8x8x16xf32>
    %163 = tpu.matmul %161, %162, %cst_42 {dimension_numbers = #tpu.dot_dimension_numbers<[2], [1], [1], [2], [0, 0, 0, 1, 1, 2], [0], [0]>} : vector<8x8x8xbf16>, vector<8x8x16xbf16>, vector<8x8x16xf32> -> vector<8x8x16xf32>
    %164 = vector.extract_strided_slice %163 {offsets = [0, 0, 0], sizes = [2, 8, 16], strides = [1, 1, 1]} : vector<8x8x16xf32> to vector<2x8x16xf32>
    %165 = vector.extract_strided_slice %163 {offsets = [2, 0, 0], sizes = [2, 8, 16], strides = [1, 1, 1]} : vector<8x8x16xf32> to vector<2x8x16xf32>
    %166 = vector.extract_strided_slice %163 {offsets = [4, 0, 0], sizes = [2, 8, 16], strides = [1, 1, 1]} : vector<8x8x16xf32> to vector<2x8x16xf32>
    %167 = vector.extract_strided_slice %163 {offsets = [6, 0, 0], sizes = [2, 8, 16], strides = [1, 1, 1]} : vector<8x8x16xf32> to vector<2x8x16xf32>
    %168 = tpu.concatenate %164, %165, %166, %167 in 2 : vector<2x8x16xf32>, vector<2x8x16xf32>, vector<2x8x16xf32>, vector<2x8x16xf32> -> vector<2x8x64xf32>
    %169 = vector.shape_cast %168 : vector<2x8x64xf32> to vector<16x64xf32>
    %c0_43 = arith.constant 0 : index
    %c384 = arith.constant 384 : index
    %170 = vector.load %arg2[%c0_43, %c384] : memref<64x768xbf16, #tpu.memory_space<vmem>>, vector<64x64xbf16>
    %171 = arith.truncf %169 : vector<16x64xf32> to vector<16x64xbf16>
    %cst_44 = arith.constant dense<0.000000e+00> : vector<16x64xf32>
    %172 = tpu.matmul %171, %170, %cst_44 {dimension_numbers = #tpu.dot_dimension_numbers<[1], [0], [0], [1], [0, 0, 1, 1], [], []>} : vector<16x64xbf16>, vector<64x64xbf16>, vector<16x64xf32> -> vector<16x64xf32>
    %c9 = arith.constant 9 : index
    %c0_45 = arith.constant 0 : index
    %173 = vector.load %arg4[%c9, %c0_45] : memref<32x128xf32, #tpu.memory_space<vmem>>, vector<1x64xf32>
    %174 = vector.broadcast %173 : vector<1x64xf32> to vector<16x64xf32>
    %175 = arith.addf %172, %174 : vector<16x64xf32>
    %176 = arith.addf %47, %175 : vector<16x64xf32>
    %cst_46 = arith.constant dense<0.000000e+00> : vector<16xf32>
    %177 = vector.multi_reduction <add>, %176, %cst_46 [1] : vector<16x64xf32> to vector<16xf32>
    %178 = vector.shape_cast %177 : vector<16xf32> to vector<16x1xf32>
    %cst_47 = arith.constant 6.400000e+01 : f32
    %179 = vector.broadcast %cst_47 : f32 to vector<16x1xf32>
    %180 = arith.divf %178, %179 : vector<16x1xf32>
    %181 = vector.broadcast %180 : vector<16x1xf32> to vector<16x64xf32>
    %182 = arith.subf %176, %181 : vector<16x64xf32>
    %183 = arith.mulf %182, %182 : vector<16x64xf32>
    %cst_48 = arith.constant dense<0.000000e+00> : vector<16xf32>
    %184 = vector.multi_reduction <add>, %183, %cst_48 [1] : vector<16x64xf32> to vector<16xf32>
    %185 = vector.shape_cast %184 : vector<16xf32> to vector<16x1xf32>
    %cst_49 = arith.constant 6.400000e+01 : f32
    %186 = vector.broadcast %cst_49 : f32 to vector<16x1xf32>
    %187 = arith.divf %185, %186 : vector<16x1xf32>
    %188 = vector.broadcast %180 : vector<16x1xf32> to vector<16x64xf32>
    %189 = arith.subf %176, %188 : vector<16x64xf32>
    %cst_50 = arith.constant 9.99999974E-6 : f32
    %190 = vector.broadcast %cst_50 : f32 to vector<16x1xf32>
    %191 = arith.addf %187, %190 : vector<16x1xf32>
    %192 = math.rsqrt %191 : vector<16x1xf32>
    %193 = vector.broadcast %192 : vector<16x1xf32> to vector<16x64xf32>
    %194 = arith.mulf %189, %193 : vector<16x64xf32>
    %c12 = arith.constant 12 : index
    %c0_51 = arith.constant 0 : index
    %195 = vector.load %arg4[%c12, %c0_51] : memref<32x128xf32, #tpu.memory_space<vmem>>, vector<1x64xf32>
    %196 = vector.broadcast %195 : vector<1x64xf32> to vector<16x64xf32>
    %197 = arith.mulf %194, %196 : vector<16x64xf32>
    %c13 = arith.constant 13 : index
    %c0_52 = arith.constant 0 : index
    %198 = vector.load %arg4[%c13, %c0_52] : memref<32x128xf32, #tpu.memory_space<vmem>>, vector<1x64xf32>
    %199 = vector.broadcast %198 : vector<1x64xf32> to vector<16x64xf32>
    %200 = arith.addf %197, %199 : vector<16x64xf32>
    %c0_53 = arith.constant 0 : index
    %c448 = arith.constant 448 : index
    %201 = vector.load %arg2[%c0_53, %c448] : memref<64x768xbf16, #tpu.memory_space<vmem>>, vector<64x128xbf16>
    %202 = arith.truncf %200 : vector<16x64xf32> to vector<16x64xbf16>
    %cst_54 = arith.constant dense<0.000000e+00> : vector<16x128xf32>
    %203 = tpu.matmul %202, %201, %cst_54 {dimension_numbers = #tpu.dot_dimension_numbers<[1], [0], [0], [1], [0, 0, 1, 1], [], []>} : vector<16x64xbf16>, vector<64x128xbf16>, vector<16x128xf32> -> vector<16x128xf32>
    %204 = vector.extract_strided_slice %203 {offsets = [0, 0], sizes = [16, 64], strides = [1, 1]} : vector<16x128xf32> to vector<16x64xf32>
    %c14 = arith.constant 14 : index
    %c0_55 = arith.constant 0 : index
    %205 = vector.load %arg4[%c14, %c0_55] : memref<32x128xf32, #tpu.memory_space<vmem>>, vector<1x64xf32>
    %206 = vector.broadcast %205 : vector<1x64xf32> to vector<16x64xf32>
    %207 = arith.addf %204, %206 : vector<16x64xf32>
    %208 = vector.extract_strided_slice %203 {offsets = [0, 64], sizes = [16, 64], strides = [1, 1]} : vector<16x128xf32> to vector<16x64xf32>
    %c15 = arith.constant 15 : index
    %c0_56 = arith.constant 0 : index
    %209 = vector.load %arg4[%c15, %c0_56] : memref<32x128xf32, #tpu.memory_space<vmem>>, vector<1x64xf32>
    %210 = vector.broadcast %209 : vector<1x64xf32> to vector<16x64xf32>
    %211 = arith.addf %208, %210 : vector<16x64xf32>
    %212 = arith.negf %211 : vector<16x64xf32>
    %213 = math.exp %212 : vector<16x64xf32>
    %cst_57 = arith.constant 1.000000e+00 : f32
    %214 = vector.broadcast %cst_57 : f32 to vector<16x64xf32>
    %215 = arith.addf %214, %213 : vector<16x64xf32>
    %216 = arith.divf %214, %215 : vector<16x64xf32>
    %217 = arith.mulf %207, %216 : vector<16x64xf32>
    %cst_58 = arith.constant 0.000000e+00 : f32
    %218 = vector.broadcast %cst_58 : f32 to vector<2x14x64xf32>
    %c0_59 = arith.constant 0 : index
    %c0_60 = arith.constant 0 : index
    %c0_61 = arith.constant 0 : index
    %219 = vector.load %arg6[%c0_59, %c0_60, %c0_61] : memref<2x14x64xf32, #tpu.memory_space<vmem>>, vector<2x14x64xf32>
    tpu.vector_store %arg6[%c0_59, %c0_60, %c0_61], %218 {strides = array<i32>} : memref<2x14x64xf32, #tpu.memory_space<vmem>>, vector<2x14x64xf32>,
    %220 = vector.shape_cast %217 : vector<16x64xf32> to vector<2x8x64xf32>
    %c0_62 = arith.constant 0 : index
    %c3_63 = arith.constant 3 : index
    %c0_64 = arith.constant 0 : index
    %221 = vector.load %arg6[%c0_62, %c3_63, %c0_64] : memref<2x14x64xf32, #tpu.memory_space<vmem>>, vector<2x8x64xf32>
    tpu.vector_store %arg6[%c0_62, %c3_63, %c0_64], %220 {strides = array<i32>} : memref<2x14x64xf32, #tpu.memory_space<vmem>>, vector<2x8x64xf32>,
    %c16 = arith.constant 16 : index
    %c0_65 = arith.constant 0 : index
    %222 = vector.load %arg4[%c16, %c0_65] : memref<32x128xf32, #tpu.memory_space<vmem>>, vector<1x64xf32>
    %223 = vector.shape_cast %222 : vector<1x64xf32> to vector<1x1x64xf32>
    %224 = vector.shape_cast %223 : vector<1x1x64xf32> to vector<1x1x64xf32>
    %225 = vector.broadcast %224 : vector<1x1x64xf32> to vector<2x8x64xf32>
    %c0_66 = arith.constant 0 : index
    %c0_67 = arith.constant 0 : index
    %c0_68 = arith.constant 0 : index
    %226 = vector.load %arg6[%c0_66, %c0_67, %c0_68] : memref<2x14x64xf32, #tpu.memory_space<vmem>>, vector<2x8x64xf32>
    %c24 = arith.constant 24 : index
    %c0_69 = arith.constant 0 : index
    %227 = vector.load %arg4[%c24, %c0_69] : memref<32x128xf32, #tpu.memory_space<vmem>>, vector<1x64xf32>
    %228 = vector.shape_cast %227 : vector<1x64xf32> to vector<1x1x64xf32>
    %229 = vector.broadcast %228 : vector<1x1x64xf32> to vector<2x8x64xf32>
    %230 = arith.mulf %226, %229 : vector<2x8x64xf32>
    %231 = arith.addf %225, %230 : vector<2x8x64xf32>
    %c0_70 = arith.constant 0 : index
    %c1_71 = arith.constant 1 : index
    %c0_72 = arith.constant 0 : index
    %232 = vector.load %arg6[%c0_70, %c1_71, %c0_72] : memref<2x14x64xf32, #tpu.memory_space<vmem>>, vector<2x8x64xf32>
    %c25 = arith.constant 25 : index
    %c0_73 = arith.constant 0 : index
    %233 = vector.load %arg4[%c25, %c0_73] : memref<32x128xf32, #tpu.memory_space<vmem>>, vector<1x64xf32>
    %234 = vector.shape_cast %233 : vector<1x64xf32> to vector<1x1x64xf32>
    %235 = vector.broadcast %234 : vector<1x1x64xf32> to vector<2x8x64xf32>
    %236 = arith.mulf %232, %235 : vector<2x8x64xf32>
    %237 = arith.addf %231, %236 : vector<2x8x64xf32>
    %c0_74 = arith.constant 0 : index
    %c2_75 = arith.constant 2 : index
    %c0_76 = arith.constant 0 : index
    %238 = vector.load %arg6[%c0_74, %c2_75, %c0_76] : memref<2x14x64xf32, #tpu.memory_space<vmem>>, vector<2x8x64xf32>
    %c26 = arith.constant 26 : index
    %c0_77 = arith.constant 0 : index
    %239 = vector.load %arg4[%c26, %c0_77] : memref<32x128xf32, #tpu.memory_space<vmem>>, vector<1x64xf32>
    %240 = vector.shape_cast %239 : vector<1x64xf32> to vector<1x1x64xf32>
    %241 = vector.broadcast %240 : vector<1x1x64xf32> to vector<2x8x64xf32>
    %242 = arith.mulf %238, %241 : vector<2x8x64xf32>
    %243 = arith.addf %237, %242 : vector<2x8x64xf32>
    %c0_78 = arith.constant 0 : index
    %c3_79 = arith.constant 3 : index
    %c0_80 = arith.constant 0 : index
    %244 = vector.load %arg6[%c0_78, %c3_79, %c0_80] : memref<2x14x64xf32, #tpu.memory_space<vmem>>, vector<2x8x64xf32>
    %c27 = arith.constant 27 : index
    %c0_81 = arith.constant 0 : index
    %245 = vector.load %arg4[%c27, %c0_81] : memref<32x128xf32, #tpu.memory_space<vmem>>, vector<1x64xf32>
    %246 = vector.shape_cast %245 : vector<1x64xf32> to vector<1x1x64xf32>
    %247 = vector.broadcast %246 : vector<1x1x64xf32> to vector<2x8x64xf32>
    %248 = arith.mulf %244, %247 : vector<2x8x64xf32>
    %249 = arith.addf %243, %248 : vector<2x8x64xf32>
    %c0_82 = arith.constant 0 : index
    %c4_83 = arith.constant 4 : index
    %c0_84 = arith.constant 0 : index
    %250 = vector.load %arg6[%c0_82, %c4_83, %c0_84] : memref<2x14x64xf32, #tpu.memory_space<vmem>>, vector<2x8x64xf32>
    %c28 = arith.constant 28 : index
    %c0_85 = arith.constant 0 : index
    %251 = vector.load %arg4[%c28, %c0_85] : memref<32x128xf32, #tpu.memory_space<vmem>>, vector<1x64xf32>
    %252 = vector.shape_cast %251 : vector<1x64xf32> to vector<1x1x64xf32>
    %253 = vector.broadcast %252 : vector<1x1x64xf32> to vector<2x8x64xf32>
    %254 = arith.mulf %250, %253 : vector<2x8x64xf32>
    %255 = arith.addf %249, %254 : vector<2x8x64xf32>
    %c0_86 = arith.constant 0 : index
    %c5_87 = arith.constant 5 : index
    %c0_88 = arith.constant 0 : index
    %256 = vector.load %arg6[%c0_86, %c5_87, %c0_88] : memref<2x14x64xf32, #tpu.memory_space<vmem>>, vector<2x8x64xf32>
    %c29 = arith.constant 29 : index
    %c0_89 = arith.constant 0 : index
    %257 = vector.load %arg4[%c29, %c0_89] : memref<32x128xf32, #tpu.memory_space<vmem>>, vector<1x64xf32>
    %258 = vector.shape_cast %257 : vector<1x64xf32> to vector<1x1x64xf32>
    %259 = vector.broadcast %258 : vector<1x1x64xf32> to vector<2x8x64xf32>
    %260 = arith.mulf %256, %259 : vector<2x8x64xf32>
    %261 = arith.addf %255, %260 : vector<2x8x64xf32>
    %c0_90 = arith.constant 0 : index
    %c6_91 = arith.constant 6 : index
    %c0_92 = arith.constant 0 : index
    %262 = vector.load %arg6[%c0_90, %c6_91, %c0_92] : memref<2x14x64xf32, #tpu.memory_space<vmem>>, vector<2x8x64xf32>
    %c30 = arith.constant 30 : index
    %c0_93 = arith.constant 0 : index
    %263 = vector.load %arg4[%c30, %c0_93] : memref<32x128xf32, #tpu.memory_space<vmem>>, vector<1x64xf32>
    %264 = vector.shape_cast %263 : vector<1x64xf32> to vector<1x1x64xf32>
    %265 = vector.broadcast %264 : vector<1x1x64xf32> to vector<2x8x64xf32>
    %266 = arith.mulf %262, %265 : vector<2x8x64xf32>
    %267 = arith.addf %261, %266 : vector<2x8x64xf32>
    %268 = vector.shape_cast %267 : vector<2x8x64xf32> to vector<16x64xf32>
    %269 = arith.negf %268 : vector<16x64xf32>
    %270 = math.exp %269 : vector<16x64xf32>
    %cst_94 = arith.constant 1.000000e+00 : f32
    %271 = vector.broadcast %cst_94 : f32 to vector<16x64xf32>
    %272 = arith.addf %271, %270 : vector<16x64xf32>
    %273 = arith.divf %271, %272 : vector<16x64xf32>
    %274 = arith.mulf %268, %273 : vector<16x64xf32>
    %c0_95 = arith.constant 0 : index
    %c576 = arith.constant 576 : index
    %275 = vector.load %arg2[%c0_95, %c576] : memref<64x768xbf16, #tpu.memory_space<vmem>>, vector<64x64xbf16>
    %276 = arith.truncf %274 : vector<16x64xf32> to vector<16x64xbf16>
    %cst_96 = arith.constant dense<0.000000e+00> : vector<16x64xf32>
    %277 = tpu.matmul %276, %275, %cst_96 {dimension_numbers = #tpu.dot_dimension_numbers<[1], [0], [0], [1], [0, 0, 1, 1], [], []>} : vector<16x64xbf16>, vector<64x64xbf16>, vector<16x64xf32> -> vector<16x64xf32>
    %c17 = arith.constant 17 : index
    %c0_97 = arith.constant 0 : index
    %278 = vector.load %arg4[%c17, %c0_97] : memref<32x128xf32, #tpu.memory_space<vmem>>, vector<1x64xf32>
    %279 = vector.broadcast %278 : vector<1x64xf32> to vector<16x64xf32>
    %280 = arith.addf %277, %279 : vector<16x64xf32>
    %281 = arith.addf %176, %280 : vector<16x64xf32>
    %cst_98 = arith.constant dense<0.000000e+00> : vector<16xf32>
    %282 = vector.multi_reduction <add>, %281, %cst_98 [1] : vector<16x64xf32> to vector<16xf32>
    %283 = vector.shape_cast %282 : vector<16xf32> to vector<16x1xf32>
    %cst_99 = arith.constant 6.400000e+01 : f32
    %284 = vector.broadcast %cst_99 : f32 to vector<16x1xf32>
    %285 = arith.divf %283, %284 : vector<16x1xf32>
    %286 = vector.broadcast %285 : vector<16x1xf32> to vector<16x64xf32>
    %287 = arith.subf %281, %286 : vector<16x64xf32>
    %288 = arith.mulf %287, %287 : vector<16x64xf32>
    %cst_100 = arith.constant dense<0.000000e+00> : vector<16xf32>
    %289 = vector.multi_reduction <add>, %288, %cst_100 [1] : vector<16x64xf32> to vector<16xf32>
    %290 = vector.shape_cast %289 : vector<16xf32> to vector<16x1xf32>
    %cst_101 = arith.constant 6.400000e+01 : f32
    %291 = vector.broadcast %cst_101 : f32 to vector<16x1xf32>
    %292 = arith.divf %290, %291 : vector<16x1xf32>
    %293 = vector.broadcast %285 : vector<16x1xf32> to vector<16x64xf32>
    %294 = arith.subf %281, %293 : vector<16x64xf32>
    %cst_102 = arith.constant 9.99999974E-6 : f32
    %295 = vector.broadcast %cst_102 : f32 to vector<16x1xf32>
    %296 = arith.addf %292, %295 : vector<16x1xf32>
    %297 = math.rsqrt %296 : vector<16x1xf32>
    %298 = vector.broadcast %297 : vector<16x1xf32> to vector<16x64xf32>
    %299 = arith.mulf %294, %298 : vector<16x64xf32>
    %c18 = arith.constant 18 : index
    %c0_103 = arith.constant 0 : index
    %300 = vector.load %arg4[%c18, %c0_103] : memref<32x128xf32, #tpu.memory_space<vmem>>, vector<1x64xf32>
    %301 = vector.broadcast %300 : vector<1x64xf32> to vector<16x64xf32>
    %302 = arith.mulf %299, %301 : vector<16x64xf32>
    %c19 = arith.constant 19 : index
    %c0_104 = arith.constant 0 : index
    %303 = vector.load %arg4[%c19, %c0_104] : memref<32x128xf32, #tpu.memory_space<vmem>>, vector<1x64xf32>
    %304 = vector.broadcast %303 : vector<1x64xf32> to vector<16x64xf32>
    %305 = arith.addf %302, %304 : vector<16x64xf32>
    %c0_105 = arith.constant 0 : index
    %c640 = arith.constant 640 : index
    %306 = vector.load %arg2[%c0_105, %c640] : memref<64x768xbf16, #tpu.memory_space<vmem>>, vector<64x128xbf16>
    %307 = arith.truncf %305 : vector<16x64xf32> to vector<16x64xbf16>
    %cst_106 = arith.constant dense<0.000000e+00> : vector<16x128xf32>
    %308 = tpu.matmul %307, %306, %cst_106 {dimension_numbers = #tpu.dot_dimension_numbers<[1], [0], [0], [1], [0, 0, 1, 1], [], []>} : vector<16x64xbf16>, vector<64x128xbf16>, vector<16x128xf32> -> vector<16x128xf32>
    %c20 = arith.constant 20 : index
    %c0_107 = arith.constant 0 : index
    %309 = vector.load %arg4[%c20, %c0_107] : memref<32x128xf32, #tpu.memory_space<vmem>>, vector<1x128xf32>
    %310 = vector.broadcast %309 : vector<1x128xf32> to vector<16x128xf32>
    %311 = arith.addf %308, %310 : vector<16x128xf32>
    %312 = arith.negf %311 : vector<16x128xf32>
    %313 = math.exp %312 : vector<16x128xf32>
    %cst_108 = arith.constant 1.000000e+00 : f32
    %314 = vector.broadcast %cst_108 : f32 to vector<16x128xf32>
    %315 = arith.addf %314, %313 : vector<16x128xf32>
    %316 = arith.divf %314, %315 : vector<16x128xf32>
    %317 = arith.mulf %311, %316 : vector<16x128xf32>
    %c0_109 = arith.constant 0 : index
    %c64 = arith.constant 64 : index
    %318 = vector.load %arg3[%c0_109, %c64] : memref<128x128xbf16, #tpu.memory_space<vmem>>, vector<128x64xbf16>
    %319 = arith.truncf %317 : vector<16x128xf32> to vector<16x128xbf16>
    %cst_110 = arith.constant dense<0.000000e+00> : vector<16x64xf32>
    %320 = tpu.matmul %319, %318, %cst_110 {dimension_numbers = #tpu.dot_dimension_numbers<[1], [0], [0], [1], [0, 0, 1, 1], [], []>} : vector<16x128xbf16>, vector<128x64xbf16>, vector<16x64xf32> -> vector<16x64xf32>
    %c21 = arith.constant 21 : index
    %c0_111 = arith.constant 0 : index
    %321 = vector.load %arg4[%c21, %c0_111] : memref<32x128xf32, #tpu.memory_space<vmem>>, vector<1x64xf32>
    %322 = vector.broadcast %321 : vector<1x64xf32> to vector<16x64xf32>
    %323 = arith.addf %320, %322 : vector<16x64xf32>
    %cst_112 = arith.constant 5.000000e-01 : f32
    %324 = vector.broadcast %cst_112 : f32 to vector<16x64xf32>
    %325 = arith.mulf %324, %323 : vector<16x64xf32>
    %326 = arith.addf %281, %325 : vector<16x64xf32>
    %cst_113 = arith.constant dense<0.000000e+00> : vector<16xf32>
    %327 = vector.multi_reduction <add>, %326, %cst_113 [1] : vector<16x64xf32> to vector<16xf32>
    %328 = vector.shape_cast %327 : vector<16xf32> to vector<16x1xf32>
    %cst_114 = arith.constant 6.400000e+01 : f32
    %329 = vector.broadcast %cst_114 : f32 to vector<16x1xf32>
    %330 = arith.divf %328, %329 : vector<16x1xf32>
    %331 = vector.broadcast %330 : vector<16x1xf32> to vector<16x64xf32>
    %332 = arith.subf %326, %331 : vector<16x64xf32>
    %333 = arith.mulf %332, %332 : vector<16x64xf32>
    %cst_115 = arith.constant dense<0.000000e+00> : vector<16xf32>
    %334 = vector.multi_reduction <add>, %333, %cst_115 [1] : vector<16x64xf32> to vector<16xf32>
    %335 = vector.shape_cast %334 : vector<16xf32> to vector<16x1xf32>
    %cst_116 = arith.constant 6.400000e+01 : f32
    %336 = vector.broadcast %cst_116 : f32 to vector<16x1xf32>
    %337 = arith.divf %335, %336 : vector<16x1xf32>
    %338 = vector.broadcast %330 : vector<16x1xf32> to vector<16x64xf32>
    %339 = arith.subf %326, %338 : vector<16x64xf32>
    %cst_117 = arith.constant 9.99999974E-6 : f32
    %340 = vector.broadcast %cst_117 : f32 to vector<16x1xf32>
    %341 = arith.addf %337, %340 : vector<16x1xf32>
    %342 = math.rsqrt %341 : vector<16x1xf32>
    %343 = vector.broadcast %342 : vector<16x1xf32> to vector<16x64xf32>
    %344 = arith.mulf %339, %343 : vector<16x64xf32>
    %c22 = arith.constant 22 : index
    %c0_118 = arith.constant 0 : index
    %345 = vector.load %arg4[%c22, %c0_118] : memref<32x128xf32, #tpu.memory_space<vmem>>, vector<1x64xf32>
    %346 = vector.broadcast %345 : vector<1x64xf32> to vector<16x64xf32>
    %347 = arith.mulf %344, %346 : vector<16x64xf32>
    %c23 = arith.constant 23 : index
    %c0_119 = arith.constant 0 : index
    %348 = vector.load %arg4[%c23, %c0_119] : memref<32x128xf32, #tpu.memory_space<vmem>>, vector<1x64xf32>
    %349 = vector.broadcast %348 : vector<1x64xf32> to vector<16x64xf32>
    %350 = arith.addf %347, %349 : vector<16x64xf32>
    %351 = vector.shape_cast %350 : vector<16x64xf32> to vector<2x8x64xf32>
    %c0_120 = arith.constant 0 : index
    %c0_121 = arith.constant 0 : index
    %c0_122 = arith.constant 0 : index
    %352 = vector.load %arg5[%c0_120, %c0_121, %c0_122] : memref<2x8x64xf32, #tpu.memory_space<vmem>>, vector<2x8x64xf32>
    tpu.vector_store %arg5[%c0_120, %c0_121, %c0_122], %351 {strides = array<i32>} : memref<2x8x64xf32, #tpu.memory_space<vmem>>, vector<2x8x64xf32>,
    return
  }
}

</mosaic_0001>

<llo_original>
// kernel: conformer_layer.1
$region0: #{conformer_layer.1}
  #allocation0 [shape = 'u32[]', space=smem, size = 0x4, offset = 0x4, fixed_abs, tag = 'smem constant byte address 0x4 - core index']
  #allocation1 [shape = 'u32[144,128]{1,0:T(1,128)}', space=vmem, size = 0x12000, scoped, tag = 'internal scratch']
  #allocation2 [shape = 'f32[2,14,64]{2,1,0:T(8,128)}', space=vmem, size = 0x4000, scoped, tag = 'scratch operand']
  %s0 = inlined_call_operand.vmem [shape: f32[2,8,64], index: 0, kind: input, shape index: {}]
  %s1 = inlined_call_operand.vmem [shape: f32[15,64], index: 1, kind: input, shape index: {}]
  %s2 = inlined_call_operand.vmem [shape: bf16[64,768], index: 2, kind: input, shape index: {}]
  %s3 = inlined_call_operand.vmem [shape: bf16[128,128], index: 3, kind: input, shape index: {}]
  %s4 = inlined_call_operand.vmem [shape: f32[32,128], index: 4, kind: input, shape index: {}]
  %s5 = inlined_call_operand.hbm [shape: f32[2,8,64], index: 5, kind: output, shape index: {}]
  %s6 = sld [smem:[#allocation0]]
  $region30: #{conformer_layer.1} parent=0
    _
  %s8 = ssub.s32 1, %s6
  %s9 = scalar_select 0, %s8, %s6
  $region1: #{conformer_layer.1} parent=0
    #allocation3 [shape = 'u8[8192]{0}', space=vmem, size = 0x2000, scoped, tag = 'output window, operand 0, single buffered']
    #allocation4 [shape = 's32[1]{0}', space=sflag, size = 0x4, scoped, tag = 'scoped memory for conformer_layer.1']
    %10 = vsyncpa [#allocation4], 0
    // Predicated region
    $region2: #{conformer_layer.1} parent=1 // pred_check
      _
    $region3: #{conformer_layer.1} parent=1 // pred_check_branch
      %12 = sbr.rel (0) target = $region5
    $region4: #{conformer_layer.1} parent=1 // pred_region
      _
    $region5: #{conformer_layer.1} parent=1 // pred_fallthru
      _
    // Predicated region
    $region6: #{conformer_layer.1} parent=1 // pred_check
      _
    $region7: #{conformer_layer.1} parent=1 // pred_check_branch
      %14 = sbr.rel (0) target = $region9
    $region8: #{conformer_layer.1} parent=1 // pred_region
      _
    $region9: #{conformer_layer.1} parent=1 // pred_fallthru
      _
    // Predicated region
    $region10: #{conformer_layer.1} parent=1 // pred_check
      _
    $region11: #{conformer_layer.1} parent=1 // pred_check_branch
      %16 = sbr.rel (0) target = $region13
    $region12: #{conformer_layer.1} parent=1 // pred_region
      _
    $region13: #{conformer_layer.1} parent=1 // pred_fallthru
      _
    // Predicated region
    $region14: #{conformer_layer.1} parent=1 // pred_check
      _
    $region15: #{conformer_layer.1} parent=1 // pred_check_branch
      %18 = sbr.rel (0) target = $region17
    $region16: #{conformer_layer.1} parent=1 // pred_region
      _
    $region17: #{conformer_layer.1} parent=1 // pred_fallthru
      _
    // Predicated region
    $region18: #{conformer_layer.1} parent=1 // pred_check
      _
    $region19: #{conformer_layer.1} parent=1 // pred_check_branch
      %20 = sbr.rel (0) target = $region21
    $region20: #{conformer_layer.1} parent=1 // pred_region
      _
    $region21: #{conformer_layer.1} parent=1 // pred_fallthru
      _
    %v22 = vld [vmem:[%s0] sm:$0xff]
    %v23 = vld [vmem:[%s0 + $0x8] sm:$0xff]
    %v24 = vld [vmem:[%s1] sm:$0xff]
    %v25 = vld [vmem:[%s1 + $0x8] sm:$0x7f]
    %vm26 = vcmask 523264
    %v27 = vsel %vm26, %v22, 0.0
    %28 = vadd.xlane.f32.xlu0 %v27
    %v29 = vpop.xlane.xlu0 %28
    %v30 = vsel %vm26, %v23, 0.0
    %31 = vadd.xlane.f32.xlu0 %v30
    %v32 = vpop.xlane.xlu0 %31
    %v33 = vrcp.pop 64.0
    %v34 = vmul.f32 %v29, %v33
    %v35 = vmul.f32 %v32, %v33
    %v36 = vsub.f32 %v22, %v34
    %v37 = vsub.f32 %v23, %v35
    %v38 = vmul.f32 %v36, %v36
    %v39 = vmul.f32 %v37, %v37
    %v40 = vsel %vm26, %v38, 0.0
    %41 = vadd.xlane.f32.xlu0 %v40
    %v42 = vpop.xlane.xlu0 %41
    %v43 = vsel %vm26, %v39, 0.0
    %44 = vadd.xlane.f32.xlu0 %v43
    %v45 = vpop.xlane.xlu0 %44
    %v46 = vmul.f32 %v42, %v33
    %v47 = vmul.f32 %v45, %v33
    %v48 = vadd.f32 %v46, 1e-05
    %v49 = vadd.f32 %v47, 1e-05
    %v50 = vrsqrt.pop %v48
    %v51 = vrsqrt.pop %v49
    %v52 = vmul.f32 %v36, %v50
    %v53 = vmul.f32 %v37, %v51
    %v54 = vld [vmem:[%s4] sm:$0x1]
    %v55 = vlaneseq
    %v56 = vshrl.u32 %v55, 7
    %v57 = vsub.s32 0, %v56
    %v58 = vrot.slane %v54, %v57
    %v59 = vmul.f32 %v52, %v58
    %v60 = vmul.f32 %v53, %v58
    %v61 = vld [vmem:[%s4 + $0x1] sm:$0x1]
    %v62 = vlaneseq
    %v63 = vshrl.u32 %v62, 7
    %v64 = vsub.s32 0, %v63
    %v65 = vrot.slane %v61, %v64
    %v66 = vadd.f32 %v59, %v65
    %v67 = vadd.f32 %v60, %v65
    %v68 = vld [vmem:[%s2] sm:$0xf]
    %v69 = vld [vmem:[%s2 + $0x18] sm:$0xf]
    %v70 = vld [vmem:[%s2 + $0x30] sm:$0xf]
    %v71 = vld [vmem:[%s2 + $0x48] sm:$0xf]
    %v72 = vld [vmem:[%s2 + $0x60] sm:$0xf]
    %v73 = vld [vmem:[%s2 + $0x78] sm:$0xf]
    %v74 = vld [vmem:[%s2 + $0x90] sm:$0xf]
    %v75 = vld [vmem:[%s2 + $0xa8] sm:$0xf]
    %v76 = vpack.c.bf16 %v67, %v66
    %v77 = vld [vmem:[%s4 + $0x2] sm:$0x1]
    %v78 = vlaneseq
    %v79 = vshrl.u32 %v78, 7
    %v80 = vsub.s32 0, %v79
    %v81 = vrot.slane %v77, %v80
    %v90 = vunpack.c.l.b16 %v68
    %v91 = vunpack.c.l.b16 %v69
    %v92 = vunpack.c.l.b16 %v70
    %v93 = vunpack.c.l.b16 %v71
    %v94 = vunpack.c.l.b16 %v72
    %v95 = vunpack.c.l.b16 %v73
    %v96 = vunpack.c.l.b16 %v74
    %v97 = vunpack.c.l.b16 %v75
    %v98 = vpack.c.b16 %v91, %v90
    %v99 = vpack.c.b16 %v93, %v92
    %v100 = vpack.c.b16 %v95, %v94
    %v101 = vpack.c.b16 %v97, %v96
    %v107 = vsel %vm26, %v76, 0
    %109 = vmatprep.subr.bf16.mxu0 0
    %110 = vmatpush1.bf16.msra.mxu0 %v98
    %111 = vmatprep.subr.bf16.mxu0 0
    %112 = vmatpush1.bf16.msra.mxu0 %v99
    %113 = vmatprep.subr.bf16.mxu0 0
    %114 = vmatpush1.bf16.msra.mxu0 %v100
    %115 = vmatprep.subr.bf16.mxu0 0
    %116 = vmatpush1.bf16.msra.mxu0 %v101
    %117 = vmatprep.subr.bf16.mxu0 0
    %118 = vmatpush1.bf16.msra.mxu0 0
    %119 = vmatprep.subr.bf16.mxu0 0
    %120 = vmatpush1.bf16.msra.mxu0 0
    %121 = vmatprep.subr.bf16.mxu0 0
    %122 = vmatpush1.bf16.msra.mxu0 0
    %123 = vmatprep.subr.bf16.mxu0 0
    %124 = vmatpush1.bf16.msra.mxu0 0
    %125 = vmatprep.subr.bf16.mxu0 0
    %126 = vmatpush1.bf16.msra.mxu0 0
    %127 = vmatprep.subr.bf16.mxu0 0
    %128 = vmatpush1.bf16.msra.mxu0 0
    %129 = vmatprep.subr.bf16.mxu0 0
    %130 = vmatpush1.bf16.msra.mxu0 0
    %131 = vmatprep.subr.bf16.mxu0 0
    %132 = vmatpush1.bf16.msra.mxu0 0
    %133 = vmatprep.subr.bf16.mxu0 0
    %134 = vmatpush1.bf16.msra.mxu0 0
    %135 = vmatprep.subr.bf16.mxu0 0
    %136 = vmatpush1.bf16.msra.mxu0 0
    %137 = vmatprep.subr.bf16.mxu0 0
    %138 = vmatpush1.bf16.msra.mxu0 0
    %139 = vmatprep.subr.bf16.mxu0 0
    %140 = vmatpush1.bf16.msra.mxu0 0
    %141 = vmatprep.mubr.bf16.mxu0 0
    %142 = vmatmul.mubr.bf16.gmra.mrb[0].mxu0 %v107
    %v143 = vpop.f32.mrb[0].mxu0
    %v144 = vadd.f32 %v81, %v143
    %v145 = vpop.f32.mrb[0].mxu0
    %v146 = vpop.f32.mrb[0].mxu0
    %v147 = vadd.f32 %v81, %v146
    %v148 = vpop.f32.mrb[0].mxu0
    %149 = vdwg.mxu0
    %v150 = vxor.u32 %v144, 2147483648
    %v151 = vxor.u32 %v147, 2147483648
    %v152 = vmul.f32 %v150, 1.442695
    %v153 = vpow.pop %v152
    %v154 = vmul.f32 %v151, 1.442695
    %v155 = vpow.pop %v154
    %v156 = vadd.f32 %v153, 1.0
    %v157 = vadd.f32 %v155, 1.0
    %v158 = vrcp.pop %v156
    %v159 = vmul.f32 1.0, %v158
    %v160 = vrcp.pop %v157
    %v161 = vmul.f32 1.0, %v160
    %v162 = vmul.f32 %v144, %v159
    %v163 = vmul.f32 %v147, %v161
    %v164 = vld [vmem:[%s3] sm:$0xf]
    %v165 = vld [vmem:[%s3 + $0x4] sm:$0xf]
    %v166 = vld [vmem:[%s3 + $0x8] sm:$0xf]
    %v167 = vld [vmem:[%s3 + $0xc] sm:$0xf]
    %v168 = vld [vmem:[%s3 + $0x10] sm:$0xf]
    %v169 = vld [vmem:[%s3 + $0x14] sm:$0xf]
    %v170 = vld [vmem:[%s3 + $0x18] sm:$0xf]
    %v171 = vld [vmem:[%s3 + $0x1c] sm:$0xf]
    %v172 = vld [vmem:[%s3 + $0x20] sm:$0xf]
    %v173 = vld [vmem:[%s3 + $0x24] sm:$0xf]
    %v174 = vld [vmem:[%s3 + $0x28] sm:$0xf]
    %v175 = vld [vmem:[%s3 + $0x2c] sm:$0xf]
    %v176 = vld [vmem:[%s3 + $0x30] sm:$0xf]
    %v177 = vld [vmem:[%s3 + $0x34] sm:$0xf]
    %v178 = vld [vmem:[%s3 + $0x38] sm:$0xf]
    %v179 = vld [vmem:[%s3 + $0x3c] sm:$0xf]
    %v180 = vpack.c.bf16 %v163, %v162
    %v181 = vld [vmem:[%s4 + $0x3] sm:$0x1]
    %v182 = vlaneseq
    %v183 = vshrl.u32 %v182, 7
    %v184 = vsub.s32 0, %v183
    %v185 = vrot.slane %v181, %v184
    %v202 = vunpack.c.l.b16 %v164
    %v203 = vunpack.c.l.b16 %v165
    %v204 = vunpack.c.l.b16 %v166
    %v205 = vunpack.c.l.b16 %v167
    %v206 = vunpack.c.l.b16 %v168
    %v207 = vunpack.c.l.b16 %v169
    %v208 = vunpack.c.l.b16 %v170
    %v209 = vunpack.c.l.b16 %v171
    %v210 = vunpack.c.l.b16 %v172
    %v211 = vunpack.c.l.b16 %v173
    %v212 = vunpack.c.l.b16 %v174
    %v213 = vunpack.c.l.b16 %v175
    %v214 = vunpack.c.l.b16 %v176
    %v215 = vunpack.c.l.b16 %v177
    %v216 = vunpack.c.l.b16 %v178
    %v217 = vunpack.c.l.b16 %v179
    %v218 = vpack.c.b16 %v203, %v202
    %v219 = vpack.c.b16 %v205, %v204
    %v220 = vpack.c.b16 %v207, %v206
    %v221 = vpack.c.b16 %v209, %v208
    %v222 = vpack.c.b16 %v211, %v210
    %v223 = vpack.c.b16 %v213, %v212
    %v224 = vpack.c.b16 %v215, %v214
    %v225 = vpack.c.b16 %v217, %v216
    %234 = vmatprep.subr.bf16.mxu0 0
    %235 = vmatpush1.bf16.msra.mxu0 %v218
    %236 = vmatprep.subr.bf16.mxu0 0
    %237 = vmatpush1.bf16.msra.mxu0 %v219
    %238 = vmatprep.subr.bf16.mxu0 0
    %239 = vmatpush1.bf16.msra.mxu0 %v220
    %240 = vmatprep.subr.bf16.mxu0 0
    %241 = vmatpush1.bf16.msra.mxu0 %v221
    %242 = vmatprep.subr.bf16.mxu0 0
    %243 = vmatpush1.bf16.msra.mxu0 %v222
    %244 = vmatprep.subr.bf16.mxu0 0
    %245 = vmatpush1.bf16.msra.mxu0 %v223
    %246 = vmatprep.subr.bf16.mxu0 0
    %247 = vmatpush1.bf16.msra.mxu0 %v224
    %248 = vmatprep.subr.bf16.mxu0 0
    %249 = vmatpush1.bf16.msra.mxu0 %v225
    %250 = vmatprep.subr.bf16.mxu0 0
    %251 = vmatpush1.bf16.msra.mxu0 0
    %252 = vmatprep.subr.bf16.mxu0 0
    %253 = vmatpush1.bf16.msra.mxu0 0
    %254 = vmatprep.subr.bf16.mxu0 0
    %255 = vmatpush1.bf16.msra.mxu0 0
    %256 = vmatprep.subr.bf16.mxu0 0
    %257 = vmatpush1.bf16.msra.mxu0 0
    %258 = vmatprep.subr.bf16.mxu0 0
    %259 = vmatpush1.bf16.msra.mxu0 0
    %260 = vmatprep.subr.bf16.mxu0 0
    %261 = vmatpush1.bf16.msra.mxu0 0
    %262 = vmatprep.subr.bf16.mxu0 0
    %263 = vmatpush1.bf16.msra.mxu0 0
    %264 = vmatprep.subr.bf16.mxu0 0
    %265 = vmatpush1.bf16.msra.mxu0 0
    %266 = vmatprep.mubr.bf16.mxu0 0
    %267 = vmatmul.mubr.bf16.gmra.mrb[0].mxu0 %v180
    %v268 = vpop.f32.mrb[0].mxu0
    %v269 = vadd.f32 %v185, %v268
    %v270 = vpop.f32.mrb[0].mxu0
    %v271 = vpop.f32.mrb[0].mxu0
    %v272 = vadd.f32 %v185, %v271
    %v273 = vpop.f32.mrb[0].mxu0
    %274 = vdwg.mxu0
    %v275 = vmul.f32 %v269, 0.5
    %v276 = vmul.f32 %v272, 0.5
    %v277 = vadd.f32 %v22, %v275
    %v278 = vadd.f32 %v23, %v276
    %v279 = vsel %vm26, %v277, 0.0
    %280 = vadd.xlane.f32.xlu0 %v279
    %v281 = vpop.xlane.xlu0 %280
    %v282 = vsel %vm26, %v278, 0.0
    %283 = vadd.xlane.f32.xlu0 %v282
    %v284 = vpop.xlane.xlu0 %283
    %v285 = vmul.f32 %v281, %v33
    %v286 = vmul.f32 %v284, %v33
    %v287 = vsub.f32 %v277, %v285
    %v288 = vsub.f32 %v278, %v286
    %v289 = vmul.f32 %v287, %v287
    %v290 = vmul.f32 %v288, %v288
    %v291 = vsel %vm26, %v289, 0.0
    %292 = vadd.xlane.f32.xlu0 %v291
    %v293 = vpop.xlane.xlu0 %292
    %v294 = vsel %vm26, %v290, 0.0
    %295 = vadd.xlane.f32.xlu0 %v294
    %v296 = vpop.xlane.xlu0 %295
    %v297 = vmul.f32 %v293, %v33
    %v298 = vmul.f32 %v296, %v33
    %v299 = vadd.f32 %v297, 1e-05
    %v300 = vadd.f32 %v298, 1e-05
    %v301 = vrsqrt.pop %v299
    %v302 = vrsqrt.pop %v300
    %v303 = vmul.f32 %v287, %v301
    %v304 = vmul.f32 %v288, %v302
    %v305 = vld [vmem:[%s4 + $0x4] sm:$0x1]
    %v306 = vlaneseq
    %v307 = vshrl.u32 %v306, 7
    %v308 = vsub.s32 0, %v307
    %v309 = vrot.slane %v305, %v308
    %v310 = vmul.f32 %v303, %v309
    %v311 = vmul.f32 %v304, %v309
    %v312 = vld [vmem:[%s4 + $0x5] sm:$0x1]
    %v313 = vlaneseq
    %v314 = vshrl.u32 %v313, 7
    %v315 = vsub.s32 0, %v314
    %v316 = vrot.slane %v312, %v315
    %v317 = vadd.f32 %v310, %v316
    %v318 = vadd.f32 %v311, %v316
    %v319 = vld [vmem:[%s2 + $0x4] sm:$0xff]
    %v320 = vld [vmem:[%s2 + $0x1c] sm:$0xff]
    %v321 = vld [vmem:[%s2 + $0x34] sm:$0xff]
    %v322 = vld [vmem:[%s2 + $0x4c] sm:$0xff]
    %v323 = vld [vmem:[%s2 + $0x64] sm:$0xff]
    %v324 = vld [vmem:[%s2 + $0x7c] sm:$0xff]
    %v325 = vld [vmem:[%s2 + $0x94] sm:$0xff]
    %v326 = vld [vmem:[%s2 + $0xac] sm:$0xff]
    %v327 = vpack.c.bf16 %v318, %v317
    %v336 = vunpack.c.l.b16 %v319
    %v337 = vunpack.c.h.b16 %v319
    %v338 = vunpack.c.l.b16 %v320
    %v339 = vunpack.c.h.b16 %v320
    %v340 = vunpack.c.l.b16 %v321
    %v341 = vunpack.c.h.b16 %v321
    %v342 = vunpack.c.l.b16 %v322
    %v343 = vunpack.c.h.b16 %v322
    %v344 = vunpack.c.l.b16 %v323
    %v345 = vunpack.c.h.b16 %v323
    %v346 = vunpack.c.l.b16 %v324
    %v347 = vunpack.c.h.b16 %v324
    %v348 = vunpack.c.l.b16 %v325
    %v349 = vunpack.c.h.b16 %v325
    %v350 = vunpack.c.l.b16 %v326
    %v351 = vunpack.c.h.b16 %v326
    %v352 = vpack.c.b16 %v338, %v336
    %v353 = vpack.c.b16 %v339, %v337
    %v354 = vpack.c.b16 %v342, %v340
    %v355 = vpack.c.b16 %v343, %v341
    %v356 = vpack.c.b16 %v346, %v344
    %v357 = vpack.c.b16 %v347, %v345
    %v358 = vpack.c.b16 %v350, %v348
    %v359 = vpack.c.b16 %v351, %v349
    %v369 = vsel %vm26, %v327, 0
    %371 = vmatprep.subr.bf16.mxu0 %v353
    %372 = vmatpush1.bf16.msra.mxu0 %v352
    %373 = vmatprep.subr.bf16.mxu0 %v355
    %374 = vmatpush1.bf16.msra.mxu0 %v354
    %375 = vmatprep.subr.bf16.mxu0 %v357
    %376 = vmatpush1.bf16.msra.mxu0 %v356
    %377 = vmatprep.subr.bf16.mxu0 %v359
    %378 = vmatpush1.bf16.msra.mxu0 %v358
    %379 = vmatprep.subr.bf16.mxu0 0
    %380 = vmatpush1.bf16.msra.mxu0 0
    %381 = vmatprep.subr.bf16.mxu0 0
    %382 = vmatpush1.bf16.msra.mxu0 0
    %383 = vmatprep.subr.bf16.mxu0 0
    %384 = vmatpush1.bf16.msra.mxu0 0
    %385 = vmatprep.subr.bf16.mxu0 0
    %386 = vmatpush1.bf16.msra.mxu0 0
    %387 = vmatprep.subr.bf16.mxu0 0
    %388 = vmatpush1.bf16.msra.mxu0 0
    %389 = vmatprep.subr.bf16.mxu0 0
    %390 = vmatpush1.bf16.msra.mxu0 0
    %391 = vmatprep.subr.bf16.mxu0 0
    %392 = vmatpush1.bf16.msra.mxu0 0
    %393 = vmatprep.subr.bf16.mxu0 0
    %394 = vmatpush1.bf16.msra.mxu0 0
    %395 = vmatprep.subr.bf16.mxu0 0
    %396 = vmatpush1.bf16.msra.mxu0 0
    %397 = vmatprep.subr.bf16.mxu0 0
    %398 = vmatpush1.bf16.msra.mxu0 0
    %399 = vmatprep.subr.bf16.mxu0 0
    %400 = vmatpush1.bf16.msra.mxu0 0
    %401 = vmatprep.subr.bf16.mxu0 0
    %402 = vmatpush1.bf16.msra.mxu0 0
    %403 = vmatprep.mubr.bf16.mxu0 0
    %404 = vmatmul.mubr.bf16.gmra.mrb[0].mxu0 %v369
    %v405 = vpop.f32.mrb[0].mxu0
    %v406 = vadd.f32 0.0, %v405
    %v407 = vpop.f32.mrb[0].mxu0
    %v408 = vadd.f32 0.0, %v407
    %v409 = vpop.f32.mrb[0].mxu0
    %v410 = vadd.f32 0.0, %v409
    %v411 = vpop.f32.mrb[0].mxu0
    %v412 = vadd.f32 0.0, %v411
    %413 = vdwg.mxu0
    %v414 = vld [vmem:[%s4 + $0x6] sm:$0x1]
    %v415 = vlaneseq
    %v416 = vshrl.u32 %v415, 7
    %v417 = vsub.s32 0, %v416
    %v418 = vrot.slane %v414, %v417
    %v419 = vadd.f32 %v406, %v418
    %v420 = vadd.f32 %v410, %v418
    %v421 = vld [vmem:[%s4 + $0x7] sm:$0x1]
    %v422 = vlaneseq
    %v423 = vshrl.u32 %v422, 7
    %v424 = vsub.s32 0, %v423
    %v425 = vrot.slane %v421, %v424
    %427 = vrot.lane.b32.xlu0 %v425, 64
    %v428 = vpop.permute.xlu0 %427
    %v430 = vadd.f32 %v406, %v428
    %v431 = vadd.f32 %v410, %v428
    %v432 = vld [vmem:[%s4 + $0x8] sm:$0x1]
    %v433 = vlaneseq
    %v434 = vshrl.u32 %v433, 7
    %v435 = vsub.s32 0, %v434
    %v436 = vrot.slane %v432, %v435
    %v437 = vadd.f32 %v408, %v436
    %v438 = vadd.f32 %v412, %v436
    %v439 = vld [vmem:[%s2 + $0x8] sm:$0xf]
    %v440 = vld [vmem:[%s2 + $0x20] sm:$0xf]
    %v441 = vld [vmem:[%s2 + $0x38] sm:$0xf]
    %v442 = vld [vmem:[%s2 + $0x50] sm:$0xf]
    %v443 = vld [vmem:[%s2 + $0x68] sm:$0xf]
    %v444 = vld [vmem:[%s2 + $0x80] sm:$0xf]
    %v445 = vld [vmem:[%s2 + $0x98] sm:$0xf]
    %v446 = vld [vmem:[%s2 + $0xb0] sm:$0xf]
    %v447 = vpack.c.bf16 %v25, %v24
    %v456 = vunpack.c.l.b16 %v439
    %v457 = vunpack.c.l.b16 %v440
    %v458 = vunpack.c.l.b16 %v441
    %v459 = vunpack.c.l.b16 %v442
    %v460 = vunpack.c.l.b16 %v443
    %v461 = vunpack.c.l.b16 %v444
    %v462 = vunpack.c.l.b16 %v445
    %v463 = vunpack.c.l.b16 %v446
    %v464 = vpack.c.b16 %v457, %v456
    %v465 = vpack.c.b16 %v459, %v458
    %v466 = vpack.c.b16 %v461, %v460
    %v467 = vpack.c.b16 %v463, %v462
    %468 = vrot.lane.b32.xlu0 %v464, 64
    %v469 = vpop.permute.xlu0 %468
    %470 = vrot.lane.b32.xlu0 %v465, 64
    %v471 = vpop.permute.xlu0 %470
    %472 = vrot.lane.b32.xlu0 %v466, 64
    %v473 = vpop.permute.xlu0 %472
    %474 = vrot.lane.b32.xlu0 %v467, 64
    %v475 = vpop.permute.xlu0 %474
    %v481 = vsel %vm26, %v447, 0
    %483 = vmatprep.subr.bf16.mxu0 0
    %484 = vmatpush1.bf16.msra.mxu0 %v469
    %485 = vmatprep.subr.bf16.mxu0 0
    %486 = vmatpush1.bf16.msra.mxu0 %v471
    %487 = vmatprep.subr.bf16.mxu0 0
    %488 = vmatpush1.bf16.msra.mxu0 %v473
    %489 = vmatprep.subr.bf16.mxu0 0
    %490 = vmatpush1.bf16.msra.mxu0 %v475
    %491 = vmatprep.subr.bf16.mxu0 0
    %492 = vmatpush1.bf16.msra.mxu0 0
    %493 = vmatprep.subr.bf16.mxu0 0
    %494 = vmatpush1.bf16.msra.mxu0 0
    %495 = vmatprep.subr.bf16.mxu0 0
    %496 = vmatpush1.bf16.msra.mxu0 0
    %497 = vmatprep.subr.bf16.mxu0 0
    %498 = vmatpush1.bf16.msra.mxu0 0
    %499 = vmatprep.subr.bf16.mxu0 0
    %500 = vmatpush1.bf16.msra.mxu0 0
    %501 = vmatprep.subr.bf16.mxu0 0
    %502 = vmatpush1.bf16.msra.mxu0 0
    %503 = vmatprep.subr.bf16.mxu0 0
    %504 = vmatpush1.bf16.msra.mxu0 0
    %505 = vmatprep.subr.bf16.mxu0 0
    %506 = vmatpush1.bf16.msra.mxu0 0
    %507 = vmatprep.subr.bf16.mxu0 0
    %508 = vmatpush1.bf16.msra.mxu0 0
    %509 = vmatprep.subr.bf16.mxu0 0
    %510 = vmatpush1.bf16.msra.mxu0 0
    %511 = vmatprep.subr.bf16.mxu0 0
    %512 = vmatpush1.bf16.msra.mxu0 0
    %513 = vmatprep.subr.bf16.mxu0 0
    %514 = vmatpush1.bf16.msra.mxu0 0
    %515 = vmatprep.mubr.bf16.mxu0 0
    %516 = vmatmul.mubr.bf16.gmra.mrb[0].mxu0 %v481
    %v517 = vpop.f32.mrb[0].mxu0
    %v518 = vadd.f32 0.0, %v517
    %v519 = vpop.f32.mrb[0].mxu0
    %v520 = vpop.f32.mrb[0].mxu0
    %v521 = vadd.f32 0.0, %v520
    %v522 = vpop.f32.mrb[0].mxu0
    %523 = vdwg.mxu0
    %v524 = vld [vmem:[%s4 + $0xa] sm:$0x1]
    %v525 = vlaneseq
    %v526 = vshrl.u32 %v525, 7
    %v527 = vsub.s32 0, %v526
    %v528 = vrot.slane %v524, %v527
    %v529 = vadd.f32 %v419, %v528
    %v530 = vadd.f32 %v420, %v528
    %v531 = vld [vmem:[%s4 + $0xb] sm:$0x1]
    %v532 = vlaneseq
    %v533 = vshrl.u32 %v532, 7
    %v534 = vsub.s32 0, %v533
    %v535 = vrot.slane %v531, %v534
    %v536 = vadd.f32 %v419, %v535
    %v537 = vadd.f32 %v420, %v535
    %540 = vrot.lane.b32.xlu0 %v529, 112
    %v541 = vpop.permute.xlu0 %540
    %542 = vrot.lane.b32.xlu0 %v530, 112
    %v543 = vpop.permute.xlu0 %542
    %546 = vrot.lane.b32.xlu0 %v529, 96
    %v547 = vpop.permute.xlu0 %546
    %548 = vrot.lane.b32.xlu0 %v530, 96
    %v549 = vpop.permute.xlu0 %548
    %552 = vrot.lane.b32.xlu0 %v529, 80
    %v553 = vpop.permute.xlu0 %552
    %554 = vrot.lane.b32.xlu0 %v530, 80
    %v555 = vpop.permute.xlu0 %554
    %560 = vrot.lane.b32.xlu0 %v536, 112
    %v561 = vpop.permute.xlu0 %560
    %562 = vrot.lane.b32.xlu0 %v537, 112
    %v563 = vpop.permute.xlu0 %562
    %566 = vrot.lane.b32.xlu0 %v536, 96
    %v567 = vpop.permute.xlu0 %566
    %568 = vrot.lane.b32.xlu0 %v537, 96
    %v569 = vpop.permute.xlu0 %568
    %572 = vrot.lane.b32.xlu0 %v536, 80
    %v573 = vpop.permute.xlu0 %572
    %574 = vrot.lane.b32.xlu0 %v537, 80
    %v575 = vpop.permute.xlu0 %574
    %580 = vrot.lane.b32.xlu0 %v430, 112
    %v581 = vpop.permute.xlu0 %580
    %582 = vrot.lane.b32.xlu0 %v431, 112
    %v583 = vpop.permute.xlu0 %582
    %586 = vrot.lane.b32.xlu0 %v430, 96
    %v587 = vpop.permute.xlu0 %586
    %588 = vrot.lane.b32.xlu0 %v431, 96
    %v589 = vpop.permute.xlu0 %588
    %592 = vrot.lane.b32.xlu0 %v430, 80
    %v593 = vpop.permute.xlu0 %592
    %594 = vrot.lane.b32.xlu0 %v431, 80
    %v595 = vpop.permute.xlu0 %594
    %600 = vrot.lane.b32.xlu0 %v437, 112
    %v601 = vpop.permute.xlu0 %600
    %602 = vrot.lane.b32.xlu0 %v438, 112
    %v603 = vpop.permute.xlu0 %602
    %606 = vrot.lane.b32.xlu0 %v437, 96
    %v607 = vpop.permute.xlu0 %606
    %608 = vrot.lane.b32.xlu0 %v438, 96
    %v609 = vpop.permute.xlu0 %608
    %612 = vrot.lane.b32.xlu0 %v437, 80
    %v613 = vpop.permute.xlu0 %612
    %614 = vrot.lane.b32.xlu0 %v438, 80
    %v615 = vpop.permute.xlu0 %614
    %620 = vrot.lane.b32.xlu0 %v518, 112
    %v621 = vpop.permute.xlu0 %620
    %622 = vrot.lane.b32.xlu0 %v521, 112
    %v623 = vpop.permute.xlu0 %622
    %626 = vrot.lane.b32.xlu0 %v518, 96
    %v627 = vpop.permute.xlu0 %626
    %628 = vrot.lane.b32.xlu0 %v521, 96
    %v629 = vpop.permute.xlu0 %628
    %632 = vrot.lane.b32.xlu0 %v518, 80
    %v633 = vpop.permute.xlu0 %632
    %634 = vrot.lane.b32.xlu0 %v521, 80
    %v635 = vpop.permute.xlu0 %634
    %v638 = vpack.c.bf16 %v529, %v529
    %v639 = vpack.c.bf16 %v530, %v530
    %v640 = vpack.c.bf16 %v541, %v541
    %v641 = vpack.c.bf16 %v543, %v543
    %v642 = vpack.c.bf16 %v547, %v547
    %v643 = vpack.c.bf16 %v549, %v549
    %v644 = vpack.c.bf16 %v553, %v553
    %v645 = vpack.c.bf16 %v555, %v555
    %v646 = vpack.c.bf16 %v430, %v430
    %v647 = vpack.c.bf16 %v431, %v431
    %v648 = vpack.c.bf16 %v581, %v581
    %v649 = vpack.c.bf16 %v583, %v583
    %v650 = vpack.c.bf16 %v587, %v587
    %v651 = vpack.c.bf16 %v589, %v589
    %v652 = vpack.c.bf16 %v593, %v593
    %v653 = vpack.c.bf16 %v595, %v595
    %v654 = vpack.c.bf16 %v536, %v536
    %v655 = vpack.c.bf16 %v537, %v537
    %v656 = vpack.c.bf16 %v561, %v561
    %v657 = vpack.c.bf16 %v563, %v563
    %v658 = vpack.c.bf16 %v567, %v567
    %v659 = vpack.c.bf16 %v569, %v569
    %v660 = vpack.c.bf16 %v573, %v573
    %v661 = vpack.c.bf16 %v575, %v575
    %v662 = vpack.c.bf16 %v521, %v518
    %v663 = vpack.c.bf16 %v623, %v621
    %v664 = vpack.c.bf16 %v629, %v627
    %v665 = vpack.c.bf16 %v635, %v633
    %vm666 = vcmask 130048
    %v668 = vsel %vm666, %v654, 0
    %v671 = vsel %vm666, %v662, 0
    %673 = vmatprep.subr.bf16.mxu0 0
    %674 = vmatpush1.bf16.xpose.msra.mxu0 %v671
    %675 = vmatprep.subr.bf16.mxu0 0
    %676 = vmatpush1.bf16.xpose.msra.mxu0 0
    %677 = vmatprep.subr.bf16.mxu0 0
    %678 = vmatpush1.bf16.xpose.msra.mxu0 0
    %679 = vmatprep.subr.bf16.mxu0 0
    %680 = vmatpush1.bf16.xpose.msra.mxu0 0
    %681 = vmatprep.subr.bf16.mxu0 0
    %682 = vmatpush1.bf16.xpose.msra.mxu0 0
    %683 = vmatprep.subr.bf16.mxu0 0
    %684 = vmatpush1.bf16.xpose.msra.mxu0 0
    %685 = vmatprep.subr.bf16.mxu0 0
    %686 = vmatpush1.bf16.xpose.msra.mxu0 0
    %687 = vmatprep.subr.bf16.mxu0 0
    %688 = vmatpush1.bf16.xpose.msra.mxu0 0
    %689 = vmatprep.subr.bf16.mxu0 0
    %690 = vmatpush1.bf16.xpose.msra.mxu0 0
    %691 = vmatprep.subr.bf16.mxu0 0
    %692 = vmatpush1.bf16.xpose.msra.mxu0 0
    %693 = vmatprep.subr.bf16.mxu0 0
    %694 = vmatpush1.bf16.xpose.msra.mxu0 0
    %695 = vmatprep.subr.bf16.mxu0 0
    %696 = vmatpush1.bf16.xpose.msra.mxu0 0
    %697 = vmatprep.subr.bf16.mxu0 0
    %698 = vmatpush1.bf16.xpose.msra.mxu0 0
    %699 = vmatprep.subr.bf16.mxu0 0
    %700 = vmatpush1.bf16.xpose.msra.mxu0 0
    %701 = vmatprep.subr.bf16.mxu0 0
    %702 = vmatpush1.bf16.xpose.msra.mxu0 0
    %703 = vmatprep.subr.bf16.mxu0 0
    %704 = vmatpush1.bf16.xpose.msra.mxu0 0
    %705 = vmatprep.mubr.bf16.mxu0 0
    %706 = vmatmul.mubr.bf16.gmra.mrb[0].mxu0 %v668
    %v707 = vpop.f32.mrb[0].mxu0
    %v708 = vadd.f32 0.0, %v707
    %v709 = vpop.f32.mrb[0].mxu0
    %v710 = vpop.f32.mrb[0].mxu0
    %v711 = vpop.f32.mrb[0].mxu0
    %712 = vdwg.mxu0
    %v714 = vsel %vm666, %v655, 0
    %716 = vmatprep.subr.bf16.mxu0 0
    %717 = vmatpush1.bf16.xpose.msra.mxu0 %v671
    %718 = vmatprep.subr.bf16.mxu0 0
    %719 = vmatpush1.bf16.xpose.msra.mxu0 0
    %720 = vmatprep.subr.bf16.mxu0 0
    %721 = vmatpush1.bf16.xpose.msra.mxu0 0
    %722 = vmatprep.subr.bf16.mxu0 0
    %723 = vmatpush1.bf16.xpose.msra.mxu0 0
    %724 = vmatprep.subr.bf16.mxu0 0
    %725 = vmatpush1.bf16.xpose.msra.mxu0 0
    %726 = vmatprep.subr.bf16.mxu0 0
    %727 = vmatpush1.bf16.xpose.msra.mxu0 0
    %728 = vmatprep.subr.bf16.mxu0 0
    %729 = vmatpush1.bf16.xpose.msra.mxu0 0
    %730 = vmatprep.subr.bf16.mxu0 0
    %731 = vmatpush1.bf16.xpose.msra.mxu0 0
    %732 = vmatprep.subr.bf16.mxu0 0
    %733 = vmatpush1.bf16.xpose.msra.mxu0 0
    %734 = vmatprep.subr.bf16.mxu0 0
    %735 = vmatpush1.bf16.xpose.msra.mxu0 0
    %736 = vmatprep.subr.bf16.mxu0 0
    %737 = vmatpush1.bf16.xpose.msra.mxu0 0
    %738 = vmatprep.subr.bf16.mxu0 0
    %739 = vmatpush1.bf16.xpose.msra.mxu0 0
    %740 = vmatprep.subr.bf16.mxu0 0
    %741 = vmatpush1.bf16.xpose.msra.mxu0 0
    %742 = vmatprep.subr.bf16.mxu0 0
    %743 = vmatpush1.bf16.xpose.msra.mxu0 0
    %744 = vmatprep.subr.bf16.mxu0 0
    %745 = vmatpush1.bf16.xpose.msra.mxu0 0
    %746 = vmatprep.subr.bf16.mxu0 0
    %747 = vmatpush1.bf16.xpose.msra.mxu0 0
    %748 = vmatprep.mubr.bf16.mxu0 0
    %749 = vmatmul.mubr.bf16.gmra.mrb[0].mxu0 %v714
    %v750 = vpop.f32.mrb[0].mxu0
    %v751 = vadd.f32 0.0, %v750
    %v752 = vpop.f32.mrb[0].mxu0
    %v753 = vpop.f32.mrb[0].mxu0
    %v754 = vpop.f32.mrb[0].mxu0
    %755 = vdwg.mxu0
    %v757 = vsel %vm666, %v656, 0
    %v760 = vsel %vm666, %v663, 0
    %762 = vmatprep.subr.bf16.mxu0 0
    %763 = vmatpush1.bf16.xpose.msra.mxu0 %v760
    %764 = vmatprep.subr.bf16.mxu0 0
    %765 = vmatpush1.bf16.xpose.msra.mxu0 0
    %766 = vmatprep.subr.bf16.mxu0 0
    %767 = vmatpush1.bf16.xpose.msra.mxu0 0
    %768 = vmatprep.subr.bf16.mxu0 0
    %769 = vmatpush1.bf16.xpose.msra.mxu0 0
    %770 = vmatprep.subr.bf16.mxu0 0
    %771 = vmatpush1.bf16.xpose.msra.mxu0 0
    %772 = vmatprep.subr.bf16.mxu0 0
    %773 = vmatpush1.bf16.xpose.msra.mxu0 0
    %774 = vmatprep.subr.bf16.mxu0 0
    %775 = vmatpush1.bf16.xpose.msra.mxu0 0
    %776 = vmatprep.subr.bf16.mxu0 0
    %777 = vmatpush1.bf16.xpose.msra.mxu0 0
    %778 = vmatprep.subr.bf16.mxu0 0
    %779 = vmatpush1.bf16.xpose.msra.mxu0 0
    %780 = vmatprep.subr.bf16.mxu0 0
    %781 = vmatpush1.bf16.xpose.msra.mxu0 0
    %782 = vmatprep.subr.bf16.mxu0 0
    %783 = vmatpush1.bf16.xpose.msra.mxu0 0
    %784 = vmatprep.subr.bf16.mxu0 0
    %785 = vmatpush1.bf16.xpose.msra.mxu0 0
    %786 = vmatprep.subr.bf16.mxu0 0
    %787 = vmatpush1.bf16.xpose.msra.mxu0 0
    %788 = vmatprep.subr.bf16.mxu0 0
    %789 = vmatpush1.bf16.xpose.msra.mxu0 0
    %790 = vmatprep.subr.bf16.mxu0 0
    %791 = vmatpush1.bf16.xpose.msra.mxu0 0
    %792 = vmatprep.subr.bf16.mxu0 0
    %793 = vmatpush1.bf16.xpose.msra.mxu0 0
    %794 = vmatprep.mubr.bf16.mxu0 0
    %795 = vmatmul.mubr.bf16.gmra.mrb[0].mxu0 %v757
    %v796 = vpop.f32.mrb[0].mxu0
    %v797 = vadd.f32 0.0, %v796
    %v798 = vpop.f32.mrb[0].mxu0
    %v799 = vpop.f32.mrb[0].mxu0
    %v800 = vpop.f32.mrb[0].mxu0
    %801 = vdwg.mxu0
    %v803 = vsel %vm666, %v657, 0
    %805 = vmatprep.subr.bf16.mxu0 0
    %806 = vmatpush1.bf16.xpose.msra.mxu0 %v760
    %807 = vmatprep.subr.bf16.mxu0 0
    %808 = vmatpush1.bf16.xpose.msra.mxu0 0
    %809 = vmatprep.subr.bf16.mxu0 0
    %810 = vmatpush1.bf16.xpose.msra.mxu0 0
    %811 = vmatprep.subr.bf16.mxu0 0
    %812 = vmatpush1.bf16.xpose.msra.mxu0 0
    %813 = vmatprep.subr.bf16.mxu0 0
    %814 = vmatpush1.bf16.xpose.msra.mxu0 0
    %815 = vmatprep.subr.bf16.mxu0 0
    %816 = vmatpush1.bf16.xpose.msra.mxu0 0
    %817 = vmatprep.subr.bf16.mxu0 0
    %818 = vmatpush1.bf16.xpose.msra.mxu0 0
    %819 = vmatprep.subr.bf16.mxu0 0
    %820 = vmatpush1.bf16.xpose.msra.mxu0 0
    %821 = vmatprep.subr.bf16.mxu0 0
    %822 = vmatpush1.bf16.xpose.msra.mxu0 0
    %823 = vmatprep.subr.bf16.mxu0 0
    %824 = vmatpush1.bf16.xpose.msra.mxu0 0
    %825 = vmatprep.subr.bf16.mxu0 0
    %826 = vmatpush1.bf16.xpose.msra.mxu0 0
    %827 = vmatprep.subr.bf16.mxu0 0
    %828 = vmatpush1.bf16.xpose.msra.mxu0 0
    %829 = vmatprep.subr.bf16.mxu0 0
    %830 = vmatpush1.bf16.xpose.msra.mxu0 0
    %831 = vmatprep.subr.bf16.mxu0 0
    %832 = vmatpush1.bf16.xpose.msra.mxu0 0
    %833 = vmatprep.subr.bf16.mxu0 0
    %834 = vmatpush1.bf16.xpose.msra.mxu0 0
    %835 = vmatprep.subr.bf16.mxu0 0
    %836 = vmatpush1.bf16.xpose.msra.mxu0 0
    %837 = vmatprep.mubr.bf16.mxu0 0
    %838 = vmatmul.mubr.bf16.gmra.mrb[0].mxu0 %v803
    %v839 = vpop.f32.mrb[0].mxu0
    %v840 = vadd.f32 0.0, %v839
    %v841 = vpop.f32.mrb[0].mxu0
    %v842 = vpop.f32.mrb[0].mxu0
    %v843 = vpop.f32.mrb[0].mxu0
    %844 = vdwg.mxu0
    %v846 = vsel %vm666, %v658, 0
    %v849 = vsel %vm666, %v664, 0
    %851 = vmatprep.subr.bf16.mxu0 0
    %852 = vmatpush1.bf16.xpose.msra.mxu0 %v849
    %853 = vmatprep.subr.bf16.mxu0 0
    %854 = vmatpush1.bf16.xpose.msra.mxu0 0
    %855 = vmatprep.subr.bf16.mxu0 0
    %856 = vmatpush1.bf16.xpose.msra.mxu0 0
    %857 = vmatprep.subr.bf16.mxu0 0
    %858 = vmatpush1.bf16.xpose.msra.mxu0 0
    %859 = vmatprep.subr.bf16.mxu0 0
    %860 = vmatpush1.bf16.xpose.msra.mxu0 0
    %861 = vmatprep.subr.bf16.mxu0 0
    %862 = vmatpush1.bf16.xpose.msra.mxu0 0
    %863 = vmatprep.subr.bf16.mxu0 0
    %864 = vmatpush1.bf16.xpose.msra.mxu0 0
    %865 = vmatprep.subr.bf16.mxu0 0
    %866 = vmatpush1.bf16.xpose.msra.mxu0 0
    %867 = vmatprep.subr.bf16.mxu0 0
    %868 = vmatpush1.bf16.xpose.msra.mxu0 0
    %869 = vmatprep.subr.bf16.mxu0 0
    %870 = vmatpush1.bf16.xpose.msra.mxu0 0
    %871 = vmatprep.subr.bf16.mxu0 0
    %872 = vmatpush1.bf16.xpose.msra.mxu0 0
    %873 = vmatprep.subr.bf16.mxu0 0
    %874 = vmatpush1.bf16.xpose.msra.mxu0 0
    %875 = vmatprep.subr.bf16.mxu0 0
    %876 = vmatpush1.bf16.xpose.msra.mxu0 0
    %877 = vmatprep.subr.bf16.mxu0 0
    %878 = vmatpush1.bf16.xpose.msra.mxu0 0
    %879 = vmatprep.subr.bf16.mxu0 0
    %880 = vmatpush1.bf16.xpose.msra.mxu0 0
    %881 = vmatprep.subr.bf16.mxu0 0
    %882 = vmatpush1.bf16.xpose.msra.mxu0 0
    %883 = vmatprep.mubr.bf16.mxu0 0
    %884 = vmatmul.mubr.bf16.gmra.mrb[0].mxu0 %v846
    %v885 = vpop.f32.mrb[0].mxu0
    %v886 = vadd.f32 0.0, %v885
    %v887 = vpop.f32.mrb[0].mxu0
    %v888 = vpop.f32.mrb[0].mxu0
    %v889 = vpop.f32.mrb[0].mxu0
    %890 = vdwg.mxu0
    %v892 = vsel %vm666, %v659, 0
    %894 = vmatprep.subr.bf16.mxu0 0
    %895 = vmatpush1.bf16.xpose.msra.mxu0 %v849
    %896 = vmatprep.subr.bf16.mxu0 0
    %897 = vmatpush1.bf16.xpose.msra.mxu0 0
    %898 = vmatprep.subr.bf16.mxu0 0
    %899 = vmatpush1.bf16.xpose.msra.mxu0 0
    %900 = vmatprep.subr.bf16.mxu0 0
    %901 = vmatpush1.bf16.xpose.msra.mxu0 0
    %902 = vmatprep.subr.bf16.mxu0 0
    %903 = vmatpush1.bf16.xpose.msra.mxu0 0
    %904 = vmatprep.subr.bf16.mxu0 0
    %905 = vmatpush1.bf16.xpose.msra.mxu0 0
    %906 = vmatprep.subr.bf16.mxu0 0
    %907 = vmatpush1.bf16.xpose.msra.mxu0 0
    %908 = vmatprep.subr.bf16.mxu0 0
    %909 = vmatpush1.bf16.xpose.msra.mxu0 0
    %910 = vmatprep.subr.bf16.mxu0 0
    %911 = vmatpush1.bf16.xpose.msra.mxu0 0
    %912 = vmatprep.subr.bf16.mxu0 0
    %913 = vmatpush1.bf16.xpose.msra.mxu0 0
    %914 = vmatprep.subr.bf16.mxu0 0
    %915 = vmatpush1.bf16.xpose.msra.mxu0 0
    %916 = vmatprep.subr.bf16.mxu0 0
    %917 = vmatpush1.bf16.xpose.msra.mxu0 0
    %918 = vmatprep.subr.bf16.mxu0 0
    %919 = vmatpush1.bf16.xpose.msra.mxu0 0
    %920 = vmatprep.subr.bf16.mxu0 0
    %921 = vmatpush1.bf16.xpose.msra.mxu0 0
    %922 = vmatprep.subr.bf16.mxu0 0
    %923 = vmatpush1.bf16.xpose.msra.mxu0 0
    %924 = vmatprep.subr.bf16.mxu0 0
    %925 = vmatpush1.bf16.xpose.msra.mxu0 0
    %926 = vmatprep.mubr.bf16.mxu0 0
    %927 = vmatmul.mubr.bf16.gmra.mrb[0].mxu0 %v892
    %v928 = vpop.f32.mrb[0].mxu0
    %v929 = vadd.f32 0.0, %v928
    %v930 = vpop.f32.mrb[0].mxu0
    %v931 = vpop.f32.mrb[0].mxu0
    %v932 = vpop.f32.mrb[0].mxu0
    %933 = vdwg.mxu0
    %v935 = vsel %vm666, %v660, 0
    %v938 = vsel %vm666, %v665, 0
    %940 = vmatprep.subr.bf16.mxu0 0
    %941 = vmatpush1.bf16.xpose.msra.mxu0 %v938
    %942 = vmatprep.subr.bf16.mxu0 0
    %943 = vmatpush1.bf16.xpose.msra.mxu0 0
    %944 = vmatprep.subr.bf16.mxu0 0
    %945 = vmatpush1.bf16.xpose.msra.mxu0 0
    %946 = vmatprep.subr.bf16.mxu0 0
    %947 = vmatpush1.bf16.xpose.msra.mxu0 0
    %948 = vmatprep.subr.bf16.mxu0 0
    %949 = vmatpush1.bf16.xpose.msra.mxu0 0
    %950 = vmatprep.subr.bf16.mxu0 0
    %951 = vmatpush1.bf16.xpose.msra.mxu0 0
    %952 = vmatprep.subr.bf16.mxu0 0
    %953 = vmatpush1.bf16.xpose.msra.mxu0 0
    %954 = vmatprep.subr.bf16.mxu0 0
    %955 = vmatpush1.bf16.xpose.msra.mxu0 0
    %956 = vmatprep.subr.bf16.mxu0 0
    %957 = vmatpush1.bf16.xpose.msra.mxu0 0
    %958 = vmatprep.subr.bf16.mxu0 0
    %959 = vmatpush1.bf16.xpose.msra.mxu0 0
    %960 = vmatprep.subr.bf16.mxu0 0
    %961 = vmatpush1.bf16.xpose.msra.mxu0 0
    %962 = vmatprep.subr.bf16.mxu0 0
    %963 = vmatpush1.bf16.xpose.msra.mxu0 0
    %964 = vmatprep.subr.bf16.mxu0 0
    %965 = vmatpush1.bf16.xpose.msra.mxu0 0
    %966 = vmatprep.subr.bf16.mxu0 0
    %967 = vmatpush1.bf16.xpose.msra.mxu0 0
    %968 = vmatprep.subr.bf16.mxu0 0
    %969 = vmatpush1.bf16.xpose.msra.mxu0 0
    %970 = vmatprep.subr.bf16.mxu0 0
    %971 = vmatpush1.bf16.xpose.msra.mxu0 0
    %972 = vmatprep.mubr.bf16.mxu0 0
    %973 = vmatmul.mubr.bf16.gmra.mrb[0].mxu0 %v935
    %v974 = vpop.f32.mrb[0].mxu0
    %v975 = vadd.f32 0.0, %v974
    %v976 = vpop.f32.mrb[0].mxu0
    %v977 = vpop.f32.mrb[0].mxu0
    %v978 = vpop.f32.mrb[0].mxu0
    %979 = vdwg.mxu0
    %v981 = vsel %vm666, %v661, 0
    %983 = vmatprep.subr.bf16.mxu0 0
    %984 = vmatpush1.bf16.xpose.msra.mxu0 %v938
    %985 = vmatprep.subr.bf16.mxu0 0
    %986 = vmatpush1.bf16.xpose.msra.mxu0 0
    %987 = vmatprep.subr.bf16.mxu0 0
    %988 = vmatpush1.bf16.xpose.msra.mxu0 0
    %989 = vmatprep.subr.bf16.mxu0 0
    %990 = vmatpush1.bf16.xpose.msra.mxu0 0
    %991 = vmatprep.subr.bf16.mxu0 0
    %992 = vmatpush1.bf16.xpose.msra.mxu0 0
    %993 = vmatprep.subr.bf16.mxu0 0
    %994 = vmatpush1.bf16.xpose.msra.mxu0 0
    %995 = vmatprep.subr.bf16.mxu0 0
    %996 = vmatpush1.bf16.xpose.msra.mxu0 0
    %997 = vmatprep.subr.bf16.mxu0 0
    %998 = vmatpush1.bf16.xpose.msra.mxu0 0
    %999 = vmatprep.subr.bf16.mxu0 0
    %1000 = vmatpush1.bf16.xpose.msra.mxu0 0
    %1001 = vmatprep.subr.bf16.mxu0 0
    %1002 = vmatpush1.bf16.xpose.msra.mxu0 0
    %1003 = vmatprep.subr.bf16.mxu0 0
    %1004 = vmatpush1.bf16.xpose.msra.mxu0 0
    %1005 = vmatprep.subr.bf16.mxu0 0
    %1006 = vmatpush1.bf16.xpose.msra.mxu0 0
    %1007 = vmatprep.subr.bf16.mxu0 0
    %1008 = vmatpush1.bf16.xpose.msra.mxu0 0
    %1009 = vmatprep.subr.bf16.mxu0 0
    %1010 = vmatpush1.bf16.xpose.msra.mxu0 0
    %1011 = vmatprep.subr.bf16.mxu0 0
    %1012 = vmatpush1.bf16.xpose.msra.mxu0 0
    %1013 = vmatprep.subr.bf16.mxu0 0
    %1014 = vmatpush1.bf16.xpose.msra.mxu0 0
    %1015 = vmatprep.mubr.bf16.mxu0 0
    %1016 = vmatmul.mubr.bf16.gmra.mrb[0].mxu0 %v981
    %v1017 = vpop.f32.mrb[0].mxu0
    %v1018 = vadd.f32 0.0, %v1017
    %v1019 = vpop.f32.mrb[0].mxu0
    %v1020 = vpop.f32.mrb[0].mxu0
    %v1021 = vpop.f32.mrb[0].mxu0
    %1022 = vdwg.mxu0
    %1031 = vrot.lane.b32.xlu0 %v708, 1
    %v1032 = vpop.permute.xlu0 %1031
    %1033 = vrot.lane.b32.xlu0 %v751, 1
    %v1034 = vpop.permute.xlu0 %1033
    %1035 = vrot.lane.b32.xlu0 %v797, 1
    %v1036 = vpop.permute.xlu0 %1035
    %1037 = vrot.lane.b32.xlu0 %v840, 1
    %v1038 = vpop.permute.xlu0 %1037
    %1039 = vrot.lane.b32.xlu0 %v886, 1
    %v1040 = vpop.permute.xlu0 %1039
    %1041 = vrot.lane.b32.xlu0 %v929, 1
    %v1042 = vpop.permute.xlu0 %1041
    %1043 = vrot.lane.b32.xlu0 %v975, 1
    %v1044 = vpop.permute.xlu0 %1043
    %1045 = vrot.lane.b32.xlu0 %v1018, 1
    %v1046 = vpop.permute.xlu0 %1045
    %1055 = vrot.lane.b32.xlu0 %v708, 2
    %v1056 = vpop.permute.xlu0 %1055
    %1057 = vrot.lane.b32.xlu0 %v751, 2
    %v1058 = vpop.permute.xlu0 %1057
    %1059 = vrot.lane.b32.xlu0 %v797, 2
    %v1060 = vpop.permute.xlu0 %1059
    %1061 = vrot.lane.b32.xlu0 %v840, 2
    %v1062 = vpop.permute.xlu0 %1061
    %1063 = vrot.lane.b32.xlu0 %v886, 2
    %v1064 = vpop.permute.xlu0 %1063
    %1065 = vrot.lane.b32.xlu0 %v929, 2
    %v1066 = vpop.permute.xlu0 %1065
    %1067 = vrot.lane.b32.xlu0 %v975, 2
    %v1068 = vpop.permute.xlu0 %1067
    %1069 = vrot.lane.b32.xlu0 %v1018, 2
    %v1070 = vpop.permute.xlu0 %1069
    %1079 = vrot.lane.b32.xlu0 %v708, 3
    %v1080 = vpop.permute.xlu0 %1079
    %1081 = vrot.lane.b32.xlu0 %v751, 3
    %v1082 = vpop.permute.xlu0 %1081
    %1083 = vrot.lane.b32.xlu0 %v797, 3
    %v1084 = vpop.permute.xlu0 %1083
    %1085 = vrot.lane.b32.xlu0 %v840, 3
    %v1086 = vpop.permute.xlu0 %1085
    %1087 = vrot.lane.b32.xlu0 %v886, 3
    %v1088 = vpop.permute.xlu0 %1087
    %1089 = vrot.lane.b32.xlu0 %v929, 3
    %v1090 = vpop.permute.xlu0 %1089
    %1091 = vrot.lane.b32.xlu0 %v975, 3
    %v1092 = vpop.permute.xlu0 %1091
    %1093 = vrot.lane.b32.xlu0 %v1018, 3
    %v1094 = vpop.permute.xlu0 %1093
    %1103 = vrot.lane.b32.xlu0 %v708, 4
    %v1104 = vpop.permute.xlu0 %1103
    %1105 = vrot.lane.b32.xlu0 %v751, 4
    %v1106 = vpop.permute.xlu0 %1105
    %1107 = vrot.lane.b32.xlu0 %v797, 4
    %v1108 = vpop.permute.xlu0 %1107
    %1109 = vrot.lane.b32.xlu0 %v840, 4
    %v1110 = vpop.permute.xlu0 %1109
    %1111 = vrot.lane.b32.xlu0 %v886, 4
    %v1112 = vpop.permute.xlu0 %1111
    %1113 = vrot.lane.b32.xlu0 %v929, 4
    %v1114 = vpop.permute.xlu0 %1113
    %1115 = vrot.lane.b32.xlu0 %v975, 4
    %v1116 = vpop.permute.xlu0 %1115
    %1117 = vrot.lane.b32.xlu0 %v1018, 4
    %v1118 = vpop.permute.xlu0 %1117
    %1127 = vrot.lane.b32.xlu0 %v708, 5
    %v1128 = vpop.permute.xlu0 %1127
    %1129 = vrot.lane.b32.xlu0 %v751, 5
    %v1130 = vpop.permute.xlu0 %1129
    %1131 = vrot.lane.b32.xlu0 %v797, 5
    %v1132 = vpop.permute.xlu0 %1131
    %1133 = vrot.lane.b32.xlu0 %v840, 5
    %v1134 = vpop.permute.xlu0 %1133
    %1135 = vrot.lane.b32.xlu0 %v886, 5
    %v1136 = vpop.permute.xlu0 %1135
    %1137 = vrot.lane.b32.xlu0 %v929, 5
    %v1138 = vpop.permute.xlu0 %1137
    %1139 = vrot.lane.b32.xlu0 %v975, 5
    %v1140 = vpop.permute.xlu0 %1139
    %1141 = vrot.lane.b32.xlu0 %v1018, 5
    %v1142 = vpop.permute.xlu0 %1141
    %1151 = vrot.lane.b32.xlu0 %v708, 6
    %v1152 = vpop.permute.xlu0 %1151
    %1153 = vrot.lane.b32.xlu0 %v751, 6
    %v1154 = vpop.permute.xlu0 %1153
    %1155 = vrot.lane.b32.xlu0 %v797, 6
    %v1156 = vpop.permute.xlu0 %1155
    %1157 = vrot.lane.b32.xlu0 %v840, 6
    %v1158 = vpop.permute.xlu0 %1157
    %1159 = vrot.lane.b32.xlu0 %v886, 6
    %v1160 = vpop.permute.xlu0 %1159
    %1161 = vrot.lane.b32.xlu0 %v929, 6
    %v1162 = vpop.permute.xlu0 %1161
    %1163 = vrot.lane.b32.xlu0 %v975, 6
    %v1164 = vpop.permute.xlu0 %1163
    %1165 = vrot.lane.b32.xlu0 %v1018, 6
    %v1166 = vpop.permute.xlu0 %1165
    %1175 = vrot.lane.b32.xlu0 %v708, 7
    %v1176 = vpop.permute.xlu0 %1175
    %1177 = vrot.lane.b32.xlu0 %v751, 7
    %v1178 = vpop.permute.xlu0 %1177
    %1179 = vrot.lane.b32.xlu0 %v797, 7
    %v1180 = vpop.permute.xlu0 %1179
    %1181 = vrot.lane.b32.xlu0 %v840, 7
    %v1182 = vpop.permute.xlu0 %1181
    %1183 = vrot.lane.b32.xlu0 %v886, 7
    %v1184 = vpop.permute.xlu0 %1183
    %1185 = vrot.lane.b32.xlu0 %v929, 7
    %v1186 = vpop.permute.xlu0 %1185
    %1187 = vrot.lane.b32.xlu0 %v975, 7
    %v1188 = vpop.permute.xlu0 %1187
    %1189 = vrot.lane.b32.xlu0 %v1018, 7
    %v1190 = vpop.permute.xlu0 %1189
    %vm1199 = vcmask 1040384
    %v1200 = vsel %vm1199, %v708, %v1032
    %v1201 = vsel %vm1199, %v751, %v1034
    %v1202 = vsel %vm1199, %v797, %v1036
    %v1203 = vsel %vm1199, %v840, %v1038
    %v1204 = vsel %vm1199, %v886, %v1040
    %v1205 = vsel %vm1199, %v929, %v1042
    %v1206 = vsel %vm1199, %v975, %v1044
    %v1207 = vsel %vm1199, %v1018, %v1046
    %vm1208 = vcmask 1041408
    %v1209 = vsel %vm1208, %v1200, %v1056
    %v1210 = vsel %vm1208, %v1201, %v1058
    %v1211 = vsel %vm1208, %v1202, %v1060
    %v1212 = vsel %vm1208, %v1203, %v1062
    %v1213 = vsel %vm1208, %v1204, %v1064
    %v1214 = vsel %vm1208, %v1205, %v1066
    %v1215 = vsel %vm1208, %v1206, %v1068
    %v1216 = vsel %vm1208, %v1207, %v1070
    %vm1217 = vcmask 1042432
    %v1218 = vsel %vm1217, %v1209, %v1080
    %v1219 = vsel %vm1217, %v1210, %v1082
    %v1220 = vsel %vm1217, %v1211, %v1084
    %v1221 = vsel %vm1217, %v1212, %v1086
    %v1222 = vsel %vm1217, %v1213, %v1088
    %v1223 = vsel %vm1217, %v1214, %v1090
    %v1224 = vsel %vm1217, %v1215, %v1092
    %v1225 = vsel %vm1217, %v1216, %v1094
    %vm1226 = vcmask 1043456
    %v1227 = vsel %vm1226, %v1218, %v1104
    %v1228 = vsel %vm1226, %v1219, %v1106
    %v1229 = vsel %vm1226, %v1220, %v1108
    %v1230 = vsel %vm1226, %v1221, %v1110
    %v1231 = vsel %vm1226, %v1222, %v1112
    %v1232 = vsel %vm1226, %v1223, %v1114
    %v1233 = vsel %vm1226, %v1224, %v1116
    %v1234 = vsel %vm1226, %v1225, %v1118
    %vm1235 = vcmask 1044480
    %v1236 = vsel %vm1235, %v1227, %v1128
    %v1237 = vsel %vm1235, %v1228, %v1130
    %v1238 = vsel %vm1235, %v1229, %v1132
    %v1239 = vsel %vm1235, %v1230, %v1134
    %v1240 = vsel %vm1235, %v1231, %v1136
    %v1241 = vsel %vm1235, %v1232, %v1138
    %v1242 = vsel %vm1235, %v1233, %v1140
    %v1243 = vsel %vm1235, %v1234, %v1142
    %vm1244 = vcmask 1045504
    %v1245 = vsel %vm1244, %v1236, %v1152
    %v1246 = vsel %vm1244, %v1237, %v1154
    %v1247 = vsel %vm1244, %v1238, %v1156
    %v1248 = vsel %vm1244, %v1239, %v1158
    %v1249 = vsel %vm1244, %v1240, %v1160
    %v1250 = vsel %vm1244, %v1241, %v1162
    %v1251 = vsel %vm1244, %v1242, %v1164
    %v1252 = vsel %vm1244, %v1243, %v1166
    %vm1253 = vcmask 1046528
    %v1254 = vsel %vm1253, %v1245, %v1176
    %v1255 = vsel %vm1253, %v1246, %v1178
    %v1256 = vsel %vm1253, %v1247, %v1180
    %v1257 = vsel %vm1253, %v1248, %v1182
    %v1258 = vsel %vm1253, %v1249, %v1184
    %v1259 = vsel %vm1253, %v1250, %v1186
    %v1260 = vsel %vm1253, %v1251, %v1188
    %v1261 = vsel %vm1253, %v1252, %v1190
    %1263 = vrot.lane.b32.xlu0 %v646, 64
    %v1264 = vpop.permute.xlu0 %1263
    %1266 = vrot.lane.b32.xlu0 %v1254, 121
    %v1267 = vpop.permute.xlu0 %1266
    %v1270 = vsel %vm666, %v638, 0
    %v1273 = vsel %vm666, %v1264, 0
    %1275 = vmatprep.subr.bf16.mxu0 0
    %1276 = vmatpush1.bf16.xpose.msra.mxu0 %v1273
    %1277 = vmatprep.subr.bf16.mxu0 0
    %1278 = vmatpush1.bf16.xpose.msra.mxu0 0
    %1279 = vmatprep.subr.bf16.mxu0 0
    %1280 = vmatpush1.bf16.xpose.msra.mxu0 0
    %1281 = vmatprep.subr.bf16.mxu0 0
    %1282 = vmatpush1.bf16.xpose.msra.mxu0 0
    %1283 = vmatprep.subr.bf16.mxu0 0
    %1284 = vmatpush1.bf16.xpose.msra.mxu0 0
    %1285 = vmatprep.subr.bf16.mxu0 0
    %1286 = vmatpush1.bf16.xpose.msra.mxu0 0
    %1287 = vmatprep.subr.bf16.mxu0 0
    %1288 = vmatpush1.bf16.xpose.msra.mxu0 0
    %1289 = vmatprep.subr.bf16.mxu0 0
    %1290 = vmatpush1.bf16.xpose.msra.mxu0 0
    %1291 = vmatprep.subr.bf16.mxu0 0
    %1292 = vmatpush1.bf16.xpose.msra.mxu0 0
    %1293 = vmatprep.subr.bf16.mxu0 0
    %1294 = vmatpush1.bf16.xpose.msra.mxu0 0
    %1295 = vmatprep.subr.bf16.mxu0 0
    %1296 = vmatpush1.bf16.xpose.msra.mxu0 0
    %1297 = vmatprep.subr.bf16.mxu0 0
    %1298 = vmatpush1.bf16.xpose.msra.mxu0 0
    %1299 = vmatprep.subr.bf16.mxu0 0
    %1300 = vmatpush1.bf16.xpose.msra.mxu0 0
    %1301 = vmatprep.subr.bf16.mxu0 0
    %1302 = vmatpush1.bf16.xpose.msra.mxu0 0
    %1303 = vmatprep.subr.bf16.mxu0 0
    %1304 = vmatpush1.bf16.xpose.msra.mxu0 0
    %1305 = vmatprep.subr.bf16.mxu0 0
    %1306 = vmatpush1.bf16.xpose.msra.mxu0 0
    %1307 = vmatprep.mubr.bf16.mxu0 0
    %1308 = vmatmul.mubr.bf16.gmra.mrb[0].mxu0 %v1270
    %v1309 = vpop.f32.mrb[0].mxu0
    %v1310 = vadd.f32 %v1267, %v1309
    %v1311 = vpop.f32.mrb[0].mxu0
    %v1312 = vpop.f32.mrb[0].mxu0
    %v1313 = vpop.f32.mrb[0].mxu0
    %1314 = vdwg.mxu0
    %1316 = vrot.lane.b32.xlu0 %v647, 64
    %v1317 = vpop.permute.xlu0 %1316
    %1319 = vrot.lane.b32.xlu0 %v1255, 121
    %v1320 = vpop.permute.xlu0 %1319
    %v1323 = vsel %vm666, %v639, 0
    %v1326 = vsel %vm666, %v1317, 0
    %1328 = vmatprep.subr.bf16.mxu0 0
    %1329 = vmatpush1.bf16.xpose.msra.mxu0 %v1326
    %1330 = vmatprep.subr.bf16.mxu0 0
    %1331 = vmatpush1.bf16.xpose.msra.mxu0 0
    %1332 = vmatprep.subr.bf16.mxu0 0
    %1333 = vmatpush1.bf16.xpose.msra.mxu0 0
    %1334 = vmatprep.subr.bf16.mxu0 0
    %1335 = vmatpush1.bf16.xpose.msra.mxu0 0
    %1336 = vmatprep.subr.bf16.mxu0 0
    %1337 = vmatpush1.bf16.xpose.msra.mxu0 0
    %1338 = vmatprep.subr.bf16.mxu0 0
    %1339 = vmatpush1.bf16.xpose.msra.mxu0 0
    %1340 = vmatprep.subr.bf16.mxu0 0
    %1341 = vmatpush1.bf16.xpose.msra.mxu0 0
    %1342 = vmatprep.subr.bf16.mxu0 0
    %1343 = vmatpush1.bf16.xpose.msra.mxu0 0
    %1344 = vmatprep.subr.bf16.mxu0 0
    %1345 = vmatpush1.bf16.xpose.msra.mxu0 0
    %1346 = vmatprep.subr.bf16.mxu0 0
    %1347 = vmatpush1.bf16.xpose.msra.mxu0 0
    %1348 = vmatprep.subr.bf16.mxu0 0
    %1349 = vmatpush1.bf16.xpose.msra.mxu0 0
    %1350 = vmatprep.subr.bf16.mxu0 0
    %1351 = vmatpush1.bf16.xpose.msra.mxu0 0
    %1352 = vmatprep.subr.bf16.mxu0 0
    %1353 = vmatpush1.bf16.xpose.msra.mxu0 0
    %1354 = vmatprep.subr.bf16.mxu0 0
    %1355 = vmatpush1.bf16.xpose.msra.mxu0 0
    %1356 = vmatprep.subr.bf16.mxu0 0
    %1357 = vmatpush1.bf16.xpose.msra.mxu0 0
    %1358 = vmatprep.subr.bf16.mxu0 0
    %1359 = vmatpush1.bf16.xpose.msra.mxu0 0
    %1360 = vmatprep.mubr.bf16.mxu0 0
    %1361 = vmatmul.mubr.bf16.gmra.mrb[0].mxu0 %v1323
    %v1362 = vpop.f32.mrb[0].mxu0
    %v1363 = vadd.f32 %v1320, %v1362
    %v1364 = vpop.f32.mrb[0].mxu0
    %v1365 = vpop.f32.mrb[0].mxu0
    %v1366 = vpop.f32.mrb[0].mxu0
    %1367 = vdwg.mxu0
    %1369 = vrot.lane.b32.xlu0 %v648, 64
    %v1370 = vpop.permute.xlu0 %1369
    %1372 = vrot.lane.b32.xlu0 %v1256, 121
    %v1373 = vpop.permute.xlu0 %1372
    %v1376 = vsel %vm666, %v640, 0
    %v1379 = vsel %vm666, %v1370, 0
    %1381 = vmatprep.subr.bf16.mxu0 0
    %1382 = vmatpush1.bf16.xpose.msra.mxu0 %v1379
    %1383 = vmatprep.subr.bf16.mxu0 0
    %1384 = vmatpush1.bf16.xpose.msra.mxu0 0
    %1385 = vmatprep.subr.bf16.mxu0 0
    %1386 = vmatpush1.bf16.xpose.msra.mxu0 0
    %1387 = vmatprep.subr.bf16.mxu0 0
    %1388 = vmatpush1.bf16.xpose.msra.mxu0 0
    %1389 = vmatprep.subr.bf16.mxu0 0
    %1390 = vmatpush1.bf16.xpose.msra.mxu0 0
    %1391 = vmatprep.subr.bf16.mxu0 0
    %1392 = vmatpush1.bf16.xpose.msra.mxu0 0
    %1393 = vmatprep.subr.bf16.mxu0 0
    %1394 = vmatpush1.bf16.xpose.msra.mxu0 0
    %1395 = vmatprep.subr.bf16.mxu0 0
    %1396 = vmatpush1.bf16.xpose.msra.mxu0 0
    %1397 = vmatprep.subr.bf16.mxu0 0
    %1398 = vmatpush1.bf16.xpose.msra.mxu0 0
    %1399 = vmatprep.subr.bf16.mxu0 0
    %1400 = vmatpush1.bf16.xpose.msra.mxu0 0
    %1401 = vmatprep.subr.bf16.mxu0 0
    %1402 = vmatpush1.bf16.xpose.msra.mxu0 0
    %1403 = vmatprep.subr.bf16.mxu0 0
    %1404 = vmatpush1.bf16.xpose.msra.mxu0 0
    %1405 = vmatprep.subr.bf16.mxu0 0
    %1406 = vmatpush1.bf16.xpose.msra.mxu0 0
    %1407 = vmatprep.subr.bf16.mxu0 0
    %1408 = vmatpush1.bf16.xpose.msra.mxu0 0
    %1409 = vmatprep.subr.bf16.mxu0 0
    %1410 = vmatpush1.bf16.xpose.msra.mxu0 0
    %1411 = vmatprep.subr.bf16.mxu0 0
    %1412 = vmatpush1.bf16.xpose.msra.mxu0 0
    %1413 = vmatprep.mubr.bf16.mxu0 0
    %1414 = vmatmul.mubr.bf16.gmra.mrb[0].mxu0 %v1376
    %v1415 = vpop.f32.mrb[0].mxu0
    %v1416 = vadd.f32 %v1373, %v1415
    %v1417 = vpop.f32.mrb[0].mxu0
    %v1418 = vpop.f32.mrb[0].mxu0
    %v1419 = vpop.f32.mrb[0].mxu0
    %1420 = vdwg.mxu0
    %1422 = vrot.lane.b32.xlu0 %v649, 64
    %v1423 = vpop.permute.xlu0 %1422
    %1425 = vrot.lane.b32.xlu0 %v1257, 121
    %v1426 = vpop.permute.xlu0 %1425
    %v1429 = vsel %vm666, %v641, 0
    %v1432 = vsel %vm666, %v1423, 0
    %1434 = vmatprep.subr.bf16.mxu0 0
    %1435 = vmatpush1.bf16.xpose.msra.mxu0 %v1432
    %1436 = vmatprep.subr.bf16.mxu0 0
    %1437 = vmatpush1.bf16.xpose.msra.mxu0 0
    %1438 = vmatprep.subr.bf16.mxu0 0
    %1439 = vmatpush1.bf16.xpose.msra.mxu0 0
    %1440 = vmatprep.subr.bf16.mxu0 0
    %1441 = vmatpush1.bf16.xpose.msra.mxu0 0
    %1442 = vmatprep.subr.bf16.mxu0 0
    %1443 = vmatpush1.bf16.xpose.msra.mxu0 0
    %1444 = vmatprep.subr.bf16.mxu0 0
    %1445 = vmatpush1.bf16.xpose.msra.mxu0 0
    %1446 = vmatprep.subr.bf16.mxu0 0
    %1447 = vmatpush1.bf16.xpose.msra.mxu0 0
    %1448 = vmatprep.subr.bf16.mxu0 0
    %1449 = vmatpush1.bf16.xpose.msra.mxu0 0
    %1450 = vmatprep.subr.bf16.mxu0 0
    %1451 = vmatpush1.bf16.xpose.msra.mxu0 0
    %1452 = vmatprep.subr.bf16.mxu0 0
    %1453 = vmatpush1.bf16.xpose.msra.mxu0 0
    %1454 = vmatprep.subr.bf16.mxu0 0
    %1455 = vmatpush1.bf16.xpose.msra.mxu0 0
    %1456 = vmatprep.subr.bf16.mxu0 0
    %1457 = vmatpush1.bf16.xpose.msra.mxu0 0
    %1458 = vmatprep.subr.bf16.mxu0 0
    %1459 = vmatpush1.bf16.xpose.msra.mxu0 0
    %1460 = vmatprep.subr.bf16.mxu0 0
    %1461 = vmatpush1.bf16.xpose.msra.mxu0 0
    %1462 = vmatprep.subr.bf16.mxu0 0
    %1463 = vmatpush1.bf16.xpose.msra.mxu0 0
    %1464 = vmatprep.subr.bf16.mxu0 0
    %1465 = vmatpush1.bf16.xpose.msra.mxu0 0
    %1466 = vmatprep.mubr.bf16.mxu0 0
    %1467 = vmatmul.mubr.bf16.gmra.mrb[0].mxu0 %v1429
    %v1468 = vpop.f32.mrb[0].mxu0
    %v1469 = vadd.f32 %v1426, %v1468
    %v1470 = vpop.f32.mrb[0].mxu0
    %v1471 = vpop.f32.mrb[0].mxu0
    %v1472 = vpop.f32.mrb[0].mxu0
    %1473 = vdwg.mxu0
    %1475 = vrot.lane.b32.xlu0 %v650, 64
    %v1476 = vpop.permute.xlu0 %1475
    %1478 = vrot.lane.b32.xlu0 %v1258, 121
    %v1479 = vpop.permute.xlu0 %1478
    %v1482 = vsel %vm666, %v642, 0
    %v1485 = vsel %vm666, %v1476, 0
    %1487 = vmatprep.subr.bf16.mxu0 0
    %1488 = vmatpush1.bf16.xpose.msra.mxu0 %v1485
    %1489 = vmatprep.subr.bf16.mxu0 0
    %1490 = vmatpush1.bf16.xpose.msra.mxu0 0
    %1491 = vmatprep.subr.bf16.mxu0 0
    %1492 = vmatpush1.bf16.xpose.msra.mxu0 0
    %1493 = vmatprep.subr.bf16.mxu0 0
    %1494 = vmatpush1.bf16.xpose.msra.mxu0 0
    %1495 = vmatprep.subr.bf16.mxu0 0
    %1496 = vmatpush1.bf16.xpose.msra.mxu0 0
    %1497 = vmatprep.subr.bf16.mxu0 0
    %1498 = vmatpush1.bf16.xpose.msra.mxu0 0
    %1499 = vmatprep.subr.bf16.mxu0 0
    %1500 = vmatpush1.bf16.xpose.msra.mxu0 0
    %1501 = vmatprep.subr.bf16.mxu0 0
    %1502 = vmatpush1.bf16.xpose.msra.mxu0 0
    %1503 = vmatprep.subr.bf16.mxu0 0
    %1504 = vmatpush1.bf16.xpose.msra.mxu0 0
    %1505 = vmatprep.subr.bf16.mxu0 0
    %1506 = vmatpush1.bf16.xpose.msra.mxu0 0
    %1507 = vmatprep.subr.bf16.mxu0 0
    %1508 = vmatpush1.bf16.xpose.msra.mxu0 0
    %1509 = vmatprep.subr.bf16.mxu0 0
    %1510 = vmatpush1.bf16.xpose.msra.mxu0 0
    %1511 = vmatprep.subr.bf16.mxu0 0
    %1512 = vmatpush1.bf16.xpose.msra.mxu0 0
    %1513 = vmatprep.subr.bf16.mxu0 0
    %1514 = vmatpush1.bf16.xpose.msra.mxu0 0
    %1515 = vmatprep.subr.bf16.mxu0 0
    %1516 = vmatpush1.bf16.xpose.msra.mxu0 0
    %1517 = vmatprep.subr.bf16.mxu0 0
    %1518 = vmatpush1.bf16.xpose.msra.mxu0 0
    %1519 = vmatprep.mubr.bf16.mxu0 0
    %1520 = vmatmul.mubr.bf16.gmra.mrb[0].mxu0 %v1482
    %v1521 = vpop.f32.mrb[0].mxu0
    %v1522 = vadd.f32 %v1479, %v1521
    %v1523 = vpop.f32.mrb[0].mxu0
    %v1524 = vpop.f32.mrb[0].mxu0
    %v1525 = vpop.f32.mrb[0].mxu0
    %1526 = vdwg.mxu0
    %1528 = vrot.lane.b32.xlu0 %v651, 64
    %v1529 = vpop.permute.xlu0 %1528
    %1531 = vrot.lane.b32.xlu0 %v1259, 121
    %v1532 = vpop.permute.xlu0 %1531
    %v1535 = vsel %vm666, %v643, 0
    %v1538 = vsel %vm666, %v1529, 0
    %1540 = vmatprep.subr.bf16.mxu0 0
    %1541 = vmatpush1.bf16.xpose.msra.mxu0 %v1538
    %1542 = vmatprep.subr.bf16.mxu0 0
    %1543 = vmatpush1.bf16.xpose.msra.mxu0 0
    %1544 = vmatprep.subr.bf16.mxu0 0
    %1545 = vmatpush1.bf16.xpose.msra.mxu0 0
    %1546 = vmatprep.subr.bf16.mxu0 0
    %1547 = vmatpush1.bf16.xpose.msra.mxu0 0
    %1548 = vmatprep.subr.bf16.mxu0 0
    %1549 = vmatpush1.bf16.xpose.msra.mxu0 0
    %1550 = vmatprep.subr.bf16.mxu0 0
    %1551 = vmatpush1.bf16.xpose.msra.mxu0 0
    %1552 = vmatprep.subr.bf16.mxu0 0
    %1553 = vmatpush1.bf16.xpose.msra.mxu0 0
    %1554 = vmatprep.subr.bf16.mxu0 0
    %1555 = vmatpush1.bf16.xpose.msra.mxu0 0
    %1556 = vmatprep.subr.bf16.mxu0 0
    %1557 = vmatpush1.bf16.xpose.msra.mxu0 0
    %1558 = vmatprep.subr.bf16.mxu0 0
    %1559 = vmatpush1.bf16.xpose.msra.mxu0 0
    %1560 = vmatprep.subr.bf16.mxu0 0
    %1561 = vmatpush1.bf16.xpose.msra.mxu0 0
    %1562 = vmatprep.subr.bf16.mxu0 0
    %1563 = vmatpush1.bf16.xpose.msra.mxu0 0
    %1564 = vmatprep.subr.bf16.mxu0 0
    %1565 = vmatpush1.bf16.xpose.msra.mxu0 0
    %1566 = vmatprep.subr.bf16.mxu0 0
    %1567 = vmatpush1.bf16.xpose.msra.mxu0 0
    %1568 = vmatprep.subr.bf16.mxu0 0
    %1569 = vmatpush1.bf16.xpose.msra.mxu0 0
    %1570 = vmatprep.subr.bf16.mxu0 0
    %1571 = vmatpush1.bf16.xpose.msra.mxu0 0
    %1572 = vmatprep.mubr.bf16.mxu0 0
    %1573 = vmatmul.mubr.bf16.gmra.mrb[0].mxu0 %v1535
    %v1574 = vpop.f32.mrb[0].mxu0
    %v1575 = vadd.f32 %v1532, %v1574
    %v1576 = vpop.f32.mrb[0].mxu0
    %v1577 = vpop.f32.mrb[0].mxu0
    %v1578 = vpop.f32.mrb[0].mxu0
    %1579 = vdwg.mxu0
    %1581 = vrot.lane.b32.xlu0 %v652, 64
    %v1582 = vpop.permute.xlu0 %1581
    %1584 = vrot.lane.b32.xlu0 %v1260, 121
    %v1585 = vpop.permute.xlu0 %1584
    %v1588 = vsel %vm666, %v644, 0
    %v1591 = vsel %vm666, %v1582, 0
    %1593 = vmatprep.subr.bf16.mxu0 0
    %1594 = vmatpush1.bf16.xpose.msra.mxu0 %v1591
    %1595 = vmatprep.subr.bf16.mxu0 0
    %1596 = vmatpush1.bf16.xpose.msra.mxu0 0
    %1597 = vmatprep.subr.bf16.mxu0 0
    %1598 = vmatpush1.bf16.xpose.msra.mxu0 0
    %1599 = vmatprep.subr.bf16.mxu0 0
    %1600 = vmatpush1.bf16.xpose.msra.mxu0 0
    %1601 = vmatprep.subr.bf16.mxu0 0
    %1602 = vmatpush1.bf16.xpose.msra.mxu0 0
    %1603 = vmatprep.subr.bf16.mxu0 0
    %1604 = vmatpush1.bf16.xpose.msra.mxu0 0
    %1605 = vmatprep.subr.bf16.mxu0 0
    %1606 = vmatpush1.bf16.xpose.msra.mxu0 0
    %1607 = vmatprep.subr.bf16.mxu0 0
    %1608 = vmatpush1.bf16.xpose.msra.mxu0 0
    %1609 = vmatprep.subr.bf16.mxu0 0
    %1610 = vmatpush1.bf16.xpose.msra.mxu0 0
    %1611 = vmatprep.subr.bf16.mxu0 0
    %1612 = vmatpush1.bf16.xpose.msra.mxu0 0
    %1613 = vmatprep.subr.bf16.mxu0 0
    %1614 = vmatpush1.bf16.xpose.msra.mxu0 0
    %1615 = vmatprep.subr.bf16.mxu0 0
    %1616 = vmatpush1.bf16.xpose.msra.mxu0 0
    %1617 = vmatprep.subr.bf16.mxu0 0
    %1618 = vmatpush1.bf16.xpose.msra.mxu0 0
    %1619 = vmatprep.subr.bf16.mxu0 0
    %1620 = vmatpush1.bf16.xpose.msra.mxu0 0
    %1621 = vmatprep.subr.bf16.mxu0 0
    %1622 = vmatpush1.bf16.xpose.msra.mxu0 0
    %1623 = vmatprep.subr.bf16.mxu0 0
    %1624 = vmatpush1.bf16.xpose.msra.mxu0 0
    %1625 = vmatprep.mubr.bf16.mxu0 0
    %1626 = vmatmul.mubr.bf16.gmra.mrb[0].mxu0 %v1588
    %v1627 = vpop.f32.mrb[0].mxu0
    %v1628 = vadd.f32 %v1585, %v1627
    %v1629 = vpop.f32.mrb[0].mxu0
    %v1630 = vpop.f32.mrb[0].mxu0
    %v1631 = vpop.f32.mrb[0].mxu0
    %1632 = vdwg.mxu0
    %1634 = vrot.lane.b32.xlu0 %v653, 64
    %v1635 = vpop.permute.xlu0 %1634
    %1637 = vrot.lane.b32.xlu0 %v1261, 121
    %v1638 = vpop.permute.xlu0 %1637
    %v1641 = vsel %vm666, %v645, 0
    %v1644 = vsel %vm666, %v1635, 0
    %1646 = vmatprep.subr.bf16.mxu0 0
    %1647 = vmatpush1.bf16.xpose.msra.mxu0 %v1644
    %1648 = vmatprep.subr.bf16.mxu0 0
    %1649 = vmatpush1.bf16.xpose.msra.mxu0 0
    %1650 = vmatprep.subr.bf16.mxu0 0
    %1651 = vmatpush1.bf16.xpose.msra.mxu0 0
    %1652 = vmatprep.subr.bf16.mxu0 0
    %1653 = vmatpush1.bf16.xpose.msra.mxu0 0
    %1654 = vmatprep.subr.bf16.mxu0 0
    %1655 = vmatpush1.bf16.xpose.msra.mxu0 0
    %1656 = vmatprep.subr.bf16.mxu0 0
    %1657 = vmatpush1.bf16.xpose.msra.mxu0 0
    %1658 = vmatprep.subr.bf16.mxu0 0
    %1659 = vmatpush1.bf16.xpose.msra.mxu0 0
    %1660 = vmatprep.subr.bf16.mxu0 0
    %1661 = vmatpush1.bf16.xpose.msra.mxu0 0
    %1662 = vmatprep.subr.bf16.mxu0 0
    %1663 = vmatpush1.bf16.xpose.msra.mxu0 0
    %1664 = vmatprep.subr.bf16.mxu0 0
    %1665 = vmatpush1.bf16.xpose.msra.mxu0 0
    %1666 = vmatprep.subr.bf16.mxu0 0
    %1667 = vmatpush1.bf16.xpose.msra.mxu0 0
    %1668 = vmatprep.subr.bf16.mxu0 0
    %1669 = vmatpush1.bf16.xpose.msra.mxu0 0
    %1670 = vmatprep.subr.bf16.mxu0 0
    %1671 = vmatpush1.bf16.xpose.msra.mxu0 0
    %1672 = vmatprep.subr.bf16.mxu0 0
    %1673 = vmatpush1.bf16.xpose.msra.mxu0 0
    %1674 = vmatprep.subr.bf16.mxu0 0
    %1675 = vmatpush1.bf16.xpose.msra.mxu0 0
    %1676 = vmatprep.subr.bf16.mxu0 0
    %1677 = vmatpush1.bf16.xpose.msra.mxu0 0
    %1678 = vmatprep.mubr.bf16.mxu0 0
    %1679 = vmatmul.mubr.bf16.gmra.mrb[0].mxu0 %v1641
    %v1680 = vpop.f32.mrb[0].mxu0
    %v1681 = vadd.f32 %v1638, %v1680
    %v1682 = vpop.f32.mrb[0].mxu0
    %v1683 = vpop.f32.mrb[0].mxu0
    %v1684 = vpop.f32.mrb[0].mxu0
    %1685 = vdwg.mxu0
    %v1686 = vmul.f32 %v1310, 0.25
    %v1687 = vmul.f32 %v1363, 0.25
    %v1688 = vmul.f32 %v1416, 0.25
    %v1689 = vmul.f32 %v1469, 0.25
    %v1690 = vmul.f32 %v1522, 0.25
    %v1691 = vmul.f32 %v1575, 0.25
    %v1692 = vmul.f32 %v1628, 0.25
    %v1693 = vmul.f32 %v1681, 0.25
    %vm1694 = vcmask 64512
    %v1695 = vsel %vm1694, %v1686, -inf
    %1696 = vmax.xlane.f32.xlu0 %v1695
    %v1697 = vpop.xlane.xlu0 %1696
    %v1698 = vsel %vm1694, %v1687, -inf
    %1699 = vmax.xlane.f32.xlu0 %v1698
    %v1700 = vpop.xlane.xlu0 %1699
    %v1701 = vsel %vm1694, %v1688, -inf
    %1702 = vmax.xlane.f32.xlu0 %v1701
    %v1703 = vpop.xlane.xlu0 %1702
    %v1704 = vsel %vm1694, %v1689, -inf
    %1705 = vmax.xlane.f32.xlu0 %v1704
    %v1706 = vpop.xlane.xlu0 %1705
    %v1707 = vsel %vm1694, %v1690, -inf
    %1708 = vmax.xlane.f32.xlu0 %v1707
    %v1709 = vpop.xlane.xlu0 %1708
    %v1710 = vsel %vm1694, %v1691, -inf
    %1711 = vmax.xlane.f32.xlu0 %v1710
    %v1712 = vpop.xlane.xlu0 %1711
    %v1713 = vsel %vm1694, %v1692, -inf
    %1714 = vmax.xlane.f32.xlu0 %v1713
    %v1715 = vpop.xlane.xlu0 %1714
    %v1716 = vsel %vm1694, %v1693, -inf
    %1717 = vmax.xlane.f32.xlu0 %v1716
    %v1718 = vpop.xlane.xlu0 %1717
    %v1719 = vsub.f32 %v1686, %v1697
    %v1720 = vsub.f32 %v1687, %v1700
    %v1721 = vsub.f32 %v1688, %v1703
    %v1722 = vsub.f32 %v1689, %v1706
    %v1723 = vsub.f32 %v1690, %v1709
    %v1724 = vsub.f32 %v1691, %v1712
    %v1725 = vsub.f32 %v1692, %v1715
    %v1726 = vsub.f32 %v1693, %v1718
    %v1727 = vmul.f32 %v1719, 1.442695
    %v1728 = vpow.pop %v1727
    %v1729 = vmul.f32 %v1720, 1.442695
    %v1730 = vpow.pop %v1729
    %v1731 = vmul.f32 %v1721, 1.442695
    %v1732 = vpow.pop %v1731
    %v1733 = vmul.f32 %v1722, 1.442695
    %v1734 = vpow.pop %v1733
    %v1735 = vmul.f32 %v1723, 1.442695
    %v1736 = vpow.pop %v1735
    %v1737 = vmul.f32 %v1724, 1.442695
    %v1738 = vpow.pop %v1737
    %v1739 = vmul.f32 %v1725, 1.442695
    %v1740 = vpow.pop %v1739
    %v1741 = vmul.f32 %v1726, 1.442695
    %v1742 = vpow.pop %v1741
    %v1743 = vsel %vm1694, %v1728, 0.0
    %1744 = vadd.xlane.f32.xlu0 %v1743
    %v1745 = vpop.xlane.xlu0 %1744
    %v1746 = vsel %vm1694, %v1730, 0.0
    %1747 = vadd.xlane.f32.xlu0 %v1746
    %v1748 = vpop.xlane.xlu0 %1747
    %v1749 = vsel %vm1694, %v1732, 0.0
    %1750 = vadd.xlane.f32.xlu0 %v1749
    %v1751 = vpop.xlane.xlu0 %1750
    %v1752 = vsel %vm1694, %v1734, 0.0
    %1753 = vadd.xlane.f32.xlu0 %v1752
    %v1754 = vpop.xlane.xlu0 %1753
    %v1755 = vsel %vm1694, %v1736, 0.0
    %1756 = vadd.xlane.f32.xlu0 %v1755
    %v1757 = vpop.xlane.xlu0 %1756
    %v1758 = vsel %vm1694, %v1738, 0.0
    %1759 = vadd.xlane.f32.xlu0 %v1758
    %v1760 = vpop.xlane.xlu0 %1759
    %v1761 = vsel %vm1694, %v1740, 0.0
    %1762 = vadd.xlane.f32.xlu0 %v1761
    %v1763 = vpop.xlane.xlu0 %1762
    %v1764 = vsel %vm1694, %v1742, 0.0
    %1765 = vadd.xlane.f32.xlu0 %v1764
    %v1766 = vpop.xlane.xlu0 %1765
    %v1767 = vrcp.pop %v1745
    %v1768 = vrcp.pop %v1748
    %v1769 = vrcp.pop %v1751
    %v1770 = vrcp.pop %v1754
    %v1771 = vrcp.pop %v1757
    %v1772 = vrcp.pop %v1760
    %v1773 = vrcp.pop %v1763
    %v1774 = vrcp.pop %v1766
    %v1775 = vmul.f32 %v1728, %v1767
    %v1776 = vmul.f32 %v1730, %v1768
    %v1777 = vmul.f32 %v1732, %v1769
    %v1778 = vmul.f32 %v1734, %v1770
    %v1779 = vmul.f32 %v1736, %v1771
    %v1780 = vmul.f32 %v1738, %v1772
    %v1781 = vmul.f32 %v1740, %v1773
    %v1782 = vmul.f32 %v1742, %v1774
    %v1783 = vpack.c.bf16 %v1775, %v1775
    %v1784 = vpack.c.bf16 %v1776, %v1776
    %v1785 = vpack.c.bf16 %v1777, %v1777
    %v1786 = vpack.c.bf16 %v1778, %v1778
    %v1787 = vpack.c.bf16 %v1779, %v1779
    %v1788 = vpack.c.bf16 %v1780, %v1780
    %v1789 = vpack.c.bf16 %v1781, %v1781
    %v1790 = vpack.c.bf16 %v1782, %v1782
    %v1791 = vpack.c.bf16 %v437, %v437
    %v1792 = vpack.c.bf16 %v438, %v438
    %v1793 = vpack.c.bf16 %v601, %v601
    %v1794 = vpack.c.bf16 %v603, %v603
    %v1795 = vpack.c.bf16 %v607, %v607
    %v1796 = vpack.c.bf16 %v609, %v609
    %v1797 = vpack.c.bf16 %v613, %v613
    %v1798 = vpack.c.bf16 %v615, %v615
    %v1800 = vsel %vm1694, %v1783, 0
    %v1803 = vsel %vm1226, %v1791, 0
    %1805 = vmatprep.subr.bf16.mxu0 0
    %1806 = vmatpush1.bf16.msra.mxu0 %v1803
    %1807 = vmatprep.subr.bf16.mxu0 0
    %1808 = vmatpush1.bf16.msra.mxu0 0
    %1809 = vmatprep.subr.bf16.mxu0 0
    %1810 = vmatpush1.bf16.msra.mxu0 0
    %1811 = vmatprep.subr.bf16.mxu0 0
    %1812 = vmatpush1.bf16.msra.mxu0 0
    %1813 = vmatprep.subr.bf16.mxu0 0
    %1814 = vmatpush1.bf16.msra.mxu0 0
    %1815 = vmatprep.subr.bf16.mxu0 0
    %1816 = vmatpush1.bf16.msra.mxu0 0
    %1817 = vmatprep.subr.bf16.mxu0 0
    %1818 = vmatpush1.bf16.msra.mxu0 0
    %1819 = vmatprep.subr.bf16.mxu0 0
    %1820 = vmatpush1.bf16.msra.mxu0 0
    %1821 = vmatprep.subr.bf16.mxu0 0
    %1822 = vmatpush1.bf16.msra.mxu0 0
    %1823 = vmatprep.subr.bf16.mxu0 0
    %1824 = vmatpush1.bf16.msra.mxu0 0
    %1825 = vmatprep.subr.bf16.mxu0 0
    %1826 = vmatpush1.bf16.msra.mxu0 0
    %1827 = vmatprep.subr.bf16.mxu0 0
    %1828 = vmatpush1.bf16.msra.mxu0 0
    %1829 = vmatprep.subr.bf16.mxu0 0
    %1830 = vmatpush1.bf16.msra.mxu0 0
    %1831 = vmatprep.subr.bf16.mxu0 0
    %1832 = vmatpush1.bf16.msra.mxu0 0
    %1833 = vmatprep.subr.bf16.mxu0 0
    %1834 = vmatpush1.bf16.msra.mxu0 0
    %1835 = vmatprep.subr.bf16.mxu0 0
    %1836 = vmatpush1.bf16.msra.mxu0 0
    %1837 = vmatprep.mubr.bf16.mxu0 0
    %1838 = vmatmul.mubr.bf16.gmra.mrb[0].mxu0 %v1800
    %v1839 = vpop.f32.mrb[0].mxu0
    %v1840 = vadd.f32 0.0, %v1839
    %v1841 = vpop.f32.mrb[0].mxu0
    %v1842 = vpop.f32.mrb[0].mxu0
    %v1843 = vpop.f32.mrb[0].mxu0
    %1844 = vdwg.mxu0
    %v1846 = vsel %vm1694, %v1784, 0
    %v1849 = vsel %vm1226, %v1792, 0
    %1851 = vmatprep.subr.bf16.mxu0 0
    %1852 = vmatpush1.bf16.msra.mxu0 %v1849
    %1853 = vmatprep.subr.bf16.mxu0 0
    %1854 = vmatpush1.bf16.msra.mxu0 0
    %1855 = vmatprep.subr.bf16.mxu0 0
    %1856 = vmatpush1.bf16.msra.mxu0 0
    %1857 = vmatprep.subr.bf16.mxu0 0
    %1858 = vmatpush1.bf16.msra.mxu0 0
    %1859 = vmatprep.subr.bf16.mxu0 0
    %1860 = vmatpush1.bf16.msra.mxu0 0
    %1861 = vmatprep.subr.bf16.mxu0 0
    %1862 = vmatpush1.bf16.msra.mxu0 0
    %1863 = vmatprep.subr.bf16.mxu0 0
    %1864 = vmatpush1.bf16.msra.mxu0 0
    %1865 = vmatprep.subr.bf16.mxu0 0
    %1866 = vmatpush1.bf16.msra.mxu0 0
    %1867 = vmatprep.subr.bf16.mxu0 0
    %1868 = vmatpush1.bf16.msra.mxu0 0
    %1869 = vmatprep.subr.bf16.mxu0 0
    %1870 = vmatpush1.bf16.msra.mxu0 0
    %1871 = vmatprep.subr.bf16.mxu0 0
    %1872 = vmatpush1.bf16.msra.mxu0 0
    %1873 = vmatprep.subr.bf16.mxu0 0
    %1874 = vmatpush1.bf16.msra.mxu0 0
    %1875 = vmatprep.subr.bf16.mxu0 0
    %1876 = vmatpush1.bf16.msra.mxu0 0
    %1877 = vmatprep.subr.bf16.mxu0 0
    %1878 = vmatpush1.bf16.msra.mxu0 0
    %1879 = vmatprep.subr.bf16.mxu0 0
    %1880 = vmatpush1.bf16.msra.mxu0 0
    %1881 = vmatprep.subr.bf16.mxu0 0
    %1882 = vmatpush1.bf16.msra.mxu0 0
    %1883 = vmatprep.mubr.bf16.mxu0 0
    %1884 = vmatmul.mubr.bf16.gmra.mrb[0].mxu0 %v1846
    %v1885 = vpop.f32.mrb[0].mxu0
    %v1886 = vadd.f32 0.0, %v1885
    %v1887 = vpop.f32.mrb[0].mxu0
    %v1888 = vpop.f32.mrb[0].mxu0
    %v1889 = vpop.f32.mrb[0].mxu0
    %1890 = vdwg.mxu0
    %v1892 = vsel %vm1694, %v1785, 0
    %v1895 = vsel %vm1226, %v1793, 0
    %1897 = vmatprep.subr.bf16.mxu0 0
    %1898 = vmatpush1.bf16.msra.mxu0 %v1895
    %1899 = vmatprep.subr.bf16.mxu0 0
    %1900 = vmatpush1.bf16.msra.mxu0 0
    %1901 = vmatprep.subr.bf16.mxu0 0
    %1902 = vmatpush1.bf16.msra.mxu0 0
    %1903 = vmatprep.subr.bf16.mxu0 0
    %1904 = vmatpush1.bf16.msra.mxu0 0
    %1905 = vmatprep.subr.bf16.mxu0 0
    %1906 = vmatpush1.bf16.msra.mxu0 0
    %1907 = vmatprep.subr.bf16.mxu0 0
    %1908 = vmatpush1.bf16.msra.mxu0 0
    %1909 = vmatprep.subr.bf16.mxu0 0
    %1910 = vmatpush1.bf16.msra.mxu0 0
    %1911 = vmatprep.subr.bf16.mxu0 0
    %1912 = vmatpush1.bf16.msra.mxu0 0
    %1913 = vmatprep.subr.bf16.mxu0 0
    %1914 = vmatpush1.bf16.msra.mxu0 0
    %1915 = vmatprep.subr.bf16.mxu0 0
    %1916 = vmatpush1.bf16.msra.mxu0 0
    %1917 = vmatprep.subr.bf16.mxu0 0
    %1918 = vmatpush1.bf16.msra.mxu0 0
    %1919 = vmatprep.subr.bf16.mxu0 0
    %1920 = vmatpush1.bf16.msra.mxu0 0
    %1921 = vmatprep.subr.bf16.mxu0 0
    %1922 = vmatpush1.bf16.msra.mxu0 0
    %1923 = vmatprep.subr.bf16.mxu0 0
    %1924 = vmatpush1.bf16.msra.mxu0 0
    %1925 = vmatprep.subr.bf16.mxu0 0
    %1926 = vmatpush1.bf16.msra.mxu0 0
    %1927 = vmatprep.subr.bf16.mxu0 0
    %1928 = vmatpush1.bf16.msra.mxu0 0
    %1929 = vmatprep.mubr.bf16.mxu0 0
    %1930 = vmatmul.mubr.bf16.gmra.mrb[0].mxu0 %v1892
    %v1931 = vpop.f32.mrb[0].mxu0
    %v1932 = vadd.f32 0.0, %v1931
    %v1933 = vpop.f32.mrb[0].mxu0
    %v1934 = vpop.f32.mrb[0].mxu0
    %v1935 = vpop.f32.mrb[0].mxu0
    %1936 = vdwg.mxu0
    %v1938 = vsel %vm1694, %v1786, 0
    %v1941 = vsel %vm1226, %v1794, 0
    %1943 = vmatprep.subr.bf16.mxu0 0
    %1944 = vmatpush1.bf16.msra.mxu0 %v1941
    %1945 = vmatprep.subr.bf16.mxu0 0
    %1946 = vmatpush1.bf16.msra.mxu0 0
    %1947 = vmatprep.subr.bf16.mxu0 0
    %1948 = vmatpush1.bf16.msra.mxu0 0
    %1949 = vmatprep.subr.bf16.mxu0 0
    %1950 = vmatpush1.bf16.msra.mxu0 0
    %1951 = vmatprep.subr.bf16.mxu0 0
    %1952 = vmatpush1.bf16.msra.mxu0 0
    %1953 = vmatprep.subr.bf16.mxu0 0
    %1954 = vmatpush1.bf16.msra.mxu0 0
    %1955 = vmatprep.subr.bf16.mxu0 0
    %1956 = vmatpush1.bf16.msra.mxu0 0
    %1957 = vmatprep.subr.bf16.mxu0 0
    %1958 = vmatpush1.bf16.msra.mxu0 0
    %1959 = vmatprep.subr.bf16.mxu0 0
    %1960 = vmatpush1.bf16.msra.mxu0 0
    %1961 = vmatprep.subr.bf16.mxu0 0
    %1962 = vmatpush1.bf16.msra.mxu0 0
    %1963 = vmatprep.subr.bf16.mxu0 0
    %1964 = vmatpush1.bf16.msra.mxu0 0
    %1965 = vmatprep.subr.bf16.mxu0 0
    %1966 = vmatpush1.bf16.msra.mxu0 0
    %1967 = vmatprep.subr.bf16.mxu0 0
    %1968 = vmatpush1.bf16.msra.mxu0 0
    %1969 = vmatprep.subr.bf16.mxu0 0
    %1970 = vmatpush1.bf16.msra.mxu0 0
    %1971 = vmatprep.subr.bf16.mxu0 0
    %1972 = vmatpush1.bf16.msra.mxu0 0
    %1973 = vmatprep.subr.bf16.mxu0 0
    %1974 = vmatpush1.bf16.msra.mxu0 0
    %1975 = vmatprep.mubr.bf16.mxu0 0
    %1976 = vmatmul.mubr.bf16.gmra.mrb[0].mxu0 %v1938
    %v1977 = vpop.f32.mrb[0].mxu0
    %v1978 = vadd.f32 0.0, %v1977
    %v1979 = vpop.f32.mrb[0].mxu0
    %v1980 = vpop.f32.mrb[0].mxu0
    %v1981 = vpop.f32.mrb[0].mxu0
    %1982 = vdwg.mxu0
    %v1984 = vsel %vm1694, %v1787, 0
    %v1987 = vsel %vm1226, %v1795, 0
    %1989 = vmatprep.subr.bf16.mxu0 0
    %1990 = vmatpush1.bf16.msra.mxu0 %v1987
    %1991 = vmatprep.subr.bf16.mxu0 0
    %1992 = vmatpush1.bf16.msra.mxu0 0
    %1993 = vmatprep.subr.bf16.mxu0 0
    %1994 = vmatpush1.bf16.msra.mxu0 0
    %1995 = vmatprep.subr.bf16.mxu0 0
    %1996 = vmatpush1.bf16.msra.mxu0 0
    %1997 = vmatprep.subr.bf16.mxu0 0
    %1998 = vmatpush1.bf16.msra.mxu0 0
    %1999 = vmatprep.subr.bf16.mxu0 0
    %2000 = vmatpush1.bf16.msra.mxu0 0
    %2001 = vmatprep.subr.bf16.mxu0 0
    %2002 = vmatpush1.bf16.msra.mxu0 0
    %2003 = vmatprep.subr.bf16.mxu0 0
    %2004 = vmatpush1.bf16.msra.mxu0 0
    %2005 = vmatprep.subr.bf16.mxu0 0
    %2006 = vmatpush1.bf16.msra.mxu0 0
    %2007 = vmatprep.subr.bf16.mxu0 0
    %2008 = vmatpush1.bf16.msra.mxu0 0
    %2009 = vmatprep.subr.bf16.mxu0 0
    %2010 = vmatpush1.bf16.msra.mxu0 0
    %2011 = vmatprep.subr.bf16.mxu0 0
    %2012 = vmatpush1.bf16.msra.mxu0 0
    %2013 = vmatprep.subr.bf16.mxu0 0
    %2014 = vmatpush1.bf16.msra.mxu0 0
    %2015 = vmatprep.subr.bf16.mxu0 0
    %2016 = vmatpush1.bf16.msra.mxu0 0
    %2017 = vmatprep.subr.bf16.mxu0 0
    %2018 = vmatpush1.bf16.msra.mxu0 0
    %2019 = vmatprep.subr.bf16.mxu0 0
    %2020 = vmatpush1.bf16.msra.mxu0 0
    %2021 = vmatprep.mubr.bf16.mxu0 0
    %2022 = vmatmul.mubr.bf16.gmra.mrb[0].mxu0 %v1984
    %v2023 = vpop.f32.mrb[0].mxu0
    %v2024 = vadd.f32 0.0, %v2023
    %v2025 = vpop.f32.mrb[0].mxu0
    %v2026 = vpop.f32.mrb[0].mxu0
    %v2027 = vpop.f32.mrb[0].mxu0
    %2028 = vdwg.mxu0
    %v2030 = vsel %vm1694, %v1788, 0
    %v2033 = vsel %vm1226, %v1796, 0
    %2035 = vmatprep.subr.bf16.mxu0 0
    %2036 = vmatpush1.bf16.msra.mxu0 %v2033
    %2037 = vmatprep.subr.bf16.mxu0 0
    %2038 = vmatpush1.bf16.msra.mxu0 0
    %2039 = vmatprep.subr.bf16.mxu0 0
    %2040 = vmatpush1.bf16.msra.mxu0 0
    %2041 = vmatprep.subr.bf16.mxu0 0
    %2042 = vmatpush1.bf16.msra.mxu0 0
    %2043 = vmatprep.subr.bf16.mxu0 0
    %2044 = vmatpush1.bf16.msra.mxu0 0
    %2045 = vmatprep.subr.bf16.mxu0 0
    %2046 = vmatpush1.bf16.msra.mxu0 0
    %2047 = vmatprep.subr.bf16.mxu0 0
    %2048 = vmatpush1.bf16.msra.mxu0 0
    %2049 = vmatprep.subr.bf16.mxu0 0
    %2050 = vmatpush1.bf16.msra.mxu0 0
    %2051 = vmatprep.subr.bf16.mxu0 0
    %2052 = vmatpush1.bf16.msra.mxu0 0
    %2053 = vmatprep.subr.bf16.mxu0 0
    %2054 = vmatpush1.bf16.msra.mxu0 0
    %2055 = vmatprep.subr.bf16.mxu0 0
    %2056 = vmatpush1.bf16.msra.mxu0 0
    %2057 = vmatprep.subr.bf16.mxu0 0
    %2058 = vmatpush1.bf16.msra.mxu0 0
    %2059 = vmatprep.subr.bf16.mxu0 0
    %2060 = vmatpush1.bf16.msra.mxu0 0
    %2061 = vmatprep.subr.bf16.mxu0 0
    %2062 = vmatpush1.bf16.msra.mxu0 0
    %2063 = vmatprep.subr.bf16.mxu0 0
    %2064 = vmatpush1.bf16.msra.mxu0 0
    %2065 = vmatprep.subr.bf16.mxu0 0
    %2066 = vmatpush1.bf16.msra.mxu0 0
    %2067 = vmatprep.mubr.bf16.mxu0 0
    %2068 = vmatmul.mubr.bf16.gmra.mrb[0].mxu0 %v2030
    %v2069 = vpop.f32.mrb[0].mxu0
    %v2070 = vadd.f32 0.0, %v2069
    %v2071 = vpop.f32.mrb[0].mxu0
    %v2072 = vpop.f32.mrb[0].mxu0
    %v2073 = vpop.f32.mrb[0].mxu0
    %2074 = vdwg.mxu0
    %v2076 = vsel %vm1694, %v1789, 0
    %v2079 = vsel %vm1226, %v1797, 0
    %2081 = vmatprep.subr.bf16.mxu0 0
    %2082 = vmatpush1.bf16.msra.mxu0 %v2079
    %2083 = vmatprep.subr.bf16.mxu0 0
    %2084 = vmatpush1.bf16.msra.mxu0 0
    %2085 = vmatprep.subr.bf16.mxu0 0
    %2086 = vmatpush1.bf16.msra.mxu0 0
    %2087 = vmatprep.subr.bf16.mxu0 0
    %2088 = vmatpush1.bf16.msra.mxu0 0
    %2089 = vmatprep.subr.bf16.mxu0 0
    %2090 = vmatpush1.bf16.msra.mxu0 0
    %2091 = vmatprep.subr.bf16.mxu0 0
    %2092 = vmatpush1.bf16.msra.mxu0 0
    %2093 = vmatprep.subr.bf16.mxu0 0
    %2094 = vmatpush1.bf16.msra.mxu0 0
    %2095 = vmatprep.subr.bf16.mxu0 0
    %2096 = vmatpush1.bf16.msra.mxu0 0
    %2097 = vmatprep.subr.bf16.mxu0 0
    %2098 = vmatpush1.bf16.msra.mxu0 0
    %2099 = vmatprep.subr.bf16.mxu0 0
    %2100 = vmatpush1.bf16.msra.mxu0 0
    %2101 = vmatprep.subr.bf16.mxu0 0
    %2102 = vmatpush1.bf16.msra.mxu0 0
    %2103 = vmatprep.subr.bf16.mxu0 0
    %2104 = vmatpush1.bf16.msra.mxu0 0
    %2105 = vmatprep.subr.bf16.mxu0 0
    %2106 = vmatpush1.bf16.msra.mxu0 0
    %2107 = vmatprep.subr.bf16.mxu0 0
    %2108 = vmatpush1.bf16.msra.mxu0 0
    %2109 = vmatprep.subr.bf16.mxu0 0
    %2110 = vmatpush1.bf16.msra.mxu0 0
    %2111 = vmatprep.subr.bf16.mxu0 0
    %2112 = vmatpush1.bf16.msra.mxu0 0
    %2113 = vmatprep.mubr.bf16.mxu0 0
    %2114 = vmatmul.mubr.bf16.gmra.mrb[0].mxu0 %v2076
    %v2115 = vpop.f32.mrb[0].mxu0
    %v2116 = vadd.f32 0.0, %v2115
    %v2117 = vpop.f32.mrb[0].mxu0
    %v2118 = vpop.f32.mrb[0].mxu0
    %v2119 = vpop.f32.mrb[0].mxu0
    %2120 = vdwg.mxu0
    %v2122 = vsel %vm1694, %v1790, 0
    %v2125 = vsel %vm1226, %v1798, 0
    %2127 = vmatprep.subr.bf16.mxu0 0
    %2128 = vmatpush1.bf16.msra.mxu0 %v2125
    %2129 = vmatprep.subr.bf16.mxu0 0
    %2130 = vmatpush1.bf16.msra.mxu0 0
    %2131 = vmatprep.subr.bf16.mxu0 0
    %2132 = vmatpush1.bf16.msra.mxu0 0
    %2133 = vmatprep.subr.bf16.mxu0 0
    %2134 = vmatpush1.bf16.msra.mxu0 0
    %2135 = vmatprep.subr.bf16.mxu0 0
    %2136 = vmatpush1.bf16.msra.mxu0 0
    %2137 = vmatprep.subr.bf16.mxu0 0
    %2138 = vmatpush1.bf16.msra.mxu0 0
    %2139 = vmatprep.subr.bf16.mxu0 0
    %2140 = vmatpush1.bf16.msra.mxu0 0
    %2141 = vmatprep.subr.bf16.mxu0 0
    %2142 = vmatpush1.bf16.msra.mxu0 0
    %2143 = vmatprep.subr.bf16.mxu0 0
    %2144 = vmatpush1.bf16.msra.mxu0 0
    %2145 = vmatprep.subr.bf16.mxu0 0
    %2146 = vmatpush1.bf16.msra.mxu0 0
    %2147 = vmatprep.subr.bf16.mxu0 0
    %2148 = vmatpush1.bf16.msra.mxu0 0
    %2149 = vmatprep.subr.bf16.mxu0 0
    %2150 = vmatpush1.bf16.msra.mxu0 0
    %2151 = vmatprep.subr.bf16.mxu0 0
    %2152 = vmatpush1.bf16.msra.mxu0 0
    %2153 = vmatprep.subr.bf16.mxu0 0
    %2154 = vmatpush1.bf16.msra.mxu0 0
    %2155 = vmatprep.subr.bf16.mxu0 0
    %2156 = vmatpush1.bf16.msra.mxu0 0
    %2157 = vmatprep.subr.bf16.mxu0 0
    %2158 = vmatpush1.bf16.msra.mxu0 0
    %2159 = vmatprep.mubr.bf16.mxu0 0
    %2160 = vmatmul.mubr.bf16.gmra.mrb[0].mxu0 %v2122
    %v2161 = vpop.f32.mrb[0].mxu0
    %v2162 = vadd.f32 0.0, %v2161
    %v2163 = vpop.f32.mrb[0].mxu0
    %v2164 = vpop.f32.mrb[0].mxu0
    %v2165 = vpop.f32.mrb[0].mxu0
    %2166 = vdwg.mxu0
    %2169 = vrot.lane.b32.xlu0 %v1932, 16
    %v2170 = vpop.permute.xlu0 %2169
    %2171 = vrot.lane.b32.xlu0 %v1978, 16
    %v2172 = vpop.permute.xlu0 %2171
    %2177 = vrot.lane.b32.xlu0 %v2024, 32
    %v2178 = vpop.permute.xlu0 %2177
    %2179 = vrot.lane.b32.xlu0 %v2070, 32
    %v2180 = vpop.permute.xlu0 %2179
    %2185 = vrot.lane.b32.xlu0 %v2116, 48
    %v2186 = vpop.permute.xlu0 %2185
    %2187 = vrot.lane.b32.xlu0 %v2162, 48
    %v2188 = vpop.permute.xlu0 %2187
    %v2191 = vsel %vm666, %v1840, %v2170
    %v2192 = vsel %vm666, %v1886, %v2172
    %vm2193 = vcmask 261120
    %v2194 = vsel %vm2193, %v2191, %v2178
    %v2195 = vsel %vm2193, %v2192, %v2180
    %vm2196 = vcmask 392192
    %v2197 = vsel %vm2196, %v2194, %v2186
    %v2198 = vsel %vm2196, %v2195, %v2188
    %v2199 = vld [vmem:[%s2 + $0xc] sm:$0xf]
    %v2200 = vld [vmem:[%s2 + $0x24] sm:$0xf]
    %v2201 = vld [vmem:[%s2 + $0x3c] sm:$0xf]
    %v2202 = vld [vmem:[%s2 + $0x54] sm:$0xf]
    %v2203 = vld [vmem:[%s2 + $0x6c] sm:$0xf]
    %v2204 = vld [vmem:[%s2 + $0x84] sm:$0xf]
    %v2205 = vld [vmem:[%s2 + $0x9c] sm:$0xf]
    %v2206 = vld [vmem:[%s2 + $0xb4] sm:$0xf]
    %v2207 = vpack.c.bf16 %v2198, %v2197
    %v2208 = vld [vmem:[%s4 + $0x9] sm:$0x1]
    %v2209 = vlaneseq
    %v2210 = vshrl.u32 %v2209, 7
    %v2211 = vsub.s32 0, %v2210
    %v2212 = vrot.slane %v2208, %v2211
    %v2221 = vunpack.c.l.b16 %v2199
    %v2222 = vunpack.c.l.b16 %v2200
    %v2223 = vunpack.c.l.b16 %v2201
    %v2224 = vunpack.c.l.b16 %v2202
    %v2225 = vunpack.c.l.b16 %v2203
    %v2226 = vunpack.c.l.b16 %v2204
    %v2227 = vunpack.c.l.b16 %v2205
    %v2228 = vunpack.c.l.b16 %v2206
    %v2229 = vpack.c.b16 %v2222, %v2221
    %v2230 = vpack.c.b16 %v2224, %v2223
    %v2231 = vpack.c.b16 %v2226, %v2225
    %v2232 = vpack.c.b16 %v2228, %v2227
    %v2238 = vsel %vm26, %v2207, 0
    %2240 = vmatprep.subr.bf16.mxu0 0
    %2241 = vmatpush1.bf16.msra.mxu0 %v2229
    %2242 = vmatprep.subr.bf16.mxu0 0
    %2243 = vmatpush1.bf16.msra.mxu0 %v2230
    %2244 = vmatprep.subr.bf16.mxu0 0
    %2245 = vmatpush1.bf16.msra.mxu0 %v2231
    %2246 = vmatprep.subr.bf16.mxu0 0
    %2247 = vmatpush1.bf16.msra.mxu0 %v2232
    %2248 = vmatprep.subr.bf16.mxu0 0
    %2249 = vmatpush1.bf16.msra.mxu0 0
    %2250 = vmatprep.subr.bf16.mxu0 0
    %2251 = vmatpush1.bf16.msra.mxu0 0
    %2252 = vmatprep.subr.bf16.mxu0 0
    %2253 = vmatpush1.bf16.msra.mxu0 0
    %2254 = vmatprep.subr.bf16.mxu0 0
    %2255 = vmatpush1.bf16.msra.mxu0 0
    %2256 = vmatprep.subr.bf16.mxu0 0
    %2257 = vmatpush1.bf16.msra.mxu0 0
    %2258 = vmatprep.subr.bf16.mxu0 0
    %2259 = vmatpush1.bf16.msra.mxu0 0
    %2260 = vmatprep.subr.bf16.mxu0 0
    %2261 = vmatpush1.bf16.msra.mxu0 0
    %2262 = vmatprep.subr.bf16.mxu0 0
    %2263 = vmatpush1.bf16.msra.mxu0 0
    %2264 = vmatprep.subr.bf16.mxu0 0
    %2265 = vmatpush1.bf16.msra.mxu0 0
    %2266 = vmatprep.subr.bf16.mxu0 0
    %2267 = vmatpush1.bf16.msra.mxu0 0
    %2268 = vmatprep.subr.bf16.mxu0 0
    %2269 = vmatpush1.bf16.msra.mxu0 0
    %2270 = vmatprep.subr.bf16.mxu0 0
    %2271 = vmatpush1.bf16.msra.mxu0 0
    %2272 = vmatprep.mubr.bf16.mxu0 0
    %2273 = vmatmul.mubr.bf16.gmra.mrb[0].mxu0 %v2238
    %v2274 = vpop.f32.mrb[0].mxu0
    %v2275 = vadd.f32 %v2212, %v2274
    %v2276 = vpop.f32.mrb[0].mxu0
    %v2277 = vpop.f32.mrb[0].mxu0
    %v2278 = vadd.f32 %v2212, %v2277
    %v2279 = vpop.f32.mrb[0].mxu0
    %2280 = vdwg.mxu0
    %v2281 = vadd.f32 %v277, %v2275
    %v2282 = vadd.f32 %v278, %v2278
    %v2283 = vsel %vm26, %v2281, 0.0
    %2284 = vadd.xlane.f32.xlu0 %v2283
    %v2285 = vpop.xlane.xlu0 %2284
    %v2286 = vsel %vm26, %v2282, 0.0
    %2287 = vadd.xlane.f32.xlu0 %v2286
    %v2288 = vpop.xlane.xlu0 %2287
    %v2289 = vmul.f32 %v2285, %v33
    %v2290 = vmul.f32 %v2288, %v33
    %v2291 = vsub.f32 %v2281, %v2289
    %v2292 = vsub.f32 %v2282, %v2290
    %v2293 = vmul.f32 %v2291, %v2291
    %v2294 = vmul.f32 %v2292, %v2292
    %v2295 = vsel %vm26, %v2293, 0.0
    %2296 = vadd.xlane.f32.xlu0 %v2295
    %v2297 = vpop.xlane.xlu0 %2296
    %v2298 = vsel %vm26, %v2294, 0.0
    %2299 = vadd.xlane.f32.xlu0 %v2298
    %v2300 = vpop.xlane.xlu0 %2299
    %v2301 = vmul.f32 %v2297, %v33
    %v2302 = vmul.f32 %v2300, %v33
    %v2303 = vadd.f32 %v2301, 1e-05
    %v2304 = vadd.f32 %v2302, 1e-05
    %v2305 = vrsqrt.pop %v2303
    %v2306 = vrsqrt.pop %v2304
    %v2307 = vmul.f32 %v2291, %v2305
    %v2308 = vmul.f32 %v2292, %v2306
    %v2309 = vld [vmem:[%s4 + $0xc] sm:$0x1]
    %v2310 = vlaneseq
    %v2311 = vshrl.u32 %v2310, 7
    %v2312 = vsub.s32 0, %v2311
    %v2313 = vrot.slane %v2309, %v2312
    %v2314 = vmul.f32 %v2307, %v2313
    %v2315 = vmul.f32 %v2308, %v2313
    %v2316 = vld [vmem:[%s4 + $0xd] sm:$0x1]
    %v2317 = vlaneseq
    %v2318 = vshrl.u32 %v2317, 7
    %v2319 = vsub.s32 0, %v2318
    %v2320 = vrot.slane %v2316, %v2319
    %v2321 = vadd.f32 %v2314, %v2320
    %v2322 = vadd.f32 %v2315, %v2320
    %v2323 = vld [vmem:[%s2 + $0xc] sm:$0xff]
    %v2324 = vld [vmem:[%s2 + $0x24] sm:$0xff]
    %v2325 = vld [vmem:[%s2 + $0x3c] sm:$0xff]
    %v2326 = vld [vmem:[%s2 + $0x54] sm:$0xff]
    %v2327 = vld [vmem:[%s2 + $0x6c] sm:$0xff]
    %v2328 = vld [vmem:[%s2 + $0x84] sm:$0xff]
    %v2329 = vld [vmem:[%s2 + $0x9c] sm:$0xff]
    %v2330 = vld [vmem:[%s2 + $0xb4] sm:$0xff]
    %v2331 = vpack.c.bf16 %v2322, %v2321
    %v2340 = vunpack.c.l.b16 %v2323
    %v2341 = vunpack.c.h.b16 %v2323
    %v2342 = vunpack.c.l.b16 %v2324
    %v2343 = vunpack.c.h.b16 %v2324
    %v2344 = vunpack.c.l.b16 %v2325
    %v2345 = vunpack.c.h.b16 %v2325
    %v2346 = vunpack.c.l.b16 %v2326
    %v2347 = vunpack.c.h.b16 %v2326
    %v2348 = vunpack.c.l.b16 %v2327
    %v2349 = vunpack.c.h.b16 %v2327
    %v2350 = vunpack.c.l.b16 %v2328
    %v2351 = vunpack.c.h.b16 %v2328
    %v2352 = vunpack.c.l.b16 %v2329
    %v2353 = vunpack.c.h.b16 %v2329
    %v2354 = vunpack.c.l.b16 %v2330
    %v2355 = vunpack.c.h.b16 %v2330
    %v2356 = vpack.c.b16 %v2342, %v2340
    %v2357 = vpack.c.b16 %v2343, %v2341
    %v2358 = vpack.c.b16 %v2346, %v2344
    %v2359 = vpack.c.b16 %v2347, %v2345
    %v2360 = vpack.c.b16 %v2350, %v2348
    %v2361 = vpack.c.b16 %v2351, %v2349
    %v2362 = vpack.c.b16 %v2354, %v2352
    %v2363 = vpack.c.b16 %v2355, %v2353
    %2364 = vrot.lane.b32.xlu0 %v2356, 64
    %v2365 = vpop.permute.xlu0 %2364
    %2366 = vrot.lane.b32.xlu0 %v2357, 64
    %v2367 = vpop.permute.xlu0 %2366
    %2368 = vrot.lane.b32.xlu0 %v2358, 64
    %v2369 = vpop.permute.xlu0 %2368
    %2370 = vrot.lane.b32.xlu0 %v2359, 64
    %v2371 = vpop.permute.xlu0 %2370
    %2372 = vrot.lane.b32.xlu0 %v2360, 64
    %v2373 = vpop.permute.xlu0 %2372
    %2374 = vrot.lane.b32.xlu0 %v2361, 64
    %v2375 = vpop.permute.xlu0 %2374
    %2376 = vrot.lane.b32.xlu0 %v2362, 64
    %v2377 = vpop.permute.xlu0 %2376
    %2378 = vrot.lane.b32.xlu0 %v2363, 64
    %v2379 = vpop.permute.xlu0 %2378
    %vm2380 = vcmask 523264
    %v2381 = vsel %vm2380, %v2365, %v2367
    %v2382 = vsel %vm2380, %v2369, %v2371
    %v2383 = vsel %vm2380, %v2373, %v2375
    %v2384 = vsel %vm2380, %v2377, %v2379
    %v2390 = vsel %vm26, %v2331, 0
    %2392 = vmatprep.subr.bf16.mxu0 0
    %2393 = vmatpush1.bf16.msra.mxu0 %v2381
    %2394 = vmatprep.subr.bf16.mxu0 0
    %2395 = vmatpush1.bf16.msra.mxu0 %v2382
    %2396 = vmatprep.subr.bf16.mxu0 0
    %2397 = vmatpush1.bf16.msra.mxu0 %v2383
    %2398 = vmatprep.subr.bf16.mxu0 0
    %2399 = vmatpush1.bf16.msra.mxu0 %v2384
    %2400 = vmatprep.subr.bf16.mxu0 0
    %2401 = vmatpush1.bf16.msra.mxu0 0
    %2402 = vmatprep.subr.bf16.mxu0 0
    %2403 = vmatpush1.bf16.msra.mxu0 0
    %2404 = vmatprep.subr.bf16.mxu0 0
    %2405 = vmatpush1.bf16.msra.mxu0 0
    %2406 = vmatprep.subr.bf16.mxu0 0
    %2407 = vmatpush1.bf16.msra.mxu0 0
    %2408 = vmatprep.subr.bf16.mxu0 0
    %2409 = vmatpush1.bf16.msra.mxu0 0
    %2410 = vmatprep.subr.bf16.mxu0 0
    %2411 = vmatpush1.bf16.msra.mxu0 0
    %2412 = vmatprep.subr.bf16.mxu0 0
    %2413 = vmatpush1.bf16.msra.mxu0 0
    %2414 = vmatprep.subr.bf16.mxu0 0
    %2415 = vmatpush1.bf16.msra.mxu0 0
    %2416 = vmatprep.subr.bf16.mxu0 0
    %2417 = vmatpush1.bf16.msra.mxu0 0
    %2418 = vmatprep.subr.bf16.mxu0 0
    %2419 = vmatpush1.bf16.msra.mxu0 0
    %2420 = vmatprep.subr.bf16.mxu0 0
    %2421 = vmatpush1.bf16.msra.mxu0 0
    %2422 = vmatprep.subr.bf16.mxu0 0
    %2423 = vmatpush1.bf16.msra.mxu0 0
    %2424 = vmatprep.mubr.bf16.mxu0 0
    %2425 = vmatmul.mubr.bf16.gmra.mrb[0].mxu0 %v2390
    %v2426 = vpop.f32.mrb[0].mxu0
    %v2427 = vadd.f32 0.0, %v2426
    %v2428 = vpop.f32.mrb[0].mxu0
    %v2429 = vpop.f32.mrb[0].mxu0
    %v2430 = vadd.f32 0.0, %v2429
    %v2431 = vpop.f32.mrb[0].mxu0
    %2432 = vdwg.mxu0
    %v2433 = vld [vmem:[%s4 + $0xe] sm:$0x1]
    %v2434 = vlaneseq
    %v2435 = vshrl.u32 %v2434, 7
    %v2436 = vsub.s32 0, %v2435
    %v2437 = vrot.slane %v2433, %v2436
    %v2438 = vadd.f32 %v2427, %v2437
    %v2439 = vadd.f32 %v2430, %v2437
    %v2440 = vld [vmem:[%s4 + $0xf] sm:$0x1]
    %v2441 = vlaneseq
    %v2442 = vshrl.u32 %v2441, 7
    %v2443 = vsub.s32 0, %v2442
    %v2444 = vrot.slane %v2440, %v2443
    %2446 = vrot.lane.b32.xlu0 %v2444, 64
    %v2447 = vpop.permute.xlu0 %2446
    %v2449 = vadd.f32 %v2427, %v2447
    %v2450 = vadd.f32 %v2430, %v2447
    %v2451 = vxor.u32 %v2449, 2147483648
    %v2452 = vxor.u32 %v2450, 2147483648
    %v2453 = vmul.f32 %v2451, 1.442695
    %v2454 = vpow.pop %v2453
    %v2455 = vmul.f32 %v2452, 1.442695
    %v2456 = vpow.pop %v2455
    %v2457 = vadd.f32 %v2454, 1.0
    %v2458 = vadd.f32 %v2456, 1.0
    %v2459 = vrcp.pop %v2457
    %v2460 = vmul.f32 1.0, %v2459
    %v2461 = vrcp.pop %v2458
    %v2462 = vmul.f32 1.0, %v2461
    %2465 = vrot.lane.b32.xlu0 %v2460, 64
    %v2466 = vpop.permute.xlu0 %2465
    %2467 = vrot.lane.b32.xlu0 %v2462, 64
    %v2468 = vpop.permute.xlu0 %2467
    %v2471 = vmul.f32 %v2438, %v2466
    %v2472 = vmul.f32 %v2439, %v2468
    %2473 = vst.msk [vmem:[#allocation2] sm:$0xff] %vm26, 0.0
    %vm2474 = vcmask 521216
    %2475 = vst.msk [vmem:[#allocation2 + $0x8] sm:$0x3f] %vm2474, 0.0
    %2476 = vst.msk [vmem:[#allocation2 + $0x10] sm:$0xff] %vm26, 0.0
    %2477 = vst.msk [vmem:[#allocation2 + $0x18] sm:$0x3f] %vm2474, 0.0
    %2478 = vst.msk [vmem:[#allocation2 + $0x3] sm:$0xff] %vm26, %v2471
    %2479 = vst.msk [vmem:[#allocation2 + $0x13] sm:$0xff] %vm26, %v2472
    %v2480 = vld [vmem:[%s4 + $0x10] sm:$0x1]
    %v2481 = vlaneseq
    %v2482 = vshrl.u32 %v2481, 7
    %v2483 = vsub.s32 0, %v2482
    %v2484 = vrot.slane %v2480, %v2483
    %v2485 = vld [vmem:[#allocation2] sm:$0xff]
    %v2486 = vld [vmem:[#allocation2 + $0x10] sm:$0xff]
    %v2487 = vld [vmem:[%s4 + $0x18] sm:$0x1]
    %v2488 = vlaneseq
    %v2489 = vshrl.u32 %v2488, 7
    %v2490 = vsub.s32 0, %v2489
    %v2491 = vrot.slane %v2487, %v2490
    %v2492 = vmul.f32 %v2485, %v2491
    %v2493 = vmul.f32 %v2486, %v2491
    %v2494 = vadd.f32 %v2484, %v2492
    %v2495 = vadd.f32 %v2484, %v2493
    %v2496 = vld [vmem:[#allocation2 + $0x1] sm:$0xff]
    %v2497 = vld [vmem:[#allocation2 + $0x11] sm:$0xff]
    %v2498 = vld [vmem:[%s4 + $0x19] sm:$0x1]
    %v2499 = vlaneseq
    %v2500 = vshrl.u32 %v2499, 7
    %v2501 = vsub.s32 0, %v2500
    %v2502 = vrot.slane %v2498, %v2501
    %v2503 = vmul.f32 %v2496, %v2502
    %v2504 = vmul.f32 %v2497, %v2502
    %v2505 = vadd.f32 %v2494, %v2503
    %v2506 = vadd.f32 %v2495, %v2504
    %v2507 = vld [vmem:[#allocation2 + $0x2] sm:$0xff]
    %v2508 = vld [vmem:[#allocation2 + $0x12] sm:$0xff]
    %v2509 = vld [vmem:[%s4 + $0x1a] sm:$0x1]
    %v2510 = vlaneseq
    %v2511 = vshrl.u32 %v2510, 7
    %v2512 = vsub.s32 0, %v2511
    %v2513 = vrot.slane %v2509, %v2512
    %v2514 = vmul.f32 %v2507, %v2513
    %v2515 = vmul.f32 %v2508, %v2513
    %v2516 = vadd.f32 %v2505, %v2514
    %v2517 = vadd.f32 %v2506, %v2515
    %v2518 = vld [vmem:[#allocation2 + $0x3] sm:$0xff]
    %v2519 = vld [vmem:[#allocation2 + $0x13] sm:$0xff]
    %v2520 = vld [vmem:[%s4 + $0x1b] sm:$0x1]
    %v2521 = vlaneseq
    %v2522 = vshrl.u32 %v2521, 7
    %v2523 = vsub.s32 0, %v2522
    %v2524 = vrot.slane %v2520, %v2523
    %v2525 = vmul.f32 %v2518, %v2524
    %v2526 = vmul.f32 %v2519, %v2524
    %v2527 = vadd.f32 %v2516, %v2525
    %v2528 = vadd.f32 %v2517, %v2526
    %v2529 = vld [vmem:[#allocation2 + $0x4] sm:$0xff]
    %v2530 = vld [vmem:[#allocation2 + $0x14] sm:$0xff]
    %v2531 = vld [vmem:[%s4 + $0x1c] sm:$0x1]
    %v2532 = vlaneseq
    %v2533 = vshrl.u32 %v2532, 7
    %v2534 = vsub.s32 0, %v2533
    %v2535 = vrot.slane %v2531, %v2534
    %v2536 = vmul.f32 %v2529, %v2535
    %v2537 = vmul.f32 %v2530, %v2535
    %v2538 = vadd.f32 %v2527, %v2536
    %v2539 = vadd.f32 %v2528, %v2537
    %v2540 = vld [vmem:[#allocation2 + $0x5] sm:$0xff]
    %v2541 = vld [vmem:[#allocation2 + $0x15] sm:$0xff]
    %v2542 = vld [vmem:[%s4 + $0x1d] sm:$0x1]
    %v2543 = vlaneseq
    %v2544 = vshrl.u32 %v2543, 7
    %v2545 = vsub.s32 0, %v2544
    %v2546 = vrot.slane %v2542, %v2545
    %v2547 = vmul.f32 %v2540, %v2546
    %v2548 = vmul.f32 %v2541, %v2546
    %v2549 = vadd.f32 %v2538, %v2547
    %v2550 = vadd.f32 %v2539, %v2548
    %v2551 = vld [vmem:[#allocation2 + $0x6] sm:$0xff]
    %v2552 = vld [vmem:[#allocation2 + $0x16] sm:$0xff]
    %v2553 = vld [vmem:[%s4 + $0x1e] sm:$0x1]
    %v2554 = vlaneseq
    %v2555 = vshrl.u32 %v2554, 7
    %v2556 = vsub.s32 0, %v2555
    %v2557 = vrot.slane %v2553, %v2556
    %v2558 = vmul.f32 %v2551, %v2557
    %v2559 = vmul.f32 %v2552, %v2557
    %v2560 = vadd.f32 %v2549, %v2558
    %v2561 = vadd.f32 %v2550, %v2559
    %v2562 = vxor.u32 %v2560, 2147483648
    %v2563 = vxor.u32 %v2561, 2147483648
    %v2564 = vmul.f32 %v2562, 1.442695
    %v2565 = vpow.pop %v2564
    %v2566 = vmul.f32 %v2563, 1.442695
    %v2567 = vpow.pop %v2566
    %v2568 = vadd.f32 %v2565, 1.0
    %v2569 = vadd.f32 %v2567, 1.0
    %v2570 = vrcp.pop %v2568
    %v2571 = vmul.f32 1.0, %v2570
    %v2572 = vrcp.pop %v2569
    %v2573 = vmul.f32 1.0, %v2572
    %v2574 = vmul.f32 %v2560, %v2571
    %v2575 = vmul.f32 %v2561, %v2573
    %v2576 = vld [vmem:[%s2 + $0x10] sm:$0xf]
    %v2577 = vld [vmem:[%s2 + $0x28] sm:$0xf]
    %v2578 = vld [vmem:[%s2 + $0x40] sm:$0xf]
    %v2579 = vld [vmem:[%s2 + $0x58] sm:$0xf]
    %v2580 = vld [vmem:[%s2 + $0x70] sm:$0xf]
    %v2581 = vld [vmem:[%s2 + $0x88] sm:$0xf]
    %v2582 = vld [vmem:[%s2 + $0xa0] sm:$0xf]
    %v2583 = vld [vmem:[%s2 + $0xb8] sm:$0xf]
    %v2584 = vpack.c.bf16 %v2575, %v2574
    %v2585 = vld [vmem:[%s4 + $0x11] sm:$0x1]
    %v2586 = vlaneseq
    %v2587 = vshrl.u32 %v2586, 7
    %v2588 = vsub.s32 0, %v2587
    %v2589 = vrot.slane %v2585, %v2588
    %v2598 = vunpack.c.l.b16 %v2576
    %v2599 = vunpack.c.l.b16 %v2577
    %v2600 = vunpack.c.l.b16 %v2578
    %v2601 = vunpack.c.l.b16 %v2579
    %v2602 = vunpack.c.l.b16 %v2580
    %v2603 = vunpack.c.l.b16 %v2581
    %v2604 = vunpack.c.l.b16 %v2582
    %v2605 = vunpack.c.l.b16 %v2583
    %v2606 = vpack.c.b16 %v2599, %v2598
    %v2607 = vpack.c.b16 %v2601, %v2600
    %v2608 = vpack.c.b16 %v2603, %v2602
    %v2609 = vpack.c.b16 %v2605, %v2604
    %2610 = vrot.lane.b32.xlu0 %v2606, 64
    %v2611 = vpop.permute.xlu0 %2610
    %2612 = vrot.lane.b32.xlu0 %v2607, 64
    %v2613 = vpop.permute.xlu0 %2612
    %2614 = vrot.lane.b32.xlu0 %v2608, 64
    %v2615 = vpop.permute.xlu0 %2614
    %2616 = vrot.lane.b32.xlu0 %v2609, 64
    %v2617 = vpop.permute.xlu0 %2616
    %v2623 = vsel %vm26, %v2584, 0
    %2625 = vmatprep.subr.bf16.mxu0 0
    %2626 = vmatpush1.bf16.msra.mxu0 %v2611
    %2627 = vmatprep.subr.bf16.mxu0 0
    %2628 = vmatpush1.bf16.msra.mxu0 %v2613
    %2629 = vmatprep.subr.bf16.mxu0 0
    %2630 = vmatpush1.bf16.msra.mxu0 %v2615
    %2631 = vmatprep.subr.bf16.mxu0 0
    %2632 = vmatpush1.bf16.msra.mxu0 %v2617
    %2633 = vmatprep.subr.bf16.mxu0 0
    %2634 = vmatpush1.bf16.msra.mxu0 0
    %2635 = vmatprep.subr.bf16.mxu0 0
    %2636 = vmatpush1.bf16.msra.mxu0 0
    %2637 = vmatprep.subr.bf16.mxu0 0
    %2638 = vmatpush1.bf16.msra.mxu0 0
    %2639 = vmatprep.subr.bf16.mxu0 0
    %2640 = vmatpush1.bf16.msra.mxu0 0
    %2641 = vmatprep.subr.bf16.mxu0 0
    %2642 = vmatpush1.bf16.msra.mxu0 0
    %2643 = vmatprep.subr.bf16.mxu0 0
    %2644 = vmatpush1.bf16.msra.mxu0 0
    %2645 = vmatprep.subr.bf16.mxu0 0
    %2646 = vmatpush1.bf16.msra.mxu0 0
    %2647 = vmatprep.subr.bf16.mxu0 0
    %2648 = vmatpush1.bf16.msra.mxu0 0
    %2649 = vmatprep.subr.bf16.mxu0 0
    %2650 = vmatpush1.bf16.msra.mxu0 0
    %2651 = vmatprep.subr.bf16.mxu0 0
    %2652 = vmatpush1.bf16.msra.mxu0 0
    %2653 = vmatprep.subr.bf16.mxu0 0
    %2654 = vmatpush1.bf16.msra.mxu0 0
    %2655 = vmatprep.subr.bf16.mxu0 0
    %2656 = vmatpush1.bf16.msra.mxu0 0
    %2657 = vmatprep.mubr.bf16.mxu0 0
    %2658 = vmatmul.mubr.bf16.gmra.mrb[0].mxu0 %v2623
    %v2659 = vpop.f32.mrb[0].mxu0
    %v2660 = vadd.f32 %v2589, %v2659
    %v2661 = vpop.f32.mrb[0].mxu0
    %v2662 = vpop.f32.mrb[0].mxu0
    %v2663 = vadd.f32 %v2589, %v2662
    %v2664 = vpop.f32.mrb[0].mxu0
    %2665 = vdwg.mxu0
    %v2666 = vadd.f32 %v2281, %v2660
    %v2667 = vadd.f32 %v2282, %v2663
    %v2668 = vsel %vm26, %v2666, 0.0
    %2669 = vadd.xlane.f32.xlu0 %v2668
    %v2670 = vpop.xlane.xlu0 %2669
    %v2671 = vsel %vm26, %v2667, 0.0
    %2672 = vadd.xlane.f32.xlu0 %v2671
    %v2673 = vpop.xlane.xlu0 %2672
    %v2674 = vmul.f32 %v2670, %v33
    %v2675 = vmul.f32 %v2673, %v33
    %v2676 = vsub.f32 %v2666, %v2674
    %v2677 = vsub.f32 %v2667, %v2675
    %v2678 = vmul.f32 %v2676, %v2676
    %v2679 = vmul.f32 %v2677, %v2677
    %v2680 = vsel %vm26, %v2678, 0.0
    %2681 = vadd.xlane.f32.xlu0 %v2680
    %v2682 = vpop.xlane.xlu0 %2681
    %v2683 = vsel %vm26, %v2679, 0.0
    %2684 = vadd.xlane.f32.xlu0 %v2683
    %v2685 = vpop.xlane.xlu0 %2684
    %v2686 = vmul.f32 %v2682, %v33
    %v2687 = vmul.f32 %v2685, %v33
    %v2688 = vadd.f32 %v2686, 1e-05
    %v2689 = vadd.f32 %v2687, 1e-05
    %v2690 = vrsqrt.pop %v2688
    %v2691 = vrsqrt.pop %v2689
    %v2692 = vmul.f32 %v2676, %v2690
    %v2693 = vmul.f32 %v2677, %v2691
    %v2694 = vld [vmem:[%s4 + $0x12] sm:$0x1]
    %v2695 = vlaneseq
    %v2696 = vshrl.u32 %v2695, 7
    %v2697 = vsub.s32 0, %v2696
    %v2698 = vrot.slane %v2694, %v2697
    %v2699 = vmul.f32 %v2692, %v2698
    %v2700 = vmul.f32 %v2693, %v2698
    %v2701 = vld [vmem:[%s4 + $0x13] sm:$0x1]
    %v2702 = vlaneseq
    %v2703 = vshrl.u32 %v2702, 7
    %v2704 = vsub.s32 0, %v2703
    %v2705 = vrot.slane %v2701, %v2704
    %v2706 = vadd.f32 %v2699, %v2705
    %v2707 = vadd.f32 %v2700, %v2705
    %v2708 = vld [vmem:[%s2 + $0x14] sm:$0xf]
    %v2709 = vld [vmem:[%s2 + $0x2c] sm:$0xf]
    %v2710 = vld [vmem:[%s2 + $0x44] sm:$0xf]
    %v2711 = vld [vmem:[%s2 + $0x5c] sm:$0xf]
    %v2712 = vld [vmem:[%s2 + $0x74] sm:$0xf]
    %v2713 = vld [vmem:[%s2 + $0x8c] sm:$0xf]
    %v2714 = vld [vmem:[%s2 + $0xa4] sm:$0xf]
    %v2715 = vld [vmem:[%s2 + $0xbc] sm:$0xf]
    %v2716 = vpack.c.bf16 %v2707, %v2706
    %v2717 = vld [vmem:[%s4 + $0x14] sm:$0x1]
    %v2718 = vlaneseq
    %v2719 = vshrl.u32 %v2718, 7
    %v2720 = vsub.s32 0, %v2719
    %v2721 = vrot.slane %v2717, %v2720
    %v2730 = vunpack.c.l.b16 %v2708
    %v2731 = vunpack.c.l.b16 %v2709
    %v2732 = vunpack.c.l.b16 %v2710
    %v2733 = vunpack.c.l.b16 %v2711
    %v2734 = vunpack.c.l.b16 %v2712
    %v2735 = vunpack.c.l.b16 %v2713
    %v2736 = vunpack.c.l.b16 %v2714
    %v2737 = vunpack.c.l.b16 %v2715
    %v2738 = vpack.c.b16 %v2731, %v2730
    %v2739 = vpack.c.b16 %v2733, %v2732
    %v2740 = vpack.c.b16 %v2735, %v2734
    %v2741 = vpack.c.b16 %v2737, %v2736
    %v2747 = vsel %vm26, %v2716, 0
    %2749 = vmatprep.subr.bf16.mxu0 0
    %2750 = vmatpush1.bf16.msra.mxu0 %v2738
    %2751 = vmatprep.subr.bf16.mxu0 0
    %2752 = vmatpush1.bf16.msra.mxu0 %v2739
    %2753 = vmatprep.subr.bf16.mxu0 0
    %2754 = vmatpush1.bf16.msra.mxu0 %v2740
    %2755 = vmatprep.subr.bf16.mxu0 0
    %2756 = vmatpush1.bf16.msra.mxu0 %v2741
    %2757 = vmatprep.subr.bf16.mxu0 0
    %2758 = vmatpush1.bf16.msra.mxu0 0
    %2759 = vmatprep.subr.bf16.mxu0 0
    %2760 = vmatpush1.bf16.msra.mxu0 0
    %2761 = vmatprep.subr.bf16.mxu0 0
    %2762 = vmatpush1.bf16.msra.mxu0 0
    %2763 = vmatprep.subr.bf16.mxu0 0
    %2764 = vmatpush1.bf16.msra.mxu0 0
    %2765 = vmatprep.subr.bf16.mxu0 0
    %2766 = vmatpush1.bf16.msra.mxu0 0
    %2767 = vmatprep.subr.bf16.mxu0 0
    %2768 = vmatpush1.bf16.msra.mxu0 0
    %2769 = vmatprep.subr.bf16.mxu0 0
    %2770 = vmatpush1.bf16.msra.mxu0 0
    %2771 = vmatprep.subr.bf16.mxu0 0
    %2772 = vmatpush1.bf16.msra.mxu0 0
    %2773 = vmatprep.subr.bf16.mxu0 0
    %2774 = vmatpush1.bf16.msra.mxu0 0
    %2775 = vmatprep.subr.bf16.mxu0 0
    %2776 = vmatpush1.bf16.msra.mxu0 0
    %2777 = vmatprep.subr.bf16.mxu0 0
    %2778 = vmatpush1.bf16.msra.mxu0 0
    %2779 = vmatprep.subr.bf16.mxu0 0
    %2780 = vmatpush1.bf16.msra.mxu0 0
    %2781 = vmatprep.mubr.bf16.mxu0 0
    %2782 = vmatmul.mubr.bf16.gmra.mrb[0].mxu0 %v2747
    %v2783 = vpop.f32.mrb[0].mxu0
    %v2784 = vadd.f32 %v2721, %v2783
    %v2785 = vpop.f32.mrb[0].mxu0
    %v2786 = vpop.f32.mrb[0].mxu0
    %v2787 = vadd.f32 %v2721, %v2786
    %v2788 = vpop.f32.mrb[0].mxu0
    %2789 = vdwg.mxu0
    %v2790 = vxor.u32 %v2784, 2147483648
    %v2791 = vxor.u32 %v2787, 2147483648
    %v2792 = vmul.f32 %v2790, 1.442695
    %v2793 = vpow.pop %v2792
    %v2794 = vmul.f32 %v2791, 1.442695
    %v2795 = vpow.pop %v2794
    %v2796 = vadd.f32 %v2793, 1.0
    %v2797 = vadd.f32 %v2795, 1.0
    %v2798 = vrcp.pop %v2796
    %v2799 = vmul.f32 1.0, %v2798
    %v2800 = vrcp.pop %v2797
    %v2801 = vmul.f32 1.0, %v2800
    %v2802 = vmul.f32 %v2784, %v2799
    %v2803 = vmul.f32 %v2787, %v2801
    %v2804 = vld [vmem:[%s3] sm:$0xf]
    %v2805 = vld [vmem:[%s3 + $0x4] sm:$0xf]
    %v2806 = vld [vmem:[%s3 + $0x8] sm:$0xf]
    %v2807 = vld [vmem:[%s3 + $0xc] sm:$0xf]
    %v2808 = vld [vmem:[%s3 + $0x10] sm:$0xf]
    %v2809 = vld [vmem:[%s3 + $0x14] sm:$0xf]
    %v2810 = vld [vmem:[%s3 + $0x18] sm:$0xf]
    %v2811 = vld [vmem:[%s3 + $0x1c] sm:$0xf]
    %v2812 = vld [vmem:[%s3 + $0x20] sm:$0xf]
    %v2813 = vld [vmem:[%s3 + $0x24] sm:$0xf]
    %v2814 = vld [vmem:[%s3 + $0x28] sm:$0xf]
    %v2815 = vld [vmem:[%s3 + $0x2c] sm:$0xf]
    %v2816 = vld [vmem:[%s3 + $0x30] sm:$0xf]
    %v2817 = vld [vmem:[%s3 + $0x34] sm:$0xf]
    %v2818 = vld [vmem:[%s3 + $0x38] sm:$0xf]
    %v2819 = vld [vmem:[%s3 + $0x3c] sm:$0xf]
    %v2820 = vpack.c.bf16 %v2803, %v2802
    %v2821 = vld [vmem:[%s4 + $0x15] sm:$0x1]
    %v2822 = vlaneseq
    %v2823 = vshrl.u32 %v2822, 7
    %v2824 = vsub.s32 0, %v2823
    %v2825 = vrot.slane %v2821, %v2824
    %v2842 = vunpack.c.l.b16 %v2804
    %v2843 = vunpack.c.l.b16 %v2805
    %v2844 = vunpack.c.l.b16 %v2806
    %v2845 = vunpack.c.l.b16 %v2807
    %v2846 = vunpack.c.l.b16 %v2808
    %v2847 = vunpack.c.l.b16 %v2809
    %v2848 = vunpack.c.l.b16 %v2810
    %v2849 = vunpack.c.l.b16 %v2811
    %v2850 = vunpack.c.l.b16 %v2812
    %v2851 = vunpack.c.l.b16 %v2813
    %v2852 = vunpack.c.l.b16 %v2814
    %v2853 = vunpack.c.l.b16 %v2815
    %v2854 = vunpack.c.l.b16 %v2816
    %v2855 = vunpack.c.l.b16 %v2817
    %v2856 = vunpack.c.l.b16 %v2818
    %v2857 = vunpack.c.l.b16 %v2819
    %v2858 = vpack.c.b16 %v2843, %v2842
    %v2859 = vpack.c.b16 %v2845, %v2844
    %v2860 = vpack.c.b16 %v2847, %v2846
    %v2861 = vpack.c.b16 %v2849, %v2848
    %v2862 = vpack.c.b16 %v2851, %v2850
    %v2863 = vpack.c.b16 %v2853, %v2852
    %v2864 = vpack.c.b16 %v2855, %v2854
    %v2865 = vpack.c.b16 %v2857, %v2856
    %2866 = vrot.lane.b32.xlu0 %v2858, 64
    %v2867 = vpop.permute.xlu0 %2866
    %2868 = vrot.lane.b32.xlu0 %v2859, 64
    %v2869 = vpop.permute.xlu0 %2868
    %2870 = vrot.lane.b32.xlu0 %v2860, 64
    %v2871 = vpop.permute.xlu0 %2870
    %2872 = vrot.lane.b32.xlu0 %v2861, 64
    %v2873 = vpop.permute.xlu0 %2872
    %2874 = vrot.lane.b32.xlu0 %v2862, 64
    %v2875 = vpop.permute.xlu0 %2874
    %2876 = vrot.lane.b32.xlu0 %v2863, 64
    %v2877 = vpop.permute.xlu0 %2876
    %2878 = vrot.lane.b32.xlu0 %v2864, 64
    %v2879 = vpop.permute.xlu0 %2878
    %2880 = vrot.lane.b32.xlu0 %v2865, 64
    %v2881 = vpop.permute.xlu0 %2880
    %2890 = vmatprep.subr.bf16.mxu0 0
    %2891 = vmatpush1.bf16.msra.mxu0 %v2867
    %2892 = vmatprep.subr.bf16.mxu0 0
    %2893 = vmatpush1.bf16.msra.mxu0 %v2869
    %2894 = vmatprep.subr.bf16.mxu0 0
    %2895 = vmatpush1.bf16.msra.mxu0 %v2871
    %2896 = vmatprep.subr.bf16.mxu0 0
    %2897 = vmatpush1.bf16.msra.mxu0 %v2873
    %2898 = vmatprep.subr.bf16.mxu0 0
    %2899 = vmatpush1.bf16.msra.mxu0 %v2875
    %2900 = vmatprep.subr.bf16.mxu0 0
    %2901 = vmatpush1.bf16.msra.mxu0 %v2877
    %2902 = vmatprep.subr.bf16.mxu0 0
    %2903 = vmatpush1.bf16.msra.mxu0 %v2879
    %2904 = vmatprep.subr.bf16.mxu0 0
    %2905 = vmatpush1.bf16.msra.mxu0 %v2881
    %2906 = vmatprep.subr.bf16.mxu0 0
    %2907 = vmatpush1.bf16.msra.mxu0 0
    %2908 = vmatprep.subr.bf16.mxu0 0
    %2909 = vmatpush1.bf16.msra.mxu0 0
    %2910 = vmatprep.subr.bf16.mxu0 0
    %2911 = vmatpush1.bf16.msra.mxu0 0
    %2912 = vmatprep.subr.bf16.mxu0 0
    %2913 = vmatpush1.bf16.msra.mxu0 0
    %2914 = vmatprep.subr.bf16.mxu0 0
    %2915 = vmatpush1.bf16.msra.mxu0 0
    %2916 = vmatprep.subr.bf16.mxu0 0
    %2917 = vmatpush1.bf16.msra.mxu0 0
    %2918 = vmatprep.subr.bf16.mxu0 0
    %2919 = vmatpush1.bf16.msra.mxu0 0
    %2920 = vmatprep.subr.bf16.mxu0 0
    %2921 = vmatpush1.bf16.msra.mxu0 0
    %2922 = vmatprep.mubr.bf16.mxu0 0
    %2923 = vmatmul.mubr.bf16.gmra.mrb[0].mxu0 %v2820
    %v2924 = vpop.f32.mrb[0].mxu0
    %v2925 = vadd.f32 %v2825, %v2924
    %v2926 = vpop.f32.mrb[0].mxu0
    %v2927 = vpop.f32.mrb[0].mxu0
    %v2928 = vadd.f32 %v2825, %v2927
    %v2929 = vpop.f32.mrb[0].mxu0
    %2930 = vdwg.mxu0
    %v2931 = vmul.f32 %v2925, 0.5
    %v2932 = vmul.f32 %v2928, 0.5
    %v2933 = vadd.f32 %v2666, %v2931
    %v2934 = vadd.f32 %v2667, %v2932
    %v2935 = vsel %vm26, %v2933, 0.0
    %2936 = vadd.xlane.f32.xlu0 %v2935
    %v2937 = vpop.xlane.xlu0 %2936
    %v2938 = vsel %vm26, %v2934, 0.0
    %2939 = vadd.xlane.f32.xlu0 %v2938
    %v2940 = vpop.xlane.xlu0 %2939
    %v2941 = vmul.f32 %v2937, %v33
    %v2942 = vmul.f32 %v2940, %v33
    %v2943 = vsub.f32 %v2933, %v2941
    %v2944 = vsub.f32 %v2934, %v2942
    %v2945 = vmul.f32 %v2943, %v2943
    %v2946 = vmul.f32 %v2944, %v2944
    %v2947 = vsel %vm26, %v2945, 0.0
    %2948 = vadd.xlane.f32.xlu0 %v2947
    %v2949 = vpop.xlane.xlu0 %2948
    %v2950 = vsel %vm26, %v2946, 0.0
    %2951 = vadd.xlane.f32.xlu0 %v2950
    %v2952 = vpop.xlane.xlu0 %2951
    %v2953 = vmul.f32 %v2949, %v33
    %v2954 = vmul.f32 %v2952, %v33
    %v2955 = vadd.f32 %v2953, 1e-05
    %v2956 = vadd.f32 %v2954, 1e-05
    %v2957 = vrsqrt.pop %v2955
    %v2958 = vrsqrt.pop %v2956
    %v2959 = vmul.f32 %v2943, %v2957
    %v2960 = vmul.f32 %v2944, %v2958
    %v2961 = vld [vmem:[%s4 + $0x16] sm:$0x1]
    %v2962 = vlaneseq
    %v2963 = vshrl.u32 %v2962, 7
    %v2964 = vsub.s32 0, %v2963
    %v2965 = vrot.slane %v2961, %v2964
    %v2966 = vmul.f32 %v2959, %v2965
    %v2967 = vmul.f32 %v2960, %v2965
    %v2968 = vld [vmem:[%s4 + $0x17] sm:$0x1]
    %v2969 = vlaneseq
    %v2970 = vshrl.u32 %v2969, 7
    %v2971 = vsub.s32 0, %v2970
    %v2972 = vrot.slane %v2968, %v2971
    %v2973 = vadd.f32 %v2966, %v2972
    %v2974 = vadd.f32 %v2967, %v2972
    %2975 = vst.msk [vmem:[#allocation3] sm:$0xff] %vm26, %v2973
    %2976 = vst.msk [vmem:[#allocation3 + $0x8] sm:$0xff] %vm26, %v2974
    // Predicated region
    $region22: #{conformer_layer.1} parent=1 // pred_check
      _
    $region23: #{conformer_layer.1} parent=1 // pred_check_branch
      %2978 = sbr.rel (0) target = $region25
    $region24: #{conformer_layer.1} parent=1 // pred_region
      %s2980 = ssub.s32 256, 256
      %2981 = vsyncadd [#allocation4], %s2980
      %s2982 = sshll.u32 [#allocation3], 4
      %s2983 = int_to_ptr.vmem [resolvable:$true] %s2982
      %2988 = dma.vmem_to_hbm [thread:$0]  %s2983, 256, %s5, [#allocation4], 128, 128, 8
    $region25: #{conformer_layer.1} parent=1 // pred_fallthru
      _
    // Predicated region
    $region26: #{conformer_layer.1} parent=1 // pred_check
      _
    $region27: #{conformer_layer.1} parent=1 // pred_check_branch
      %2990 = sbr.rel (0) target = $region29
    $region28: #{conformer_layer.1} parent=1 // pred_region
      %2991 = dma.done [#allocation4], 256
    $region29: #{conformer_layer.1} parent=1 // pred_fallthru
      _
    %2992 = vsyncpa [#allocation4], 1

</llo_original>
